<compile_context>
chip_gen: v5e
topology: v5e:2x2
jax: 0.10.0
libtpu: 0.0.40
codegen_flags: <defaults>
</compile_context>

<pallas_src>
import functools

import jax
import jax.numpy as jnp
from jax.experimental import pallas as pl
from jax.experimental.pallas import tpu as pltpu

K_GRAPH = 2          # args.k
EPSILON = 0.01       # args.epsilon
BN_EPS = 1e-5
ORTHO_WEIGHT = 0.01
N_CHUNK_MAX = 512    # point rows per in-kernel chunk (caps VMEM of (r,1024) f32)


def _make_slots(sizes):
    """Lane-aligned (offset, size) slots for biases packed into one array."""
    slots, off = [], 0
    for s in sizes:
        slots.append((off, s))
        off += ((s + 127) // 128) * 128
    return tuple(slots)


# packing order must match make_params():
#   STN conv1..3, STN fc1..3 (fc3 padded to 128 with identity folded in),
#   encoder conv1a, conv1b, conv2, conv3, conv4.
BIAS_SIZES = (64, 128, 1024, 512, 256, 128, 64, 64, 64, 128, 1024)
BIAS_SLOTS = _make_slots(BIAS_SIZES)


def _pack_biases(bias_list):
    parts = []
    for b in bias_list:
        b = b.reshape(-1).astype(jnp.float32)
        n = b.shape[0]
        slot = ((n + 127) // 128) * 128
        parts.append(jnp.pad(b, (0, slot - n)))
    packed = jnp.concatenate(parts)
    return packed.reshape(1, packed.shape[0])


# ----------------------------------------------------------------------------
# Fused kernel: one batch item per grid step.
#   STN (3->64->128->1024 conv, max-pool, 1024->512->256->9(+iden) FC)
#   -> fold 3x3 transform into the points (VPU FMAs)
#   -> encoder (3->64->64 | 64->64 | 64->128 | 128->1024[BN only]) + max-pool.
# ----------------------------------------------------------------------------
def _fused_kernel(x_ref,
                  sw1, sw2, sw3, sfw1, sfw2, sfw3,
                  ew1a, ew1b, ew2, ew3, ew4, b_ref,
                  trans_ref, feat_ref, *, n, n_chunk):
    def bias(i):
        off, sz = BIAS_SLOTS[i]
        return b_ref[:, off:off + sz]                     # (1, sz) f32, lane-aligned

    def mm(a_bf16, w_ref):                                # MXU, f32 accumulation
        return jnp.dot(a_bf16, w_ref[...], preferred_element_type=jnp.float32)

    def relu_bf16(h_f32):                                 # f32 bias/ReLU, bf16 storage
        return jnp.maximum(h_f32, 0.0).astype(jnp.bfloat16)

    def fma3(rows, w3c):                                  # (r,3)x(3,C): 3 VPU FMAs
        return (rows[:, 0:1] * w3c[0:1, :]
                + rows[:, 1:2] * w3c[1:2, :]
                + rows[:, 2:3] * w3c[2:3, :])

    w_s1 = sw1[...]                                       # (3, 64) f32 VPU weight
    w_e1 = ew1a[...]                                      # (3, 64) f32 VPU weight

    def stn_conv_pool(rows):                              # rows (r, 3) f32
        h = relu_bf16(fma3(rows, w_s1) + bias(0))         # (r, 64)
        h = relu_bf16(mm(h, sw2) + bias(1))               # (r, 128)
        h = jnp.maximum(mm(h, sw3) + bias(2), 0.0)        # (r, 1024) f32
        return jnp.max(h, axis=0, keepdims=True)          # (1, 1024) sublane reduce

    def enc_conv_pool(rows):                              # rows (r, 3) f32 (aligned)
        h = relu_bf16(fma3(rows, w_e1) + bias(6))         # (r, 64)
        h = relu_bf16(mm(h, ew1b) + bias(7))              # (r, 64)
        h = relu_bf16(mm(h, ew2) + bias(8))               # (r, 64)
        h = relu_bf16(mm(h, ew3) + bias(9))               # (r, 128)
        h = mm(h, ew4) + bias(10)                         # (r, 1024) f32, BN only
        return jnp.max(h, axis=0, keepdims=True)          # (1, 1024)

    def chunked_max(rows_all, layer_fn):
        # Online max over point chunks: the (r,1024) intermediate stays small.
        # TODO(synk): switch to a fori_loop / extra grid axis for very large N.
        out = layer_fn(rows_all[0:n_chunk, :])
        for c in range(1, n // n_chunk):
            out = jnp.maximum(
                out, layer_fn(rows_all[c * n_chunk:(c + 1) * n_chunk, :]))
        return out

    xt = x_ref[0].astype(jnp.float32)                     # (N, 3) points, f32

    # --- EnhancedSTN: conv stack + max-pool + FC (identity folded into bias) ---
    pooled = chunked_max(xt, stn_conv_pool).astype(jnp.bfloat16)   # (1, 1024)
    f = relu_bf16(mm(pooled, sfw1) + bias(3))                      # (1, 512)
    f = relu_bf16(mm(f, sfw2) + bias(4))                           # (1, 256)
    t9 = mm(f, sfw3) + bias(5)                                     # (1, 128) padded
    trans_ref[0] = t9                                              # lane-dense store

    # --- Fold the 3x3 transform into the points: x_aligned = x^T @ trans ---
    x_al = (xt[:, 0:1] * t9[:, 0:3]
            + xt[:, 1:2] * t9[:, 3:6]
            + xt[:, 2:3] * t9[:, 6:9])                             # (N, 3) f32

    # --- Encoder conv stack + global max pool ---
    feat_ref[0] = chunked_max(x_al, enc_conv_pool)                 # (1, 1024) f32


def fused_pointnet(x_bnc, params):
    B, N, _ = x_bnc.shape
    n_chunk = N if N <= N_CHUNK_MAX else N_CHUNK_MAX
    assert N % n_chunk == 0, "N must be a multiple of 512 when N > 512"
    weights = params['w']
    bias = params['bias']

    def wspec(a):
        return pl.BlockSpec(a.shape, lambda b: (0,) * a.ndim)

    # TODO(synk): for very large B on v6e, batch >=8 items per step so the tiny
    # STN FC matmuls amortize per-step overhead (trade-off vs full fusion).
    kernel = functools.partial(_fused_kernel, n=N, n_chunk=n_chunk)
    trans_pad, feat = pl.pallas_call(
        kernel,
        out_shape=(jax.ShapeDtypeStruct((B, 1, 128), jnp.float32),
                   jax.ShapeDtypeStruct((B, 1, 1024), jnp.float32)),
        grid=(B,),
        in_specs=[pl.BlockSpec((1, N, 3), lambda b: (b, 0, 0))]
                 + [wspec(a) for a in weights]
                 + [wspec(bias)],
        out_specs=(pl.BlockSpec((1, 1, 128), lambda b: (b, 0, 0)),
                   pl.BlockSpec((1, 1, 1024), lambda b: (b, 0, 0))),
        compiler_params=pltpu.CompilerParams(
            dimension_semantics=("parallel",),
            vmem_limit_bytes=64 * 1024 * 1024),
    )(x_bnc, *weights, bias)
    return trans_pad, feat


# ----------------------------------------------------------------------------
# Context-aware features (EEGA) — vectorized plain-JAX glue.
# Work is O(B*K*C); a separate pallas_call costs more than the compute.
# ----------------------------------------------------------------------------
def context_features(points, graph):
    neighbors = points[graph]                                   # (B, K, C)
    center = points[:, None, :]                                 # (B, 1, C)
    c_norm = jnp.maximum(jnp.linalg.norm(center, axis=-1, keepdims=True), 1e-8)
    n_norm = jnp.maximum(jnp.linalg.norm(neighbors, axis=-1, keepdims=True), 1e-8)
    sim = jnp.sum((center / c_norm) * (neighbors / n_norm), axis=-1)  # (B, K)
    w = jnp.exp(sim)
    w = w / (jnp.sum(w, axis=-1, keepdims=True) + 1e-8)
    sq = jnp.sum(w * w, axis=-1, keepdims=True)
    w = w * jnp.where(sq > EPSILON, jnp.sqrt(EPSILON / sq), 1.0)
    w = w[..., None] * 0.5                                      # (B, K, 1)
    edge = neighbors - center
    return jnp.sum(edge * w + neighbors * w, axis=1)            # (B, C)


# ----------------------------------------------------------------------------
# Parameter init (deterministic, synthetic) + eval-mode BN folding
# ----------------------------------------------------------------------------
def _fold_bn(w, b, gamma, beta, mean, var):
    scale = gamma / jnp.sqrt(var + BN_EPS)
    return w * scale[None, :], (b - mean) * scale + beta


def make_params(key):
    keys = iter(jax.random.split(key, 64))

    def linear(cin, cout, std=0.1):
        kw, kb = jax.random.split(next(keys))
        w = std * jax.random.normal(kw, (cin, cout), jnp.float32)
        b = std * jax.random.normal(kb, (cout,), jnp.float32)
        return w, b

    def bn(c):
        k1, k2, k3, k4 = jax.random.split(next(keys), 4)
        gamma = 1.0 + 0.1 * jax.random.normal(k1, (c,), jnp.float32)
        beta = 0.1 * jax.random.normal(k2, (c,), jnp.float32)
        mean = 0.1 * jax.random.normal(k3, (c,), jnp.float32)
        var = 0.5 + 0.1 * jnp.abs(jax.random.normal(k4, (c,), jnp.float32))
        return gamma, beta, mean, var

    def conv_bn(cin, cout):
        w, b = linear(cin, cout)
        return _fold_bn(w, b, *bn(cout))

    def bf16(w):
        return w.astype(jnp.bfloat16)

    # --- EnhancedSTN: conv 3->64->128->1024, fc 1024->512->256->9 (+iden) ---
    sw1, sb1 = conv_bn(3, 64)
    sw2, sb2 = conv_bn(64, 128)
    sw3, sb3 = conv_bn(128, 1024)
    fw1, fb1 = conv_bn(1024, 512)
    fw2, fb2 = conv_bn(512, 256)
    fw3, fb3 = linear(256, 9)
    iden = jnp.array([1, 0, 0, 0, 1, 0, 0, 0, 1], jnp.float32)
    fw3_pad = jnp.zeros((256, 128), jnp.float32).at[:, :9].set(fw3)
    fb3_pad = jnp.zeros((128,), jnp.float32).at[:9].set(fb3 + iden)

    # --- Encoder: conv_layer1 (3->64->64), conv_layer2..4 (64->64->128->1024) ---
    ew1a, eb1a = conv_bn(3, 64)
    ew1b, eb1b = conv_bn(64, 64)
    ew2, eb2 = conv_bn(64, 64)
    ew3, eb3 = conv_bn(64, 128)
    ew4, eb4 = conv_bn(128, 1024)

    weights = (sw1,                                       # f32 (VPU first layer)
               bf16(sw2), bf16(sw3), bf16(fw1), bf16(fw2), bf16(fw3_pad),
               ew1a,                                      # f32 (VPU first layer)
               bf16(ew1b), bf16(ew2), bf16(ew3), bf16(ew4))
    bias = _pack_biases([sb1, sb2, sb3, fb1, fb2, fb3_pad,
                         eb1a, eb1b, eb2, eb3, eb4])
    return {'w': weights, 'bias': bias}


# ----------------------------------------------------------------------------
# Full forward (PointNetEncoder, global_feat=True, feature_transform=False)
# ----------------------------------------------------------------------------
@jax.jit
def pointnet_encoder_forward(x_bcn, params):
    B, D, N = x_bcn.shape
    assert D == 3  # TODO(synk): D > 3 (extra feature channels) path not implemented
    # Row-major points (B, N, 3): tiny (12*N bytes/item) relayout in the wrapper.
    # TODO(synk): feed the native (B,3,N) layout and transpose the (3,N) tile
    # in-kernel once small-shape Mosaic transposes are confirmed on all targets.
    x_bnc = jnp.transpose(x_bcn, (0, 2, 1)).astype(jnp.float32)

    # --- One fused Pallas kernel: STN + fold + encoder + global max pool ---
    trans_pad, feat = fused_pointnet(x_bnc, params)
    trans = trans_pad[:, 0, :9].reshape(B, 3, 3)
    gfeat = feat[:, 0, :]                                       # (B, 1024) f32

    ortho = jnp.einsum('bij,bkj->bik', trans, trans) - jnp.eye(3, dtype=jnp.float32)
    ortho_loss = ORTHO_WEIGHT * jnp.mean(
        jnp.sqrt(jnp.sum(ortho * ortho, axis=(1, 2))))

    # --- Dynamic graph + context-aware features (vectorized JAX glue) ---
    d2 = jnp.sum((gfeat[:, None, :] - gfeat[None, :, :]) ** 2, axis=-1)
    _, graph = jax.lax.top_k(-d2, K_GRAPH)                      # k nearest (incl. self)
    ctx = context_features(gfeat, graph.astype(jnp.int32))
    out = gfeat + ctx

    trans_feat = None                                           # feature_transform=False
    return out, trans, trans_feat, ortho_loss


if __name__ == "__main__":
    key = jax.random.PRNGKey(0)
    kx, kp = jax.random.split(key)

    B, C, N = 2, 3, 128                                         # PyTorch layout [B, C, N]
    x = jax.random.normal(kx, (B, C, N), jnp.float32)
    params = make_params(kp)

    out, trans, trans_feat, ortho_loss = pointnet_encoder_forward(x, params)
    jax.block_until_ready(out)
    jax.block_until_ready(trans)
    jax.block_until_ready(ortho_loss)

    assert out.shape == (B, 1024)
    assert trans.shape == (B, 3, 3)
    assert bool(jnp.all(jnp.isfinite(out)))
    assert bool(jnp.isfinite(ortho_loss))
    print("KERNEL_OK")
</pallas_src>

<mosaic_0001>
module attributes {stable_mosaic.version = 11 : i64} {
  func.func @_fused_kernel(%arg0: i32, %arg1: memref<1x128x3xf32, #tpu.memory_space<vmem>>, %arg2: memref<3x64xf32, #tpu.memory_space<vmem>>, %arg3: memref<64x128xbf16, #tpu.memory_space<vmem>>, %arg4: memref<128x1024xbf16, #tpu.memory_space<vmem>>, %arg5: memref<1024x512xbf16, #tpu.memory_space<vmem>>, %arg6: memref<512x256xbf16, #tpu.memory_space<vmem>>, %arg7: memref<256x128xbf16, #tpu.memory_space<vmem>>, %arg8: memref<3x64xf32, #tpu.memory_space<vmem>>, %arg9: memref<64x64xbf16, #tpu.memory_space<vmem>>, %arg10: memref<64x64xbf16, #tpu.memory_space<vmem>>, %arg11: memref<64x128xbf16, #tpu.memory_space<vmem>>, %arg12: memref<128x1024xbf16, #tpu.memory_space<vmem>>, %arg13: memref<1x3712xf32, #tpu.memory_space<vmem>>, %arg14: memref<1x1x128xf32, #tpu.memory_space<vmem>>, %arg15: memref<1x1x1024xf32, #tpu.memory_space<vmem>>) attributes {dimension_semantics = [#tpu.dimension_semantics<parallel>], iteration_bounds = array<i64: 2>, scalar_prefetch = 0 : i64, scratch_operands = 0 : i64, tpu.core_type = #tpu.core_type<tc>, window_params = [{transform_indices = @transform_0, window_bounds = array<i64: 1, 128, 3>}, {pipeline_mode = #tpu.pipeline_mode<synchronous>, transform_indices = @transform_1, window_bounds = array<i64: 3, 64>}, {pipeline_mode = #tpu.pipeline_mode<synchronous>, transform_indices = @transform_2, window_bounds = array<i64: 64, 128>}, {pipeline_mode = #tpu.pipeline_mode<synchronous>, transform_indices = @transform_3, window_bounds = array<i64: 128, 1024>}, {pipeline_mode = #tpu.pipeline_mode<synchronous>, transform_indices = @transform_4, window_bounds = array<i64: 1024, 512>}, {pipeline_mode = #tpu.pipeline_mode<synchronous>, transform_indices = @transform_5, window_bounds = array<i64: 512, 256>}, {pipeline_mode = #tpu.pipeline_mode<synchronous>, transform_indices = @transform_6, window_bounds = array<i64: 256, 128>}, {pipeline_mode = #tpu.pipeline_mode<synchronous>, transform_indices = @transform_7, window_bounds = array<i64: 3, 64>}, {pipeline_mode = #tpu.pipeline_mode<synchronous>, transform_indices = @transform_8, window_bounds = array<i64: 64, 64>}, {pipeline_mode = #tpu.pipeline_mode<synchronous>, transform_indices = @transform_9, window_bounds = array<i64: 64, 64>}, {pipeline_mode = #tpu.pipeline_mode<synchronous>, transform_indices = @transform_10, window_bounds = array<i64: 64, 128>}, {pipeline_mode = #tpu.pipeline_mode<synchronous>, transform_indices = @transform_11, window_bounds = array<i64: 128, 1024>}, {pipeline_mode = #tpu.pipeline_mode<synchronous>, transform_indices = @transform_12, window_bounds = array<i64: 1, 3712>}, {transform_indices = @transform_13, window_bounds = array<i64: 1, 1, 128>}, {transform_indices = @transform_14, window_bounds = array<i64: 1, 1, 1024>}]} {
    %c0 = arith.constant 0 : index
    %c0_0 = arith.constant 0 : index
    %0 = vector.load %arg2[%c0, %c0_0] : memref<3x64xf32, #tpu.memory_space<vmem>>, vector<3x64xf32>
    %c0_1 = arith.constant 0 : index
    %c0_2 = arith.constant 0 : index
    %1 = vector.load %arg8[%c0_1, %c0_2] : memref<3x64xf32, #tpu.memory_space<vmem>>, vector<3x64xf32>
    %c0_3 = arith.constant 0 : index
    %c0_4 = arith.constant 0 : index
    %c0_5 = arith.constant 0 : index
    %2 = vector.load %arg1[%c0_3, %c0_4, %c0_5] : memref<1x128x3xf32, #tpu.memory_space<vmem>>, vector<1x128x3xf32>
    %3 = vector.shape_cast %2 : vector<1x128x3xf32> to vector<128x3xf32>
    %4 = vector.extract_strided_slice %3 {offsets = [0, 0], sizes = [128, 1], strides = [1, 1]} : vector<128x3xf32> to vector<128x1xf32>
    %5 = vector.extract_strided_slice %0 {offsets = [0, 0], sizes = [1, 64], strides = [1, 1]} : vector<3x64xf32> to vector<1x64xf32>
    %6 = vector.broadcast %4 : vector<128x1xf32> to vector<128x64xf32>
    %7 = vector.broadcast %5 : vector<1x64xf32> to vector<128x64xf32>
    %8 = arith.mulf %6, %7 : vector<128x64xf32>
    %9 = vector.extract_strided_slice %3 {offsets = [0, 1], sizes = [128, 1], strides = [1, 1]} : vector<128x3xf32> to vector<128x1xf32>
    %10 = vector.extract_strided_slice %0 {offsets = [1, 0], sizes = [1, 64], strides = [1, 1]} : vector<3x64xf32> to vector<1x64xf32>
    %11 = vector.broadcast %9 : vector<128x1xf32> to vector<128x64xf32>
    %12 = vector.broadcast %10 : vector<1x64xf32> to vector<128x64xf32>
    %13 = arith.mulf %11, %12 : vector<128x64xf32>
    %14 = arith.addf %8, %13 : vector<128x64xf32>
    %15 = vector.extract_strided_slice %3 {offsets = [0, 2], sizes = [128, 1], strides = [1, 1]} : vector<128x3xf32> to vector<128x1xf32>
    %16 = vector.extract_strided_slice %0 {offsets = [2, 0], sizes = [1, 64], strides = [1, 1]} : vector<3x64xf32> to vector<1x64xf32>
    %17 = vector.broadcast %15 : vector<128x1xf32> to vector<128x64xf32>
    %18 = vector.broadcast %16 : vector<1x64xf32> to vector<128x64xf32>
    %19 = arith.mulf %17, %18 : vector<128x64xf32>
    %20 = arith.addf %14, %19 : vector<128x64xf32>
    %c0_6 = arith.constant 0 : index
    %c0_7 = arith.constant 0 : index
    %21 = vector.load %arg13[%c0_6, %c0_7] : memref<1x3712xf32, #tpu.memory_space<vmem>>, vector<1x64xf32>
    %22 = vector.broadcast %21 : vector<1x64xf32> to vector<128x64xf32>
    %23 = arith.addf %20, %22 : vector<128x64xf32>
    %cst = arith.constant 0.000000e+00 : f32
    %24 = vector.broadcast %cst : f32 to vector<128x64xf32>
    %25 = arith.maximumf %23, %24 : vector<128x64xf32>
    %26 = arith.truncf %25 : vector<128x64xf32> to vector<128x64xbf16>
    %c0_8 = arith.constant 0 : index
    %c0_9 = arith.constant 0 : index
    %27 = vector.load %arg3[%c0_8, %c0_9] : memref<64x128xbf16, #tpu.memory_space<vmem>>, vector<64x128xbf16>
    %cst_10 = arith.constant dense<0.000000e+00> : vector<128x128xf32>
    %28 = tpu.matmul %26, %27, %cst_10 {dimension_numbers = #tpu.dot_dimension_numbers<[1], [0], [0], [1], [0, 0, 1, 1], [], []>} : vector<128x64xbf16>, vector<64x128xbf16>, vector<128x128xf32> -> vector<128x128xf32>
    %c0_11 = arith.constant 0 : index
    %c128 = arith.constant 128 : index
    %29 = vector.load %arg13[%c0_11, %c128] : memref<1x3712xf32, #tpu.memory_space<vmem>>, vector<1x128xf32>
    %30 = vector.broadcast %29 : vector<1x128xf32> to vector<128x128xf32>
    %31 = arith.addf %28, %30 : vector<128x128xf32>
    %cst_12 = arith.constant 0.000000e+00 : f32
    %32 = vector.broadcast %cst_12 : f32 to vector<128x128xf32>
    %33 = arith.maximumf %31, %32 : vector<128x128xf32>
    %34 = arith.truncf %33 : vector<128x128xf32> to vector<128x128xbf16>
    %c0_13 = arith.constant 0 : index
    %c0_14 = arith.constant 0 : index
    %35 = vector.load %arg4[%c0_13, %c0_14] : memref<128x1024xbf16, #tpu.memory_space<vmem>>, vector<128x1024xbf16>
    %cst_15 = arith.constant dense<0.000000e+00> : vector<128x1024xf32>
    %36 = tpu.matmul %34, %35, %cst_15 {dimension_numbers = #tpu.dot_dimension_numbers<[1], [0], [0], [1], [0, 0, 1, 1], [], []>} : vector<128x128xbf16>, vector<128x1024xbf16>, vector<128x1024xf32> -> vector<128x1024xf32>
    %c0_16 = arith.constant 0 : index
    %c256 = arith.constant 256 : index
    %37 = vector.load %arg13[%c0_16, %c256] : memref<1x3712xf32, #tpu.memory_space<vmem>>, vector<1x1024xf32>
    %38 = vector.broadcast %37 : vector<1x1024xf32> to vector<128x1024xf32>
    %39 = arith.addf %36, %38 : vector<128x1024xf32>
    %cst_17 = arith.constant 0.000000e+00 : f32
    %40 = vector.broadcast %cst_17 : f32 to vector<128x1024xf32>
    %41 = arith.maximumf %39, %40 : vector<128x1024xf32>
    %cst_18 = arith.constant dense<0xFF800000> : vector<1024xf32>
    %42 = vector.multi_reduction <maximumf>, %41, %cst_18 [0] : vector<128x1024xf32> to vector<1024xf32>
    %43 = vector.shape_cast %42 : vector<1024xf32> to vector<1x1024xf32>
    %44 = arith.truncf %43 : vector<1x1024xf32> to vector<1x1024xbf16>
    %c0_19 = arith.constant 0 : index
    %c0_20 = arith.constant 0 : index
    %45 = vector.load %arg5[%c0_19, %c0_20] : memref<1024x512xbf16, #tpu.memory_space<vmem>>, vector<1024x512xbf16>
    %cst_21 = arith.constant dense<0.000000e+00> : vector<1x512xf32>
    %46 = tpu.matmul %44, %45, %cst_21 {dimension_numbers = #tpu.dot_dimension_numbers<[1], [0], [0], [1], [0, 0, 1, 1], [], []>} : vector<1x1024xbf16>, vector<1024x512xbf16>, vector<1x512xf32> -> vector<1x512xf32>
    %c0_22 = arith.constant 0 : index
    %c1280 = arith.constant 1280 : index
    %47 = vector.load %arg13[%c0_22, %c1280] : memref<1x3712xf32, #tpu.memory_space<vmem>>, vector<1x512xf32>
    %48 = arith.addf %46, %47 : vector<1x512xf32>
    %cst_23 = arith.constant 0.000000e+00 : f32
    %49 = vector.broadcast %cst_23 : f32 to vector<1x512xf32>
    %50 = arith.maximumf %48, %49 : vector<1x512xf32>
    %51 = arith.truncf %50 : vector<1x512xf32> to vector<1x512xbf16>
    %c0_24 = arith.constant 0 : index
    %c0_25 = arith.constant 0 : index
    %52 = vector.load %arg6[%c0_24, %c0_25] : memref<512x256xbf16, #tpu.memory_space<vmem>>, vector<512x256xbf16>
    %cst_26 = arith.constant dense<0.000000e+00> : vector<1x256xf32>
    %53 = tpu.matmul %51, %52, %cst_26 {dimension_numbers = #tpu.dot_dimension_numbers<[1], [0], [0], [1], [0, 0, 1, 1], [], []>} : vector<1x512xbf16>, vector<512x256xbf16>, vector<1x256xf32> -> vector<1x256xf32>
    %c0_27 = arith.constant 0 : index
    %c1792 = arith.constant 1792 : index
    %54 = vector.load %arg13[%c0_27, %c1792] : memref<1x3712xf32, #tpu.memory_space<vmem>>, vector<1x256xf32>
    %55 = arith.addf %53, %54 : vector<1x256xf32>
    %cst_28 = arith.constant 0.000000e+00 : f32
    %56 = vector.broadcast %cst_28 : f32 to vector<1x256xf32>
    %57 = arith.maximumf %55, %56 : vector<1x256xf32>
    %58 = arith.truncf %57 : vector<1x256xf32> to vector<1x256xbf16>
    %c0_29 = arith.constant 0 : index
    %c0_30 = arith.constant 0 : index
    %59 = vector.load %arg7[%c0_29, %c0_30] : memref<256x128xbf16, #tpu.memory_space<vmem>>, vector<256x128xbf16>
    %cst_31 = arith.constant dense<0.000000e+00> : vector<1x128xf32>
    %60 = tpu.matmul %58, %59, %cst_31 {dimension_numbers = #tpu.dot_dimension_numbers<[1], [0], [0], [1], [0, 0, 1, 1], [], []>} : vector<1x256xbf16>, vector<256x128xbf16>, vector<1x128xf32> -> vector<1x128xf32>
    %c0_32 = arith.constant 0 : index
    %c2048 = arith.constant 2048 : index
    %61 = vector.load %arg13[%c0_32, %c2048] : memref<1x3712xf32, #tpu.memory_space<vmem>>, vector<1x128xf32>
    %62 = arith.addf %60, %61 : vector<1x128xf32>
    %c0_33 = arith.constant 0 : index
    %c0_34 = arith.constant 0 : index
    %c0_35 = arith.constant 0 : index
    %63 = vector.load %arg14[%c0_33, %c0_34, %c0_35] : memref<1x1x128xf32, #tpu.memory_space<vmem>>, vector<1x1x128xf32>
    %64 = vector.shape_cast %63 : vector<1x1x128xf32> to vector<1x128xf32>
    %65 = vector.shape_cast %62 : vector<1x128xf32> to vector<1x1x128xf32>
    tpu.vector_store %arg14[%c0_33, %c0_34, %c0_35], %65 {strides = array<i32>} : memref<1x1x128xf32, #tpu.memory_space<vmem>>, vector<1x1x128xf32>,
    %66 = vector.extract_strided_slice %3 {offsets = [0, 0], sizes = [128, 1], strides = [1, 1]} : vector<128x3xf32> to vector<128x1xf32>
    %67 = vector.extract_strided_slice %62 {offsets = [0, 0], sizes = [1, 3], strides = [1, 1]} : vector<1x128xf32> to vector<1x3xf32>
    %68 = vector.broadcast %66 : vector<128x1xf32> to vector<128x3xf32>
    %69 = vector.broadcast %67 : vector<1x3xf32> to vector<128x3xf32>
    %70 = arith.mulf %68, %69 : vector<128x3xf32>
    %71 = vector.extract_strided_slice %3 {offsets = [0, 1], sizes = [128, 1], strides = [1, 1]} : vector<128x3xf32> to vector<128x1xf32>
    %72 = vector.extract_strided_slice %62 {offsets = [0, 3], sizes = [1, 3], strides = [1, 1]} : vector<1x128xf32> to vector<1x3xf32>
    %73 = vector.broadcast %71 : vector<128x1xf32> to vector<128x3xf32>
    %74 = vector.broadcast %72 : vector<1x3xf32> to vector<128x3xf32>
    %75 = arith.mulf %73, %74 : vector<128x3xf32>
    %76 = arith.addf %70, %75 : vector<128x3xf32>
    %77 = vector.extract_strided_slice %3 {offsets = [0, 2], sizes = [128, 1], strides = [1, 1]} : vector<128x3xf32> to vector<128x1xf32>
    %78 = vector.extract_strided_slice %62 {offsets = [0, 6], sizes = [1, 3], strides = [1, 1]} : vector<1x128xf32> to vector<1x3xf32>
    %79 = vector.broadcast %77 : vector<128x1xf32> to vector<128x3xf32>
    %80 = vector.broadcast %78 : vector<1x3xf32> to vector<128x3xf32>
    %81 = arith.mulf %79, %80 : vector<128x3xf32>
    %82 = arith.addf %76, %81 : vector<128x3xf32>
    %83 = vector.extract_strided_slice %82 {offsets = [0, 0], sizes = [128, 1], strides = [1, 1]} : vector<128x3xf32> to vector<128x1xf32>
    %84 = vector.extract_strided_slice %1 {offsets = [0, 0], sizes = [1, 64], strides = [1, 1]} : vector<3x64xf32> to vector<1x64xf32>
    %85 = vector.broadcast %83 : vector<128x1xf32> to vector<128x64xf32>
    %86 = vector.broadcast %84 : vector<1x64xf32> to vector<128x64xf32>
    %87 = arith.mulf %85, %86 : vector<128x64xf32>
    %88 = vector.extract_strided_slice %82 {offsets = [0, 1], sizes = [128, 1], strides = [1, 1]} : vector<128x3xf32> to vector<128x1xf32>
    %89 = vector.extract_strided_slice %1 {offsets = [1, 0], sizes = [1, 64], strides = [1, 1]} : vector<3x64xf32> to vector<1x64xf32>
    %90 = vector.broadcast %88 : vector<128x1xf32> to vector<128x64xf32>
    %91 = vector.broadcast %89 : vector<1x64xf32> to vector<128x64xf32>
    %92 = arith.mulf %90, %91 : vector<128x64xf32>
    %93 = arith.addf %87, %92 : vector<128x64xf32>
    %94 = vector.extract_strided_slice %82 {offsets = [0, 2], sizes = [128, 1], strides = [1, 1]} : vector<128x3xf32> to vector<128x1xf32>
    %95 = vector.extract_strided_slice %1 {offsets = [2, 0], sizes = [1, 64], strides = [1, 1]} : vector<3x64xf32> to vector<1x64xf32>
    %96 = vector.broadcast %94 : vector<128x1xf32> to vector<128x64xf32>
    %97 = vector.broadcast %95 : vector<1x64xf32> to vector<128x64xf32>
    %98 = arith.mulf %96, %97 : vector<128x64xf32>
    %99 = arith.addf %93, %98 : vector<128x64xf32>
    %c0_36 = arith.constant 0 : index
    %c2176 = arith.constant 2176 : index
    %100 = vector.load %arg13[%c0_36, %c2176] : memref<1x3712xf32, #tpu.memory_space<vmem>>, vector<1x64xf32>
    %101 = vector.broadcast %100 : vector<1x64xf32> to vector<128x64xf32>
    %102 = arith.addf %99, %101 : vector<128x64xf32>
    %cst_37 = arith.constant 0.000000e+00 : f32
    %103 = vector.broadcast %cst_37 : f32 to vector<128x64xf32>
    %104 = arith.maximumf %102, %103 : vector<128x64xf32>
    %105 = arith.truncf %104 : vector<128x64xf32> to vector<128x64xbf16>
    %c0_38 = arith.constant 0 : index
    %c0_39 = arith.constant 0 : index
    %106 = vector.load %arg9[%c0_38, %c0_39] : memref<64x64xbf16, #tpu.memory_space<vmem>>, vector<64x64xbf16>
    %cst_40 = arith.constant dense<0.000000e+00> : vector<128x64xf32>
    %107 = tpu.matmul %105, %106, %cst_40 {dimension_numbers = #tpu.dot_dimension_numbers<[1], [0], [0], [1], [0, 0, 1, 1], [], []>} : vector<128x64xbf16>, vector<64x64xbf16>, vector<128x64xf32> -> vector<128x64xf32>
    %c0_41 = arith.constant 0 : index
    %c2304 = arith.constant 2304 : index
    %108 = vector.load %arg13[%c0_41, %c2304] : memref<1x3712xf32, #tpu.memory_space<vmem>>, vector<1x64xf32>
    %109 = vector.broadcast %108 : vector<1x64xf32> to vector<128x64xf32>
    %110 = arith.addf %107, %109 : vector<128x64xf32>
    %cst_42 = arith.constant 0.000000e+00 : f32
    %111 = vector.broadcast %cst_42 : f32 to vector<128x64xf32>
    %112 = arith.maximumf %110, %111 : vector<128x64xf32>
    %113 = arith.truncf %112 : vector<128x64xf32> to vector<128x64xbf16>
    %c0_43 = arith.constant 0 : index
    %c0_44 = arith.constant 0 : index
    %114 = vector.load %arg10[%c0_43, %c0_44] : memref<64x64xbf16, #tpu.memory_space<vmem>>, vector<64x64xbf16>
    %cst_45 = arith.constant dense<0.000000e+00> : vector<128x64xf32>
    %115 = tpu.matmul %113, %114, %cst_45 {dimension_numbers = #tpu.dot_dimension_numbers<[1], [0], [0], [1], [0, 0, 1, 1], [], []>} : vector<128x64xbf16>, vector<64x64xbf16>, vector<128x64xf32> -> vector<128x64xf32>
    %c0_46 = arith.constant 0 : index
    %c2432 = arith.constant 2432 : index
    %116 = vector.load %arg13[%c0_46, %c2432] : memref<1x3712xf32, #tpu.memory_space<vmem>>, vector<1x64xf32>
    %117 = vector.broadcast %116 : vector<1x64xf32> to vector<128x64xf32>
    %118 = arith.addf %115, %117 : vector<128x64xf32>
    %cst_47 = arith.constant 0.000000e+00 : f32
    %119 = vector.broadcast %cst_47 : f32 to vector<128x64xf32>
    %120 = arith.maximumf %118, %119 : vector<128x64xf32>
    %121 = arith.truncf %120 : vector<128x64xf32> to vector<128x64xbf16>
    %c0_48 = arith.constant 0 : index
    %c0_49 = arith.constant 0 : index
    %122 = vector.load %arg11[%c0_48, %c0_49] : memref<64x128xbf16, #tpu.memory_space<vmem>>, vector<64x128xbf16>
    %cst_50 = arith.constant dense<0.000000e+00> : vector<128x128xf32>
    %123 = tpu.matmul %121, %122, %cst_50 {dimension_numbers = #tpu.dot_dimension_numbers<[1], [0], [0], [1], [0, 0, 1, 1], [], []>} : vector<128x64xbf16>, vector<64x128xbf16>, vector<128x128xf32> -> vector<128x128xf32>
    %c0_51 = arith.constant 0 : index
    %c2560 = arith.constant 2560 : index
    %124 = vector.load %arg13[%c0_51, %c2560] : memref<1x3712xf32, #tpu.memory_space<vmem>>, vector<1x128xf32>
    %125 = vector.broadcast %124 : vector<1x128xf32> to vector<128x128xf32>
    %126 = arith.addf %123, %125 : vector<128x128xf32>
    %cst_52 = arith.constant 0.000000e+00 : f32
    %127 = vector.broadcast %cst_52 : f32 to vector<128x128xf32>
    %128 = arith.maximumf %126, %127 : vector<128x128xf32>
    %129 = arith.truncf %128 : vector<128x128xf32> to vector<128x128xbf16>
    %c0_53 = arith.constant 0 : index
    %c0_54 = arith.constant 0 : index
    %130 = vector.load %arg12[%c0_53, %c0_54] : memref<128x1024xbf16, #tpu.memory_space<vmem>>, vector<128x1024xbf16>
    %cst_55 = arith.constant dense<0.000000e+00> : vector<128x1024xf32>
    %131 = tpu.matmul %129, %130, %cst_55 {dimension_numbers = #tpu.dot_dimension_numbers<[1], [0], [0], [1], [0, 0, 1, 1], [], []>} : vector<128x128xbf16>, vector<128x1024xbf16>, vector<128x1024xf32> -> vector<128x1024xf32>
    %c0_56 = arith.constant 0 : index
    %c2688 = arith.constant 2688 : index
    %132 = vector.load %arg13[%c0_56, %c2688] : memref<1x3712xf32, #tpu.memory_space<vmem>>, vector<1x1024xf32>
    %133 = vector.broadcast %132 : vector<1x1024xf32> to vector<128x1024xf32>
    %134 = arith.addf %131, %133 : vector<128x1024xf32>
    %cst_57 = arith.constant dense<0xFF800000> : vector<1024xf32>
    %135 = vector.multi_reduction <maximumf>, %134, %cst_57 [0] : vector<128x1024xf32> to vector<1024xf32>
    %136 = vector.shape_cast %135 : vector<1024xf32> to vector<1x1024xf32>
    %c0_58 = arith.constant 0 : index
    %c0_59 = arith.constant 0 : index
    %c0_60 = arith.constant 0 : index
    %137 = vector.load %arg15[%c0_58, %c0_59, %c0_60] : memref<1x1x1024xf32, #tpu.memory_space<vmem>>, vector<1x1x1024xf32>
    %138 = vector.shape_cast %137 : vector<1x1x1024xf32> to vector<1x1024xf32>
    %139 = vector.shape_cast %136 : vector<1x1024xf32> to vector<1x1x1024xf32>
    tpu.vector_store %arg15[%c0_58, %c0_59, %c0_60], %139 {strides = array<i32>} : memref<1x1x1024xf32, #tpu.memory_space<vmem>>, vector<1x1x1024xf32>,
    return
  }
  func.func @transform_0(%arg0: i32) -> (i32, i32, i32) {
    %c0_i32 = arith.constant 0 : i32
    %c0_i32_0 = arith.constant 0 : i32
    %c0_i32_1 = arith.constant 0 : i32
    return %arg0, %c0_i32, %c0_i32_0 : i32, i32, i32
  }
  func.func @transform_1(%arg0: i32) -> (i32, i32) {
    %c0_i32 = arith.constant 0 : i32
    %c0_i32_0 = arith.constant 0 : i32
    %c0_i32_1 = arith.constant 0 : i32
    return %c0_i32, %c0_i32_0 : i32, i32
  }
  func.func @transform_2(%arg0: i32) -> (i32, i32) {
    %c0_i32 = arith.constant 0 : i32
    %c0_i32_0 = arith.constant 0 : i32
    %c0_i32_1 = arith.constant 0 : i32
    return %c0_i32, %c0_i32_0 : i32, i32
  }
  func.func @transform_3(%arg0: i32) -> (i32, i32) {
    %c0_i32 = arith.constant 0 : i32
    %c0_i32_0 = arith.constant 0 : i32
    %c0_i32_1 = arith.constant 0 : i32
    return %c0_i32, %c0_i32_0 : i32, i32
  }
  func.func @transform_4(%arg0: i32) -> (i32, i32) {
    %c0_i32 = arith.constant 0 : i32
    %c0_i32_0 = arith.constant 0 : i32
    %c0_i32_1 = arith.constant 0 : i32
    return %c0_i32, %c0_i32_0 : i32, i32
  }
  func.func @transform_5(%arg0: i32) -> (i32, i32) {
    %c0_i32 = arith.constant 0 : i32
    %c0_i32_0 = arith.constant 0 : i32
    %c0_i32_1 = arith.constant 0 : i32
    return %c0_i32, %c0_i32_0 : i32, i32
  }
  func.func @transform_6(%arg0: i32) -> (i32, i32) {
    %c0_i32 = arith.constant 0 : i32
    %c0_i32_0 = arith.constant 0 : i32
    %c0_i32_1 = arith.constant 0 : i32
    return %c0_i32, %c0_i32_0 : i32, i32
  }
  func.func @transform_7(%arg0: i32) -> (i32, i32) {
    %c0_i32 = arith.constant 0 : i32
    %c0_i32_0 = arith.constant 0 : i32
    %c0_i32_1 = arith.constant 0 : i32
    return %c0_i32, %c0_i32_0 : i32, i32
  }
  func.func @transform_8(%arg0: i32) -> (i32, i32) {
    %c0_i32 = arith.constant 0 : i32
    %c0_i32_0 = arith.constant 0 : i32
    %c0_i32_1 = arith.constant 0 : i32
    return %c0_i32, %c0_i32_0 : i32, i32
  }
  func.func @transform_9(%arg0: i32) -> (i32, i32) {
    %c0_i32 = arith.constant 0 : i32
    %c0_i32_0 = arith.constant 0 : i32
    %c0_i32_1 = arith.constant 0 : i32
    return %c0_i32, %c0_i32_0 : i32, i32
  }
  func.func @transform_10(%arg0: i32) -> (i32, i32) {
    %c0_i32 = arith.constant 0 : i32
    %c0_i32_0 = arith.constant 0 : i32
    %c0_i32_1 = arith.constant 0 : i32
    return %c0_i32, %c0_i32_0 : i32, i32
  }
  func.func @transform_11(%arg0: i32) -> (i32, i32) {
    %c0_i32 = arith.constant 0 : i32
    %c0_i32_0 = arith.constant 0 : i32
    %c0_i32_1 = arith.constant 0 : i32
    return %c0_i32, %c0_i32_0 : i32, i32
  }
  func.func @transform_12(%arg0: i32) -> (i32, i32) {
    %c0_i32 = arith.constant 0 : i32
    %c0_i32_0 = arith.constant 0 : i32
    %c0_i32_1 = arith.constant 0 : i32
    return %c0_i32, %c0_i32_0 : i32, i32
  }
  func.func @transform_13(%arg0: i32) -> (i32, i32, i32) {
    %c0_i32 = arith.constant 0 : i32
    %c0_i32_0 = arith.constant 0 : i32
    %c0_i32_1 = arith.constant 0 : i32
    return %arg0, %c0_i32, %c0_i32_0 : i32, i32, i32
  }
  func.func @transform_14(%arg0: i32) -> (i32, i32, i32) {
    %c0_i32 = arith.constant 0 : i32
    %c0_i32_0 = arith.constant 0 : i32
    %c0_i32_1 = arith.constant 0 : i32
    return %arg0, %c0_i32, %c0_i32_0 : i32, i32, i32
  }
}

</mosaic_0001>

<llo_original>
// kernel: neg.1
$region0: #{neg.1}
  #allocation0 [shape = 's32[1]{0}', space=sflag, size = 0x4, scoped, tag = 'scoped memory for neg.1']
  %s0 = inlined_call_operand.vmem [shape: f32[2,2], index: 0, kind: input, shape index: {}]
  %s1 = inlined_call_operand.vmem [shape: f32[2,2], index: 1, kind: output, shape index: {}]
  %v2 = vld [vmem:[%s0] sm:$0x3]
  %3 = xla_tuple %v2
  %4 = xla_tuple %3
  %v5 = vxor.u32 %v2, 2147483648
  %6 = xla_tuple %v5
  %7 = vst [vmem:[%s1] sm:$0x3] %v5

// kernel: squeeze.3
$region0: #{squeeze.3}
  %s0 = inlined_call_operand.vmem [shape: f32[2,9], index: 0, kind: input, shape index: {}]
  %s1 = inlined_call_operand.vmem [shape: f32[2,3,3], index: 1, kind: output, shape index: {}]
  $region1: #{squeeze.3} parent=0
    #allocation0 [shape = 'u8[8192]{0}', space=vmem, size = 0x2000, scoped, tag = 'scoped mem for output reshape']
    #allocation1 [shape = 'u8[4096]{0}', space=vmem, size = 0x1000, scoped, tag = 'scoped mem for input reshape']
    %s3 = ssub.s32 4, 1
    %v4 = vld [vmem:[%s0] sm:%s3]
    %5 = vst [vmem:[#allocation1] sm:%s3] %v4
    %v6 = vld [vmem:[#allocation1] sm:$0x3]
    %vm7 = vcmask 23552
    %8 = vst.msk [vmem:[#allocation0] ss:$8 sm:$0x3] %vm7, %v6
    %v9 = vld [vmem:[#allocation1] sm:$0x3]
    %10 = vrot.lane.b32.xlu0 %v9, 125
    %v11 = vpop.permute.xlu0 %10
    %vm12 = vcmask 23552
    %s13 = scalar_lea.vmem [#allocation0], 1
    %14 = vst.msk [vmem:[%s13] ss:$8 sm:$0x3] %vm12, %v11
    %v15 = vld [vmem:[#allocation1] sm:$0x3]
    %16 = vrot.lane.b32.xlu0 %v15, 122
    %v17 = vpop.permute.xlu0 %16
    %vm18 = vcmask 23552
    %s19 = scalar_lea.vmem [#allocation0], 2
    %20 = vst.msk [vmem:[%s19] ss:$8 sm:$0x3] %vm18, %v17
    %s22 = ssub.s32 16, 1
    %v23 = vld [vmem:[#allocation0] sm:%s22]
    %s25 = ssub.s32 16, 1
    %26 = vst [vmem:[%s1] sm:%s25] %v23
    %s27 = scalar_lea.vmem [#allocation0], 8
    %v28 = vld [vmem:[%s27] sm:%s22]
    %s30 = ssub.s32 16, 1
    %s31 = scalar_lea.vmem %s1, 4
    %32 = vst [vmem:[%s31] sm:%s30] %v28

// kernel: pointnet_encoder_forward.1
$region0: #{pointnet_encoder_forward.1}
  #allocation0 [shape = 'u32[]', space=smem, size = 0x4, offset = 0x4, fixed_abs, tag = 'smem constant byte address 0x4 - core index']
  #allocation1 [shape = 'u32[72,128]{1,0:T(1,128)}', space=vmem, size = 0x9000, scoped, tag = 'internal scratch']
  %s0 = inlined_call_operand.vmem [shape: f32[2,128,3], index: 0, kind: input, shape index: {}]
  %s1 = inlined_call_operand.vmem [shape: f32[3,64], index: 1, kind: input, shape index: {}]
  %s2 = inlined_call_operand.vmem [shape: bf16[64,128], index: 2, kind: input, shape index: {}]
  %s3 = inlined_call_operand.hbm [shape: bf16[128,1024], index: 3, kind: input, shape index: {}]
  %s4 = inlined_call_operand.hbm [shape: bf16[1024,512], index: 4, kind: input, shape index: {}]
  %s5 = inlined_call_operand.hbm [shape: bf16[512,256], index: 5, kind: input, shape index: {}]
  %s6 = inlined_call_operand.vmem [shape: bf16[256,128], index: 6, kind: input, shape index: {}]
  %s7 = inlined_call_operand.vmem [shape: f32[3,64], index: 7, kind: input, shape index: {}]
  %s8 = inlined_call_operand.vmem [shape: bf16[64,64], index: 8, kind: input, shape index: {}]
  %s9 = inlined_call_operand.vmem [shape: bf16[64,64], index: 9, kind: input, shape index: {}]
  %s10 = inlined_call_operand.vmem [shape: bf16[64,128], index: 10, kind: input, shape index: {}]
  %s11 = inlined_call_operand.hbm [shape: bf16[128,1024], index: 11, kind: input, shape index: {}]
  %s12 = inlined_call_operand.hbm [shape: f32[1,3712], index: 12, kind: input, shape index: {}]
  %s13 = inlined_call_operand.vmem [shape: f32[2,1,128], index: 13, kind: output, shape index: {0}]
  %s14 = inlined_call_operand.vmem [shape: f32[2,1,1024], index: 14, kind: output, shape index: {1}]
  %15 = xla_tuple %s13, %s14
  %s16 = sld [smem:[#allocation0]]
  $region113: #{pointnet_encoder_forward.1} parent=0
    _
  %s18 = ssub.s32 1, %s16
  %s19 = scalar_select 0, %s18, %s16
  $region1: #{pointnet_encoder_forward.1} parent=0
    #allocation2 [shape = 'u8[262144]{0}', space=vmem, size = 0x40000, scoped, tag = 'input window, operand 3, single buffered']
    #allocation3 [shape = 's32[2]{0}', space=sflag, size = 0x8, scoped, tag = 'scoped memory for pointnet_encoder_forward.1']
    #allocation4 [shape = 'u8[1048576]{0}', space=vmem, size = 0x100000, scoped, tag = 'input window, operand 4, single buffered']
    #allocation5 [shape = 's32[1]{0}', space=sflag, size = 0x4, scoped, tag = 'scoped memory for pointnet_encoder_forward.1']
    #allocation6 [shape = 'u8[262144]{0}', space=vmem, size = 0x40000, scoped, tag = 'input window, operand 5, single buffered']
    #allocation7 [shape = 'u8[262144]{0}', space=vmem, size = 0x40000, scoped, tag = 'input window, operand 11, single buffered']
    #allocation8 [shape = 's32[1]{0}', space=sflag, size = 0x4, scoped, tag = 'scoped memory for pointnet_encoder_forward.1']
    #allocation9 [shape = 'u8[14848]{0}', space=vmem, size = 0x3c00, scoped, tag = 'input window, operand 12, single buffered']
    %20 = vsyncpa [#allocation3], 0
    %21 = vsyncpa [#allocation5], 0
    %22 = vsyncpa [#allocation8], 0
    loop: start=0, step=1, limit=4
    $region2: #{pointnet_encoder_forward.1} parent=1 // loop_pre_header
      _
    $region3: #{pointnet_encoder_forward.1} parent=1 // loop_header
      %s24 = sphi 0, %s28
      %p25 = scmp.ge.s32.totalorder %s24, 4
      %s34 = sphi 0, %s36
      %s37 = sphi 0, %s34
      %s38 = sphi 0, %s37
      %s54 = sphi 0, %s38
      %s58 = sphi 0, %s58
      %s60 = sphi 0, %s58
      %s61 = sphi 0, %s60
      %s75 = sphi 0, %s61
      %s79 = sphi 0, %s79
      %s81 = sphi 0, %s79
      %s82 = sphi 0, %s81
      %s96 = sphi 0, %s82
      %s100 = sphi 0, %s100
      %s102 = sphi 0, %s100
      %s103 = sphi 0, %s102
      %s117 = sphi 0, %s103
      %s121 = sphi 0, %s121
      %s123 = sphi 0, %s121
      %s124 = sphi 0, %s123
      %s138 = sphi 0, %s124
      %s142 = sphi 0, %s142
      %s144 = sphi 0, %s142
      %s145 = sphi 0, %s144
      %s159 = sphi 0, %s145
      %s163 = sphi 0, %s163
      %s165 = sphi 0, %s163
      %s166 = sphi 0, %s165
      %s180 = sphi 0, %s166
      %s184 = sphi 0, %s184
      %s186 = sphi 0, %s184
      %s187 = sphi 0, %s186
      %s201 = sphi 0, %s187
      %s205 = sphi 0, %s205
      %s207 = sphi 0, %s205
      %s208 = sphi 0, %s207
      %s222 = sphi 0, %s208
      %s226 = sphi 0, %s226
      %s228 = sphi 0, %s226
      %s229 = sphi 0, %s228
      %s243 = sphi 0, %s229
      %s247 = sphi 0, %s247
      %s249 = sphi 0, %s247
      %s250 = sphi 0, %s249
      %s264 = sphi 0, %s250
      %s268 = sphi 0, %s268
      %s270 = sphi 0, %s268
      %s271 = sphi 0, %s270
      %s285 = sphi 0, %s271
      %s289 = sphi 0, %s289
      %s291 = sphi 0, %s289
      %s292 = sphi 0, %s291
      %s306 = sphi 0, %s292
      %s312 = sphi 0, %s314
      %s315 = sphi 0, %s312
      %s316 = sphi 0, %s315
      %s332 = sphi 0, %s316
      %s338 = sphi 0, %s340
      %s341 = sphi 0, %s338
      %s342 = sphi 0, %s341
      %s358 = sphi 0, %s342
    $region4: #{pointnet_encoder_forward.1} parent=1 // loop_header_branch
      %27 = sbr.rel (%p25) target = $region8
    $region5: #{pointnet_encoder_forward.1} parent=1 // loop_body
      %s29 = ssub.s32 %s24, 1
      %s30 = ssub.s32 %s24, 2
      %s31 = sadd.s32 %s24, 1
      %s32 = ssub.s32 %s24, %s31
      %p33 = scmp.eq.s32.totalorder %s32, 0
      %s35 = sadd.s32 %s34, 1
      %s36 = scalar_select %p33, %s34, %s35
      %p39 = pneg %p33
      %p40 = scmp.eq.s32.totalorder %s24, 1
      %p41 = por %p39, %p40
      %p42 = scmp.ne.s32.totalorder %s34, %s37
      %p43 = scmp.eq.s32.totalorder %s24, 0
      %p44 = por %p42, %p43
      %p45 = scmp.ne.s32.totalorder %s34, %s37
      %p46 = scmp.eq.s32.totalorder %s29, 1
      %p47 = por %p45, %p46
      %p48 = scmp.ne.s32.totalorder %s37, %s38
      %p49 = scmp.eq.s32.totalorder %s29, 0
      %p50 = por %p48, %p49
      %p51 = scmp.ne.s32.totalorder %s37, %s38
      %p52 = scmp.eq.s32.totalorder %s30, 1
      %p53 = por %p51, %p52
      %p55 = scmp.ne.s32.totalorder %s38, %s54
      %p56 = scmp.eq.s32.totalorder %s30, 0
      %p57 = por %p55, %p56
      %s59 = sadd.s32 %s58, 1
      %p62 = scmp.eq.s32.totalorder %s24, 1
      %p63 = scmp.ne.s32.totalorder %s58, %s60
      %p64 = scmp.eq.s32.totalorder %s24, 0
      %p65 = por %p63, %p64
      %p66 = scmp.ne.s32.totalorder %s58, %s60
      %p67 = scmp.eq.s32.totalorder %s29, 1
      %p68 = por %p66, %p67
      %p69 = scmp.ne.s32.totalorder %s60, %s61
      %p70 = scmp.eq.s32.totalorder %s29, 0
      %p71 = por %p69, %p70
      %p72 = scmp.ne.s32.totalorder %s60, %s61
      %p73 = scmp.eq.s32.totalorder %s30, 1
      %p74 = por %p72, %p73
      %p76 = scmp.ne.s32.totalorder %s61, %s75
      %p77 = scmp.eq.s32.totalorder %s30, 0
      %p78 = por %p76, %p77
      %s80 = sadd.s32 %s79, 1
      %p83 = scmp.eq.s32.totalorder %s24, 1
      %p84 = scmp.ne.s32.totalorder %s79, %s81
      %p85 = scmp.eq.s32.totalorder %s24, 0
      %p86 = por %p84, %p85
      %p87 = scmp.ne.s32.totalorder %s79, %s81
      %p88 = scmp.eq.s32.totalorder %s29, 1
      %p89 = por %p87, %p88
      %p90 = scmp.ne.s32.totalorder %s81, %s82
      %p91 = scmp.eq.s32.totalorder %s29, 0
      %p92 = por %p90, %p91
      %p93 = scmp.ne.s32.totalorder %s81, %s82
      %p94 = scmp.eq.s32.totalorder %s30, 1
      %p95 = por %p93, %p94
      %p97 = scmp.ne.s32.totalorder %s82, %s96
      %p98 = scmp.eq.s32.totalorder %s30, 0
      %p99 = por %p97, %p98
      %s101 = sadd.s32 %s100, 1
      %p104 = scmp.eq.s32.totalorder %s24, 1
      %p105 = scmp.ne.s32.totalorder %s100, %s102
      %p106 = scmp.eq.s32.totalorder %s24, 0
      %p107 = por %p105, %p106
      %p108 = scmp.ne.s32.totalorder %s100, %s102
      %p109 = scmp.eq.s32.totalorder %s29, 1
      %p110 = por %p108, %p109
      %p111 = scmp.ne.s32.totalorder %s102, %s103
      %p112 = scmp.eq.s32.totalorder %s29, 0
      %p113 = por %p111, %p112
      %p114 = scmp.ne.s32.totalorder %s102, %s103
      %p115 = scmp.eq.s32.totalorder %s30, 1
      %p116 = por %p114, %p115
      %p118 = scmp.ne.s32.totalorder %s103, %s117
      %p119 = scmp.eq.s32.totalorder %s30, 0
      %p120 = por %p118, %p119
      %s122 = sadd.s32 %s121, 1
      %p125 = scmp.eq.s32.totalorder %s24, 1
      %p126 = scmp.ne.s32.totalorder %s121, %s123
      %p127 = scmp.eq.s32.totalorder %s24, 0
      %p128 = por %p126, %p127
      %p129 = scmp.ne.s32.totalorder %s121, %s123
      %p130 = scmp.eq.s32.totalorder %s29, 1
      %p131 = por %p129, %p130
      %p132 = scmp.ne.s32.totalorder %s123, %s124
      %p133 = scmp.eq.s32.totalorder %s29, 0
      %p134 = por %p132, %p133
      %p135 = scmp.ne.s32.totalorder %s123, %s124
      %p136 = scmp.eq.s32.totalorder %s30, 1
      %p137 = por %p135, %p136
      %p139 = scmp.ne.s32.totalorder %s124, %s138
      %p140 = scmp.eq.s32.totalorder %s30, 0
      %p141 = por %p139, %p140
      %s143 = sadd.s32 %s142, 1
      %p146 = scmp.eq.s32.totalorder %s24, 1
      %p147 = scmp.ne.s32.totalorder %s142, %s144
      %p148 = scmp.eq.s32.totalorder %s24, 0
      %p149 = por %p147, %p148
      %p150 = scmp.ne.s32.totalorder %s142, %s144
      %p151 = scmp.eq.s32.totalorder %s29, 1
      %p152 = por %p150, %p151
      %p153 = scmp.ne.s32.totalorder %s144, %s145
      %p154 = scmp.eq.s32.totalorder %s29, 0
      %p155 = por %p153, %p154
      %p156 = scmp.ne.s32.totalorder %s144, %s145
      %p157 = scmp.eq.s32.totalorder %s30, 1
      %p158 = por %p156, %p157
      %p160 = scmp.ne.s32.totalorder %s145, %s159
      %p161 = scmp.eq.s32.totalorder %s30, 0
      %p162 = por %p160, %p161
      %s164 = sadd.s32 %s163, 1
      %p167 = scmp.eq.s32.totalorder %s24, 1
      %p168 = scmp.ne.s32.totalorder %s163, %s165
      %p169 = scmp.eq.s32.totalorder %s24, 0
      %p170 = por %p168, %p169
      %p171 = scmp.ne.s32.totalorder %s163, %s165
      %p172 = scmp.eq.s32.totalorder %s29, 1
      %p173 = por %p171, %p172
      %p174 = scmp.ne.s32.totalorder %s165, %s166
      %p175 = scmp.eq.s32.totalorder %s29, 0
      %p176 = por %p174, %p175
      %p177 = scmp.ne.s32.totalorder %s165, %s166
      %p178 = scmp.eq.s32.totalorder %s30, 1
      %p179 = por %p177, %p178
      %p181 = scmp.ne.s32.totalorder %s166, %s180
      %p182 = scmp.eq.s32.totalorder %s30, 0
      %p183 = por %p181, %p182
      %s185 = sadd.s32 %s184, 1
      %p188 = scmp.eq.s32.totalorder %s24, 1
      %p189 = scmp.ne.s32.totalorder %s184, %s186
      %p190 = scmp.eq.s32.totalorder %s24, 0
      %p191 = por %p189, %p190
      %p192 = scmp.ne.s32.totalorder %s184, %s186
      %p193 = scmp.eq.s32.totalorder %s29, 1
      %p194 = por %p192, %p193
      %p195 = scmp.ne.s32.totalorder %s186, %s187
      %p196 = scmp.eq.s32.totalorder %s29, 0
      %p197 = por %p195, %p196
      %p198 = scmp.ne.s32.totalorder %s186, %s187
      %p199 = scmp.eq.s32.totalorder %s30, 1
      %p200 = por %p198, %p199
      %p202 = scmp.ne.s32.totalorder %s187, %s201
      %p203 = scmp.eq.s32.totalorder %s30, 0
      %p204 = por %p202, %p203
      %s206 = sadd.s32 %s205, 1
      %p209 = scmp.eq.s32.totalorder %s24, 1
      %p210 = scmp.ne.s32.totalorder %s205, %s207
      %p211 = scmp.eq.s32.totalorder %s24, 0
      %p212 = por %p210, %p211
      %p213 = scmp.ne.s32.totalorder %s205, %s207
      %p214 = scmp.eq.s32.totalorder %s29, 1
      %p215 = por %p213, %p214
      %p216 = scmp.ne.s32.totalorder %s207, %s208
      %p217 = scmp.eq.s32.totalorder %s29, 0
      %p218 = por %p216, %p217
      %p219 = scmp.ne.s32.totalorder %s207, %s208
      %p220 = scmp.eq.s32.totalorder %s30, 1
      %p221 = por %p219, %p220
      %p223 = scmp.ne.s32.totalorder %s208, %s222
      %p224 = scmp.eq.s32.totalorder %s30, 0
      %p225 = por %p223, %p224
      %s227 = sadd.s32 %s226, 1
      %p230 = scmp.eq.s32.totalorder %s24, 1
      %p231 = scmp.ne.s32.totalorder %s226, %s228
      %p232 = scmp.eq.s32.totalorder %s24, 0
      %p233 = por %p231, %p232
      %p234 = scmp.ne.s32.totalorder %s226, %s228
      %p235 = scmp.eq.s32.totalorder %s29, 1
      %p236 = por %p234, %p235
      %p237 = scmp.ne.s32.totalorder %s228, %s229
      %p238 = scmp.eq.s32.totalorder %s29, 0
      %p239 = por %p237, %p238
      %p240 = scmp.ne.s32.totalorder %s228, %s229
      %p241 = scmp.eq.s32.totalorder %s30, 1
      %p242 = por %p240, %p241
      %p244 = scmp.ne.s32.totalorder %s229, %s243
      %p245 = scmp.eq.s32.totalorder %s30, 0
      %p246 = por %p244, %p245
      %s248 = sadd.s32 %s247, 1
      %p251 = scmp.eq.s32.totalorder %s24, 1
      %p252 = scmp.ne.s32.totalorder %s247, %s249
      %p253 = scmp.eq.s32.totalorder %s24, 0
      %p254 = por %p252, %p253
      %p255 = scmp.ne.s32.totalorder %s247, %s249
      %p256 = scmp.eq.s32.totalorder %s29, 1
      %p257 = por %p255, %p256
      %p258 = scmp.ne.s32.totalorder %s249, %s250
      %p259 = scmp.eq.s32.totalorder %s29, 0
      %p260 = por %p258, %p259
      %p261 = scmp.ne.s32.totalorder %s249, %s250
      %p262 = scmp.eq.s32.totalorder %s30, 1
      %p263 = por %p261, %p262
      %p265 = scmp.ne.s32.totalorder %s250, %s264
      %p266 = scmp.eq.s32.totalorder %s30, 0
      %p267 = por %p265, %p266
      %s269 = sadd.s32 %s268, 1
      %p272 = scmp.eq.s32.totalorder %s24, 1
      %p273 = scmp.ne.s32.totalorder %s268, %s270
      %p274 = scmp.eq.s32.totalorder %s24, 0
      %p275 = por %p273, %p274
      %p276 = scmp.ne.s32.totalorder %s268, %s270
      %p277 = scmp.eq.s32.totalorder %s29, 1
      %p278 = por %p276, %p277
      %p279 = scmp.ne.s32.totalorder %s270, %s271
      %p280 = scmp.eq.s32.totalorder %s29, 0
      %p281 = por %p279, %p280
      %p282 = scmp.ne.s32.totalorder %s270, %s271
      %p283 = scmp.eq.s32.totalorder %s30, 1
      %p284 = por %p282, %p283
      %p286 = scmp.ne.s32.totalorder %s271, %s285
      %p287 = scmp.eq.s32.totalorder %s30, 0
      %p288 = por %p286, %p287
      %s290 = sadd.s32 %s289, 1
      %p293 = scmp.eq.s32.totalorder %s24, 1
      %p294 = scmp.ne.s32.totalorder %s289, %s291
      %p295 = scmp.eq.s32.totalorder %s24, 0
      %p296 = por %p294, %p295
      %p297 = scmp.ne.s32.totalorder %s289, %s291
      %p298 = scmp.eq.s32.totalorder %s29, 1
      %p299 = por %p297, %p298
      %p300 = scmp.ne.s32.totalorder %s291, %s292
      %p301 = scmp.eq.s32.totalorder %s29, 0
      %p302 = por %p300, %p301
      %p303 = scmp.ne.s32.totalorder %s291, %s292
      %p304 = scmp.eq.s32.totalorder %s30, 1
      %p305 = por %p303, %p304
      %p307 = scmp.ne.s32.totalorder %s292, %s306
      %p308 = scmp.eq.s32.totalorder %s30, 0
      %p309 = por %p307, %p308
      %s310 = ssub.s32 %s24, %s31
      %p311 = scmp.eq.s32.totalorder %s310, 0
      %s313 = sadd.s32 %s312, 1
      %s314 = scalar_select %p311, %s312, %s313
      %p317 = pneg %p311
      %p318 = scmp.eq.s32.totalorder %s24, 1
      %p319 = por %p317, %p318
      %p320 = scmp.ne.s32.totalorder %s312, %s315
      %p321 = scmp.eq.s32.totalorder %s24, 0
      %p322 = por %p320, %p321
      %p323 = scmp.ne.s32.totalorder %s312, %s315
      %p324 = scmp.eq.s32.totalorder %s29, 1
      %p325 = por %p323, %p324
      %p326 = scmp.ne.s32.totalorder %s315, %s316
      %p327 = scmp.eq.s32.totalorder %s29, 0
      %p328 = por %p326, %p327
      %p329 = scmp.ne.s32.totalorder %s315, %s316
      %p330 = scmp.eq.s32.totalorder %s30, 1
      %p331 = por %p329, %p330
      %p333 = scmp.ne.s32.totalorder %s316, %s332
      %p334 = scmp.eq.s32.totalorder %s30, 0
      %p335 = por %p333, %p334
      %s336 = ssub.s32 %s24, %s31
      %p337 = scmp.eq.s32.totalorder %s336, 0
      %s339 = sadd.s32 %s338, 1
      %s340 = scalar_select %p337, %s338, %s339
      %p343 = pneg %p337
      %p344 = scmp.eq.s32.totalorder %s24, 1
      %p345 = por %p343, %p344
      %p346 = scmp.ne.s32.totalorder %s338, %s341
      %p347 = scmp.eq.s32.totalorder %s24, 0
      %p348 = por %p346, %p347
      %p349 = scmp.ne.s32.totalorder %s338, %s341
      %p350 = scmp.eq.s32.totalorder %s29, 1
      %p351 = por %p349, %p350
      %p352 = scmp.ne.s32.totalorder %s341, %s342
      %p353 = scmp.eq.s32.totalorder %s29, 0
      %p354 = por %p352, %p353
      %p355 = scmp.ne.s32.totalorder %s341, %s342
      %p356 = scmp.eq.s32.totalorder %s30, 1
      %p357 = por %p355, %p356
      %p359 = scmp.ne.s32.totalorder %s342, %s358
      %p360 = scmp.eq.s32.totalorder %s30, 0
      %p361 = por %p359, %p360
      %p362 = scmp.le.s32.totalorder 1, %s24
      %p363 = scmp.lt.s32.totalorder %s24, 3
      %p364 = pnand %p362, %p363
      %p365 = pneg %p364
      // Predicated region
      $region9: #{pointnet_encoder_forward.1} parent=5 // pred_check
        _
      $region10: #{pointnet_encoder_forward.1} parent=5 // pred_check_branch
        %367 = sbr.rel (%p364) target = $region12
      $region11: #{pointnet_encoder_forward.1} parent=5 // pred_region
        %s368 = ssub.s32 %s24, 1
        // Predicated region
        $region13: #{pointnet_encoder_forward.1} parent=11 // pred_check
          %p369 = pneg %p71
        $region14: #{pointnet_encoder_forward.1} parent=11 // pred_check_branch
          %371 = sbr.rel (%p369) target = $region16
        $region15: #{pointnet_encoder_forward.1} parent=11 // pred_region
          _
        $region16: #{pointnet_encoder_forward.1} parent=11 // pred_fallthru
          _
        // Predicated region
        $region17: #{pointnet_encoder_forward.1} parent=11 // pred_check
          %p372 = pneg %p92
        $region18: #{pointnet_encoder_forward.1} parent=11 // pred_check_branch
          %374 = sbr.rel (%p372) target = $region20
        $region19: #{pointnet_encoder_forward.1} parent=11 // pred_region
          _
        $region20: #{pointnet_encoder_forward.1} parent=11 // pred_fallthru
          _
        // Predicated region
        $region21: #{pointnet_encoder_forward.1} parent=11 // pred_check
          %p375 = pneg %p113
        $region22: #{pointnet_encoder_forward.1} parent=11 // pred_check_branch
          %377 = sbr.rel (%p375) target = $region24
        $region23: #{pointnet_encoder_forward.1} parent=11 // pred_region
          %379 = vsyncadd [#allocation3], 0
          %s380 = sshll.u32 %s3, 4
          %s381 = int_to_ptr.hbm [resolvable:$true] %s380
          %s382 = sshll.u32 [#allocation2], 4
          %s383 = int_to_ptr.vmem [resolvable:$true] %s382
          %388 = dma.hbm_to_vmem [thread:$0]  %s381, 8192, %s383, [#allocation3], 512, 512, 32
        $region24: #{pointnet_encoder_forward.1} parent=11 // pred_fallthru
          _
        // Predicated region
        $region25: #{pointnet_encoder_forward.1} parent=11 // pred_check
          %p389 = pneg %p134
        $region26: #{pointnet_encoder_forward.1} parent=11 // pred_check_branch
          %391 = sbr.rel (%p389) target = $region28
        $region27: #{pointnet_encoder_forward.1} parent=11 // pred_region
          %393 = vsyncadd [#allocation5], 0
          %s394 = sshll.u32 %s4, 4
          %s395 = int_to_ptr.hbm [resolvable:$true] %s394
          %s396 = sshll.u32 [#allocation4], 4
          %s397 = int_to_ptr.vmem [resolvable:$true] %s396
          %402 = dma.hbm_to_vmem [thread:$0]  %s395, 32768, %s397, [#allocation5], 256, 256, 16
        $region28: #{pointnet_encoder_forward.1} parent=11 // pred_fallthru
          _
        // Predicated region
        $region29: #{pointnet_encoder_forward.1} parent=11 // pred_check
          %p403 = pneg %p155
        $region30: #{pointnet_encoder_forward.1} parent=11 // pred_check_branch
          %405 = sbr.rel (%p403) target = $region32
        $region31: #{pointnet_encoder_forward.1} parent=11 // pred_region
          %407 = vsyncadd [#allocation5], 0
          %s408 = sshll.u32 %s5, 4
          %s409 = int_to_ptr.hbm [resolvable:$true] %s408
          %s410 = sshll.u32 [#allocation6], 4
          %s411 = int_to_ptr.vmem [resolvable:$true] %s410
          %416 = dma.hbm_to_vmem [thread:$0]  %s409, 8192, %s411, [#allocation5], 128, 128, 8
        $region32: #{pointnet_encoder_forward.1} parent=11 // pred_fallthru
          _
        // Predicated region
        $region33: #{pointnet_encoder_forward.1} parent=11 // pred_check
          %p417 = pneg %p176
        $region34: #{pointnet_encoder_forward.1} parent=11 // pred_check_branch
          %419 = sbr.rel (%p417) target = $region36
        $region35: #{pointnet_encoder_forward.1} parent=11 // pred_region
          _
        $region36: #{pointnet_encoder_forward.1} parent=11 // pred_fallthru
          _
        // Predicated region
        $region37: #{pointnet_encoder_forward.1} parent=11 // pred_check
          %p420 = pneg %p197
        $region38: #{pointnet_encoder_forward.1} parent=11 // pred_check_branch
          %422 = sbr.rel (%p420) target = $region40
        $region39: #{pointnet_encoder_forward.1} parent=11 // pred_region
          _
        $region40: #{pointnet_encoder_forward.1} parent=11 // pred_fallthru
          _
        // Predicated region
        $region41: #{pointnet_encoder_forward.1} parent=11 // pred_check
          %p423 = pneg %p218
        $region42: #{pointnet_encoder_forward.1} parent=11 // pred_check_branch
          %425 = sbr.rel (%p423) target = $region44
        $region43: #{pointnet_encoder_forward.1} parent=11 // pred_region
          _
        $region44: #{pointnet_encoder_forward.1} parent=11 // pred_fallthru
          _
        // Predicated region
        $region45: #{pointnet_encoder_forward.1} parent=11 // pred_check
          %p426 = pneg %p239
        $region46: #{pointnet_encoder_forward.1} parent=11 // pred_check_branch
          %428 = sbr.rel (%p426) target = $region48
        $region47: #{pointnet_encoder_forward.1} parent=11 // pred_region
          _
        $region48: #{pointnet_encoder_forward.1} parent=11 // pred_fallthru
          _
        // Predicated region
        $region49: #{pointnet_encoder_forward.1} parent=11 // pred_check
          %p429 = pneg %p260
        $region50: #{pointnet_encoder_forward.1} parent=11 // pred_check_branch
          %431 = sbr.rel (%p429) target = $region52
        $region51: #{pointnet_encoder_forward.1} parent=11 // pred_region
          _
        $region52: #{pointnet_encoder_forward.1} parent=11 // pred_fallthru
          _
        // Predicated region
        $region53: #{pointnet_encoder_forward.1} parent=11 // pred_check
          %p432 = pneg %p281
        $region54: #{pointnet_encoder_forward.1} parent=11 // pred_check_branch
          %434 = sbr.rel (%p432) target = $region56
        $region55: #{pointnet_encoder_forward.1} parent=11 // pred_region
          %436 = vsyncadd [#allocation8], 0
          %s437 = sshll.u32 %s11, 4
          %s438 = int_to_ptr.hbm [resolvable:$true] %s437
          %s439 = sshll.u32 [#allocation7], 4
          %s440 = int_to_ptr.vmem [resolvable:$true] %s439
          %445 = dma.hbm_to_vmem [thread:$0]  %s438, 8192, %s440, [#allocation8], 512, 512, 32
        $region56: #{pointnet_encoder_forward.1} parent=11 // pred_fallthru
          _
        // Predicated region
        $region57: #{pointnet_encoder_forward.1} parent=11 // pred_check
          %p446 = pneg %p302
        $region58: #{pointnet_encoder_forward.1} parent=11 // pred_check_branch
          %448 = sbr.rel (%p446) target = $region60
        $region59: #{pointnet_encoder_forward.1} parent=11 // pred_region
          %450 = vsyncadd [#allocation8], 0
          %s452 = sshll.u32 %s12, 4
          %s453 = int_to_ptr.hbm [resolvable:$true] %s452
          %s454 = sshll.u32 [#allocation9], 4
          %s455 = int_to_ptr.vmem [resolvable:$true] %s454
          %457 = dma.hbm_to_vmem [thread:$0]  %s453, 464, %s455, [#allocation8]
        $region60: #{pointnet_encoder_forward.1} parent=11 // pred_fallthru
          _
      $region12: #{pointnet_encoder_forward.1} parent=5 // pred_fallthru
        _
      %p458 = scmp.lt.s32.totalorder %s24, 2
      // Predicated region
      $region61: #{pointnet_encoder_forward.1} parent=5 // pred_check
        %p459 = pneg %p458
      $region62: #{pointnet_encoder_forward.1} parent=5 // pred_check_branch
        %461 = sbr.rel (%p459) target = $region64
      $region63: #{pointnet_encoder_forward.1} parent=5 // pred_region
        // Predicated region
        $region65: #{pointnet_encoder_forward.1} parent=63 // pred_check
          %p462 = pneg %p44
        $region66: #{pointnet_encoder_forward.1} parent=63 // pred_check_branch
          %464 = sbr.rel (%p462) target = $region68
        $region67: #{pointnet_encoder_forward.1} parent=63 // pred_region
          %p465 = scmp.lt.s32.totalorder %s24, 1
          %s466 = scalar_select %p465, %s24, 1
          %s467 = smul.addr %s466, 16
          %s468 = smul.addr %s467, 8
          %s469 = scalar_lea.vmem %s0, %s468
        $region68: #{pointnet_encoder_forward.1} parent=63 // pred_fallthru
          _
      $region64: #{pointnet_encoder_forward.1} parent=5 // pred_fallthru
        _
      %p470 = scmp.le.s32.totalorder 1, %s24
      %p471 = scmp.lt.s32.totalorder %s24, 3
      %p472 = pnand %p470, %p471
      %p473 = pneg %p472
      // Predicated region
      $region69: #{pointnet_encoder_forward.1} parent=5 // pred_check
        _
      $region70: #{pointnet_encoder_forward.1} parent=5 // pred_check_branch
        %475 = sbr.rel (%p472) target = $region72
      $region71: #{pointnet_encoder_forward.1} parent=5 // pred_region
        %s476 = ssub.s32 %s24, 1
        // Predicated region
        $region73: #{pointnet_encoder_forward.1} parent=71 // pred_check
          %p477 = pneg %p113
        $region74: #{pointnet_encoder_forward.1} parent=71 // pred_check_branch
          %479 = sbr.rel (%p477) target = $region76
        $region75: #{pointnet_encoder_forward.1} parent=71 // pred_region
          %481 = dma.done [#allocation3], 8192
        $region76: #{pointnet_encoder_forward.1} parent=71 // pred_fallthru
          _
        // Predicated region
        $region77: #{pointnet_encoder_forward.1} parent=71 // pred_check
          %p482 = pneg %p134
        $region78: #{pointnet_encoder_forward.1} parent=71 // pred_check_branch
          %484 = sbr.rel (%p482) target = $region80
        $region79: #{pointnet_encoder_forward.1} parent=71 // pred_region
          %486 = dma.done [#allocation5], 32768
        $region80: #{pointnet_encoder_forward.1} parent=71 // pred_fallthru
          _
        // Predicated region
        $region81: #{pointnet_encoder_forward.1} parent=71 // pred_check
          %p487 = pneg %p155
        $region82: #{pointnet_encoder_forward.1} parent=71 // pred_check_branch
          %489 = sbr.rel (%p487) target = $region84
        $region83: #{pointnet_encoder_forward.1} parent=71 // pred_region
          %491 = dma.done [#allocation5], 8192
        $region84: #{pointnet_encoder_forward.1} parent=71 // pred_fallthru
          _
        // Predicated region
        $region85: #{pointnet_encoder_forward.1} parent=71 // pred_check
          %p492 = pneg %p281
        $region86: #{pointnet_encoder_forward.1} parent=71 // pred_check_branch
          %494 = sbr.rel (%p492) target = $region88
        $region87: #{pointnet_encoder_forward.1} parent=71 // pred_region
          %496 = dma.done [#allocation8], 8192
        $region88: #{pointnet_encoder_forward.1} parent=71 // pred_fallthru
          _
        // Predicated region
        $region89: #{pointnet_encoder_forward.1} parent=71 // pred_check
          %p497 = pneg %p302
        $region90: #{pointnet_encoder_forward.1} parent=71 // pred_check_branch
          %499 = sbr.rel (%p497) target = $region92
        $region91: #{pointnet_encoder_forward.1} parent=71 // pred_region
          %501 = dma.done [#allocation8], 464
        $region92: #{pointnet_encoder_forward.1} parent=71 // pred_fallthru
          _
        %p502 = scmp.lt.s32.totalorder %s29, 1
        %s503 = scalar_select %p502, %s29, 1
        %s504 = smul.addr %s503, 16
        %s505 = smul.addr %s504, 8
        %s506 = scalar_lea.vmem %s0, %s505
        %p507 = pneg %p50
        %p508 = pneg %p47
        %p509 = pneg %p71
        %p510 = pneg %p68
        %p511 = pneg %p92
        %p512 = pneg %p89
        %p513 = pneg %p113
        %p514 = pneg %p110
        %p515 = pneg %p134
        %p516 = pneg %p131
        %p517 = pneg %p155
        %p518 = pneg %p152
        %p519 = pneg %p176
        %p520 = pneg %p173
        %p521 = pneg %p197
        %p522 = pneg %p194
        %p523 = pneg %p218
        %p524 = pneg %p215
        %p525 = pneg %p239
        %p526 = pneg %p236
        %p527 = pneg %p260
        %p528 = pneg %p257
        %p529 = pneg %p281
        %p530 = pneg %p278
        %p531 = pneg %p302
        %p532 = pneg %p299
        %p533 = pneg %p328
        %p534 = pneg %p325
        %p535 = scmp.lt.s32.totalorder %s29, 1
        %s536 = scalar_select %p535, %s29, 1
        %s537 = scalar_lea.vmem %s13, %s536
        %p538 = pneg %p354
        %p539 = pneg %p351
        %p540 = scmp.lt.s32.totalorder %s29, 1
        %s541 = scalar_select %p540, %s29, 1
        %s542 = smul.addr %s541, 8
        %s543 = scalar_lea.vmem %s14, %s542
        %p544 = scmp.lt.s32.totalorder %s29, 1
        %s545 = scalar_select %p544, %s29, 1
        %s546 = smul.addr %s545, 16
        %s547 = smul.addr %s546, 8
        %s548 = scalar_lea.vmem %s0, %s547
        %p549 = scmp.lt.s32.totalorder %s29, 1
        %s550 = scalar_select %p549, %s29, 1
        %s551 = scalar_lea.vmem %s13, %s550
        %p552 = scmp.lt.s32.totalorder %s29, 1
        %s553 = scalar_select %p552, %s29, 1
        %s554 = smul.addr %s553, 8
        %s555 = scalar_lea.vmem %s14, %s554
        %v557 = vld [vmem:[%s1] sm:$0x7]
        %v558 = vld [vmem:[%s7] sm:$0x7]
        %v559 = vld [vmem:[%s548] sm:$0xff]
        %v560 = vld [vmem:[%s548 + $0x8] sm:$0xff]
        %v561 = vld [vmem:[%s548 + $0x10] sm:$0xff]
        %v562 = vld [vmem:[%s548 + $0x18] sm:$0xff]
        %v563 = vld [vmem:[%s548 + $0x20] sm:$0xff]
        %v564 = vld [vmem:[%s548 + $0x28] sm:$0xff]
        %v565 = vld [vmem:[%s548 + $0x30] sm:$0xff]
        %v566 = vld [vmem:[%s548 + $0x38] sm:$0xff]
        %v567 = vld [vmem:[%s548 + $0x40] sm:$0xff]
        %v568 = vld [vmem:[%s548 + $0x48] sm:$0xff]
        %v569 = vld [vmem:[%s548 + $0x50] sm:$0xff]
        %v570 = vld [vmem:[%s548 + $0x58] sm:$0xff]
        %v571 = vld [vmem:[%s548 + $0x60] sm:$0xff]
        %v572 = vld [vmem:[%s548 + $0x68] sm:$0xff]
        %v573 = vld [vmem:[%s548 + $0x70] sm:$0xff]
        %v574 = vld [vmem:[%s548 + $0x78] sm:$0xff]
        %576 = vset.pattern.permute.xlu0 0
        %577 = vperm.xlu0 %576, %v559
        %v578 = vpop.permute.xlu0 %577
        %581 = vset.pattern.permute.xlu0 0
        %582 = vperm.xlu0 %581, %v560
        %v583 = vpop.permute.xlu0 %582
        %586 = vset.pattern.permute.xlu0 0
        %587 = vperm.xlu0 %586, %v561
        %v588 = vpop.permute.xlu0 %587
        %591 = vset.pattern.permute.xlu0 0
        %592 = vperm.xlu0 %591, %v562
        %v593 = vpop.permute.xlu0 %592
        %596 = vset.pattern.permute.xlu0 0
        %597 = vperm.xlu0 %596, %v563
        %v598 = vpop.permute.xlu0 %597
        %601 = vset.pattern.permute.xlu0 0
        %602 = vperm.xlu0 %601, %v564
        %v603 = vpop.permute.xlu0 %602
        %606 = vset.pattern.permute.xlu0 0
        %607 = vperm.xlu0 %606, %v565
        %v608 = vpop.permute.xlu0 %607
        %611 = vset.pattern.permute.xlu0 0
        %612 = vperm.xlu0 %611, %v566
        %v613 = vpop.permute.xlu0 %612
        %616 = vset.pattern.permute.xlu0 0
        %617 = vperm.xlu0 %616, %v567
        %v618 = vpop.permute.xlu0 %617
        %621 = vset.pattern.permute.xlu0 0
        %622 = vperm.xlu0 %621, %v568
        %v623 = vpop.permute.xlu0 %622
        %626 = vset.pattern.permute.xlu0 0
        %627 = vperm.xlu0 %626, %v569
        %v628 = vpop.permute.xlu0 %627
        %631 = vset.pattern.permute.xlu0 0
        %632 = vperm.xlu0 %631, %v570
        %v633 = vpop.permute.xlu0 %632
        %636 = vset.pattern.permute.xlu0 0
        %637 = vperm.xlu0 %636, %v571
        %v638 = vpop.permute.xlu0 %637
        %641 = vset.pattern.permute.xlu0 0
        %642 = vperm.xlu0 %641, %v572
        %v643 = vpop.permute.xlu0 %642
        %646 = vset.pattern.permute.xlu0 0
        %647 = vperm.xlu0 %646, %v573
        %v648 = vpop.permute.xlu0 %647
        %651 = vset.pattern.permute.xlu0 0
        %652 = vperm.xlu0 %651, %v574
        %v653 = vpop.permute.xlu0 %652
        %v655 = vperm.slane %v557, 0
        %v656 = vmul.f32 %v578, %v655
        %v657 = vmul.f32 %v583, %v655
        %v658 = vmul.f32 %v588, %v655
        %v659 = vmul.f32 %v593, %v655
        %v660 = vmul.f32 %v598, %v655
        %v661 = vmul.f32 %v603, %v655
        %v662 = vmul.f32 %v608, %v655
        %v663 = vmul.f32 %v613, %v655
        %v664 = vmul.f32 %v618, %v655
        %v665 = vmul.f32 %v623, %v655
        %v666 = vmul.f32 %v628, %v655
        %v667 = vmul.f32 %v633, %v655
        %v668 = vmul.f32 %v638, %v655
        %v669 = vmul.f32 %v643, %v655
        %v670 = vmul.f32 %v648, %v655
        %v671 = vmul.f32 %v653, %v655
        %672 = vset.pattern.permute.xlu0 1
        %673 = vperm.xlu0 %672, %v559
        %v674 = vpop.permute.xlu0 %673
        %676 = vset.pattern.permute.xlu0 1
        %677 = vperm.xlu0 %676, %v560
        %v678 = vpop.permute.xlu0 %677
        %680 = vset.pattern.permute.xlu0 1
        %681 = vperm.xlu0 %680, %v561
        %v682 = vpop.permute.xlu0 %681
        %684 = vset.pattern.permute.xlu0 1
        %685 = vperm.xlu0 %684, %v562
        %v686 = vpop.permute.xlu0 %685
        %688 = vset.pattern.permute.xlu0 1
        %689 = vperm.xlu0 %688, %v563
        %v690 = vpop.permute.xlu0 %689
        %692 = vset.pattern.permute.xlu0 1
        %693 = vperm.xlu0 %692, %v564
        %v694 = vpop.permute.xlu0 %693
        %696 = vset.pattern.permute.xlu0 1
        %697 = vperm.xlu0 %696, %v565
        %v698 = vpop.permute.xlu0 %697
        %700 = vset.pattern.permute.xlu0 1
        %701 = vperm.xlu0 %700, %v566
        %v702 = vpop.permute.xlu0 %701
        %704 = vset.pattern.permute.xlu0 1
        %705 = vperm.xlu0 %704, %v567
        %v706 = vpop.permute.xlu0 %705
        %708 = vset.pattern.permute.xlu0 1
        %709 = vperm.xlu0 %708, %v568
        %v710 = vpop.permute.xlu0 %709
        %712 = vset.pattern.permute.xlu0 1
        %713 = vperm.xlu0 %712, %v569
        %v714 = vpop.permute.xlu0 %713
        %716 = vset.pattern.permute.xlu0 1
        %717 = vperm.xlu0 %716, %v570
        %v718 = vpop.permute.xlu0 %717
        %720 = vset.pattern.permute.xlu0 1
        %721 = vperm.xlu0 %720, %v571
        %v722 = vpop.permute.xlu0 %721
        %724 = vset.pattern.permute.xlu0 1
        %725 = vperm.xlu0 %724, %v572
        %v726 = vpop.permute.xlu0 %725
        %728 = vset.pattern.permute.xlu0 1
        %729 = vperm.xlu0 %728, %v573
        %v730 = vpop.permute.xlu0 %729
        %732 = vset.pattern.permute.xlu0 1
        %733 = vperm.xlu0 %732, %v574
        %v734 = vpop.permute.xlu0 %733
        %v736 = vperm.slane %v557, 1
        %v737 = vmul.f32 %v674, %v736
        %v738 = vmul.f32 %v678, %v736
        %v739 = vmul.f32 %v682, %v736
        %v740 = vmul.f32 %v686, %v736
        %v741 = vmul.f32 %v690, %v736
        %v742 = vmul.f32 %v694, %v736
        %v743 = vmul.f32 %v698, %v736
        %v744 = vmul.f32 %v702, %v736
        %v745 = vmul.f32 %v706, %v736
        %v746 = vmul.f32 %v710, %v736
        %v747 = vmul.f32 %v714, %v736
        %v748 = vmul.f32 %v718, %v736
        %v749 = vmul.f32 %v722, %v736
        %v750 = vmul.f32 %v726, %v736
        %v751 = vmul.f32 %v730, %v736
        %v752 = vmul.f32 %v734, %v736
        %v753 = vadd.f32 %v656, %v737
        %v754 = vadd.f32 %v657, %v738
        %v755 = vadd.f32 %v658, %v739
        %v756 = vadd.f32 %v659, %v740
        %v757 = vadd.f32 %v660, %v741
        %v758 = vadd.f32 %v661, %v742
        %v759 = vadd.f32 %v662, %v743
        %v760 = vadd.f32 %v663, %v744
        %v761 = vadd.f32 %v664, %v745
        %v762 = vadd.f32 %v665, %v746
        %v763 = vadd.f32 %v666, %v747
        %v764 = vadd.f32 %v667, %v748
        %v765 = vadd.f32 %v668, %v749
        %v766 = vadd.f32 %v669, %v750
        %v767 = vadd.f32 %v670, %v751
        %v768 = vadd.f32 %v671, %v752
        %769 = vset.pattern.permute.xlu0 2
        %770 = vperm.xlu0 %769, %v559
        %v771 = vpop.permute.xlu0 %770
        %773 = vset.pattern.permute.xlu0 2
        %774 = vperm.xlu0 %773, %v560
        %v775 = vpop.permute.xlu0 %774
        %777 = vset.pattern.permute.xlu0 2
        %778 = vperm.xlu0 %777, %v561
        %v779 = vpop.permute.xlu0 %778
        %781 = vset.pattern.permute.xlu0 2
        %782 = vperm.xlu0 %781, %v562
        %v783 = vpop.permute.xlu0 %782
        %785 = vset.pattern.permute.xlu0 2
        %786 = vperm.xlu0 %785, %v563
        %v787 = vpop.permute.xlu0 %786
        %789 = vset.pattern.permute.xlu0 2
        %790 = vperm.xlu0 %789, %v564
        %v791 = vpop.permute.xlu0 %790
        %793 = vset.pattern.permute.xlu0 2
        %794 = vperm.xlu0 %793, %v565
        %v795 = vpop.permute.xlu0 %794
        %797 = vset.pattern.permute.xlu0 2
        %798 = vperm.xlu0 %797, %v566
        %v799 = vpop.permute.xlu0 %798
        %801 = vset.pattern.permute.xlu0 2
        %802 = vperm.xlu0 %801, %v567
        %v803 = vpop.permute.xlu0 %802
        %805 = vset.pattern.permute.xlu0 2
        %806 = vperm.xlu0 %805, %v568
        %v807 = vpop.permute.xlu0 %806
        %809 = vset.pattern.permute.xlu0 2
        %810 = vperm.xlu0 %809, %v569
        %v811 = vpop.permute.xlu0 %810
        %813 = vset.pattern.permute.xlu0 2
        %814 = vperm.xlu0 %813, %v570
        %v815 = vpop.permute.xlu0 %814
        %817 = vset.pattern.permute.xlu0 2
        %818 = vperm.xlu0 %817, %v571
        %v819 = vpop.permute.xlu0 %818
        %821 = vset.pattern.permute.xlu0 2
        %822 = vperm.xlu0 %821, %v572
        %v823 = vpop.permute.xlu0 %822
        %825 = vset.pattern.permute.xlu0 2
        %826 = vperm.xlu0 %825, %v573
        %v827 = vpop.permute.xlu0 %826
        %829 = vset.pattern.permute.xlu0 2
        %830 = vperm.xlu0 %829, %v574
        %v831 = vpop.permute.xlu0 %830
        %v833 = vperm.slane %v557, 2
        %v834 = vmul.f32 %v771, %v833
        %v835 = vmul.f32 %v775, %v833
        %v836 = vmul.f32 %v779, %v833
        %v837 = vmul.f32 %v783, %v833
        %v838 = vmul.f32 %v787, %v833
        %v839 = vmul.f32 %v791, %v833
        %v840 = vmul.f32 %v795, %v833
        %v841 = vmul.f32 %v799, %v833
        %v842 = vmul.f32 %v803, %v833
        %v843 = vmul.f32 %v807, %v833
        %v844 = vmul.f32 %v811, %v833
        %v845 = vmul.f32 %v815, %v833
        %v846 = vmul.f32 %v819, %v833
        %v847 = vmul.f32 %v823, %v833
        %v848 = vmul.f32 %v827, %v833
        %v849 = vmul.f32 %v831, %v833
        %v850 = vadd.f32 %v753, %v834
        %v851 = vadd.f32 %v754, %v835
        %v852 = vadd.f32 %v755, %v836
        %v853 = vadd.f32 %v756, %v837
        %v854 = vadd.f32 %v757, %v838
        %v855 = vadd.f32 %v758, %v839
        %v856 = vadd.f32 %v759, %v840
        %v857 = vadd.f32 %v760, %v841
        %v858 = vadd.f32 %v761, %v842
        %v859 = vadd.f32 %v762, %v843
        %v860 = vadd.f32 %v763, %v844
        %v861 = vadd.f32 %v764, %v845
        %v862 = vadd.f32 %v765, %v846
        %v863 = vadd.f32 %v766, %v847
        %v864 = vadd.f32 %v767, %v848
        %v865 = vadd.f32 %v768, %v849
        %v866 = vld [vmem:[#allocation9] sm:$0x1]
        %v868 = vperm.slane %v866, 0
        %v870 = vadd.f32 %v850, %v868
        %v871 = vadd.f32 %v851, %v868
        %v872 = vadd.f32 %v852, %v868
        %v873 = vadd.f32 %v853, %v868
        %v874 = vadd.f32 %v854, %v868
        %v875 = vadd.f32 %v855, %v868
        %v876 = vadd.f32 %v856, %v868
        %v877 = vadd.f32 %v857, %v868
        %v878 = vadd.f32 %v858, %v868
        %v879 = vadd.f32 %v859, %v868
        %v880 = vadd.f32 %v860, %v868
        %v881 = vadd.f32 %v861, %v868
        %v882 = vadd.f32 %v862, %v868
        %v883 = vadd.f32 %v863, %v868
        %v884 = vadd.f32 %v864, %v868
        %v885 = vadd.f32 %v865, %v868
        %v886 = vmax.f32 %v870, 0.0
        %v887 = vmax.f32 %v871, 0.0
        %v888 = vmax.f32 %v872, 0.0
        %v889 = vmax.f32 %v873, 0.0
        %v890 = vmax.f32 %v874, 0.0
        %v891 = vmax.f32 %v875, 0.0
        %v892 = vmax.f32 %v876, 0.0
        %v893 = vmax.f32 %v877, 0.0
        %v894 = vmax.f32 %v878, 0.0
        %v895 = vmax.f32 %v879, 0.0
        %v896 = vmax.f32 %v880, 0.0
        %v897 = vmax.f32 %v881, 0.0
        %v898 = vmax.f32 %v882, 0.0
        %v899 = vmax.f32 %v883, 0.0
        %v900 = vmax.f32 %v884, 0.0
        %v901 = vmax.f32 %v885, 0.0
        %v902 = vpack.c.bf16 %v887, %v886
        %v903 = vpack.c.bf16 %v889, %v888
        %v904 = vpack.c.bf16 %v891, %v890
        %v905 = vpack.c.bf16 %v893, %v892
        %v906 = vpack.c.bf16 %v895, %v894
        %v907 = vpack.c.bf16 %v897, %v896
        %v908 = vpack.c.bf16 %v899, %v898
        %v909 = vpack.c.bf16 %v901, %v900
        %v910 = vld [vmem:[%s2] sm:$0xf]
        %v911 = vld [vmem:[%s2 + $0x4] sm:$0xf]
        %v912 = vld [vmem:[%s2 + $0x8] sm:$0xf]
        %v913 = vld [vmem:[%s2 + $0xc] sm:$0xf]
        %v914 = vld [vmem:[%s2 + $0x10] sm:$0xf]
        %v915 = vld [vmem:[%s2 + $0x14] sm:$0xf]
        %v916 = vld [vmem:[%s2 + $0x18] sm:$0xf]
        %v917 = vld [vmem:[%s2 + $0x1c] sm:$0xf]
        %v918 = vld [vmem:[#allocation9 + $0x1] sm:$0x1]
        %v920 = vperm.slane %v918, 0
        %v930 = vunpack.c.l.b16 %v910
        %v931 = vunpack.c.l.b16 %v911
        %v932 = vunpack.c.l.b16 %v912
        %v933 = vunpack.c.l.b16 %v913
        %v934 = vunpack.c.l.b16 %v914
        %v935 = vunpack.c.l.b16 %v915
        %v936 = vunpack.c.l.b16 %v916
        %v937 = vunpack.c.l.b16 %v917
        %v938 = vpack.c.b16 %v931, %v930
        %v939 = vpack.c.b16 %v933, %v932
        %v940 = vpack.c.b16 %v935, %v934
        %v941 = vpack.c.b16 %v937, %v936
        %vm946 = vcmask 523264
        %v948 = vsel %vm946, %v902, 0
        %v951 = vsel %vm946, %v903, 0
        %v954 = vsel %vm946, %v904, 0
        %v957 = vsel %vm946, %v905, 0
        %v960 = vsel %vm946, %v906, 0
        %v963 = vsel %vm946, %v907, 0
        %v966 = vsel %vm946, %v908, 0
        %v969 = vsel %vm946, %v909, 0
        %971 = vmatpush.bf16.msra.mxu0 0
        %972 = vmatpush.bf16.msra.mxu0 0
        %973 = vmatpush.bf16.msra.mxu0 0
        %974 = vmatpush.bf16.msra.mxu0 0
        %975 = vmatpush.bf16.msra.mxu0 %v941
        %976 = vmatpush.bf16.msra.mxu0 %v940
        %977 = vmatpush.bf16.msra.mxu0 %v939
        %978 = vmatpush.bf16.msra.mxu0 %v938
        %979 = vmatmul.bf16.gmra.mxu0 %v948
        %v980 = vpop.f32.mrf.mxu0
        %v981 = vadd.f32 %v920, %v980
        %v982 = vpop.f32.mrf.mxu0
        %v983 = vadd.f32 %v920, %v982
        %984 = vmatmul.bf16.gmra.mxu0 %v951
        %v985 = vpop.f32.mrf.mxu0
        %v986 = vadd.f32 %v920, %v985
        %v987 = vpop.f32.mrf.mxu0
        %v988 = vadd.f32 %v920, %v987
        %989 = vmatmul.bf16.gmra.mxu0 %v954
        %v990 = vpop.f32.mrf.mxu0
        %v991 = vadd.f32 %v920, %v990
        %v992 = vpop.f32.mrf.mxu0
        %v993 = vadd.f32 %v920, %v992
        %994 = vmatmul.bf16.gmra.mxu0 %v957
        %v995 = vpop.f32.mrf.mxu0
        %v996 = vadd.f32 %v920, %v995
        %v997 = vpop.f32.mrf.mxu0
        %v998 = vadd.f32 %v920, %v997
        %999 = vmatmul.bf16.gmra.mxu0 %v960
        %v1000 = vpop.f32.mrf.mxu0
        %v1001 = vadd.f32 %v920, %v1000
        %v1002 = vpop.f32.mrf.mxu0
        %v1003 = vadd.f32 %v920, %v1002
        %1004 = vmatmul.bf16.gmra.mxu0 %v963
        %v1005 = vpop.f32.mrf.mxu0
        %v1006 = vadd.f32 %v920, %v1005
        %v1007 = vpop.f32.mrf.mxu0
        %v1008 = vadd.f32 %v920, %v1007
        %1009 = vmatmul.bf16.gmra.mxu0 %v966
        %v1010 = vpop.f32.mrf.mxu0
        %v1011 = vadd.f32 %v920, %v1010
        %v1012 = vpop.f32.mrf.mxu0
        %v1013 = vadd.f32 %v920, %v1012
        %1014 = vmatmul.bf16.gmra.mxu0 %v969
        %v1015 = vpop.f32.mrf.mxu0
        %v1016 = vadd.f32 %v920, %v1015
        %v1017 = vpop.f32.mrf.mxu0
        %v1018 = vadd.f32 %v920, %v1017
        %1019 = vdwg.mxu0
        %v1020 = vmax.f32 %v981, 0.0
        %v1021 = vmax.f32 %v983, 0.0
        %v1022 = vmax.f32 %v986, 0.0
        %v1023 = vmax.f32 %v988, 0.0
        %v1024 = vmax.f32 %v991, 0.0
        %v1025 = vmax.f32 %v993, 0.0
        %v1026 = vmax.f32 %v996, 0.0
        %v1027 = vmax.f32 %v998, 0.0
        %v1028 = vmax.f32 %v1001, 0.0
        %v1029 = vmax.f32 %v1003, 0.0
        %v1030 = vmax.f32 %v1006, 0.0
        %v1031 = vmax.f32 %v1008, 0.0
        %v1032 = vmax.f32 %v1011, 0.0
        %v1033 = vmax.f32 %v1013, 0.0
        %v1034 = vmax.f32 %v1016, 0.0
        %v1035 = vmax.f32 %v1018, 0.0
        %v1036 = vpack.c.bf16 %v1021, %v1020
        %v1037 = vpack.c.bf16 %v1023, %v1022
        %v1038 = vpack.c.bf16 %v1025, %v1024
        %v1039 = vpack.c.bf16 %v1027, %v1026
        %v1040 = vpack.c.bf16 %v1029, %v1028
        %v1041 = vpack.c.bf16 %v1031, %v1030
        %v1042 = vpack.c.bf16 %v1033, %v1032
        %v1043 = vpack.c.bf16 %v1035, %v1034
        %v1044 = vld [vmem:[#allocation2] sm:$0xff]
        %v1045 = vld [vmem:[#allocation2 + $0x8] sm:$0xff]
        %v1046 = vld [vmem:[#allocation2 + $0x10] sm:$0xff]
        %v1047 = vld [vmem:[#allocation2 + $0x18] sm:$0xff]
        %v1048 = vld [vmem:[#allocation2 + $0x20] sm:$0xff]
        %v1049 = vld [vmem:[#allocation2 + $0x28] sm:$0xff]
        %v1050 = vld [vmem:[#allocation2 + $0x30] sm:$0xff]
        %v1051 = vld [vmem:[#allocation2 + $0x38] sm:$0xff]
        %v1052 = vld [vmem:[#allocation2 + $0x40] sm:$0xff]
        %v1053 = vld [vmem:[#allocation2 + $0x48] sm:$0xff]
        %v1054 = vld [vmem:[#allocation2 + $0x50] sm:$0xff]
        %v1055 = vld [vmem:[#allocation2 + $0x58] sm:$0xff]
        %v1056 = vld [vmem:[#allocation2 + $0x60] sm:$0xff]
        %v1057 = vld [vmem:[#allocation2 + $0x68] sm:$0xff]
        %v1058 = vld [vmem:[#allocation2 + $0x70] sm:$0xff]
        %v1059 = vld [vmem:[#allocation2 + $0x78] sm:$0xff]
        %v1060 = vld [vmem:[#allocation2 + $0x80] sm:$0xff]
        %v1061 = vld [vmem:[#allocation2 + $0x88] sm:$0xff]
        %v1062 = vld [vmem:[#allocation2 + $0x90] sm:$0xff]
        %v1063 = vld [vmem:[#allocation2 + $0x98] sm:$0xff]
        %v1064 = vld [vmem:[#allocation2 + $0xa0] sm:$0xff]
        %v1065 = vld [vmem:[#allocation2 + $0xa8] sm:$0xff]
        %v1066 = vld [vmem:[#allocation2 + $0xb0] sm:$0xff]
        %v1067 = vld [vmem:[#allocation2 + $0xb8] sm:$0xff]
        %v1068 = vld [vmem:[#allocation2 + $0xc0] sm:$0xff]
        %v1069 = vld [vmem:[#allocation2 + $0xc8] sm:$0xff]
        %v1070 = vld [vmem:[#allocation2 + $0xd0] sm:$0xff]
        %v1071 = vld [vmem:[#allocation2 + $0xd8] sm:$0xff]
        %v1072 = vld [vmem:[#allocation2 + $0xe0] sm:$0xff]
        %v1073 = vld [vmem:[#allocation2 + $0xe8] sm:$0xff]
        %v1074 = vld [vmem:[#allocation2 + $0xf0] sm:$0xff]
        %v1075 = vld [vmem:[#allocation2 + $0xf8] sm:$0xff]
        %v1076 = vld [vmem:[#allocation2 + $0x100] sm:$0xff]
        %v1077 = vld [vmem:[#allocation2 + $0x108] sm:$0xff]
        %v1078 = vld [vmem:[#allocation2 + $0x110] sm:$0xff]
        %v1079 = vld [vmem:[#allocation2 + $0x118] sm:$0xff]
        %v1080 = vld [vmem:[#allocation2 + $0x120] sm:$0xff]
        %v1081 = vld [vmem:[#allocation2 + $0x128] sm:$0xff]
        %v1082 = vld [vmem:[#allocation2 + $0x130] sm:$0xff]
        %v1083 = vld [vmem:[#allocation2 + $0x138] sm:$0xff]
        %v1084 = vld [vmem:[#allocation2 + $0x140] sm:$0xff]
        %v1085 = vld [vmem:[#allocation2 + $0x148] sm:$0xff]
        %v1086 = vld [vmem:[#allocation2 + $0x150] sm:$0xff]
        %v1087 = vld [vmem:[#allocation2 + $0x158] sm:$0xff]
        %v1088 = vld [vmem:[#allocation2 + $0x160] sm:$0xff]
        %v1089 = vld [vmem:[#allocation2 + $0x168] sm:$0xff]
        %v1090 = vld [vmem:[#allocation2 + $0x170] sm:$0xff]
        %v1091 = vld [vmem:[#allocation2 + $0x178] sm:$0xff]
        %v1092 = vld [vmem:[#allocation2 + $0x180] sm:$0xff]
        %v1093 = vld [vmem:[#allocation2 + $0x188] sm:$0xff]
        %v1094 = vld [vmem:[#allocation2 + $0x190] sm:$0xff]
        %v1095 = vld [vmem:[#allocation2 + $0x198] sm:$0xff]
        %v1096 = vld [vmem:[#allocation2 + $0x1a0] sm:$0xff]
        %v1097 = vld [vmem:[#allocation2 + $0x1a8] sm:$0xff]
        %v1098 = vld [vmem:[#allocation2 + $0x1b0] sm:$0xff]
        %v1099 = vld [vmem:[#allocation2 + $0x1b8] sm:$0xff]
        %v1100 = vld [vmem:[#allocation2 + $0x1c0] sm:$0xff]
        %v1101 = vld [vmem:[#allocation2 + $0x1c8] sm:$0xff]
        %v1102 = vld [vmem:[#allocation2 + $0x1d0] sm:$0xff]
        %v1103 = vld [vmem:[#allocation2 + $0x1d8] sm:$0xff]
        %v1104 = vld [vmem:[#allocation2 + $0x1e0] sm:$0xff]
        %v1105 = vld [vmem:[#allocation2 + $0x1e8] sm:$0xff]
        %v1106 = vld [vmem:[#allocation2 + $0x1f0] sm:$0xff]
        %v1107 = vld [vmem:[#allocation2 + $0x1f8] sm:$0xff]
        %v1108 = vld [vmem:[#allocation9 + $0x2] sm:$0xff]
        %v1110 = vperm.slane %v1108, 0
        %v1111 = vperm.slane %v1108, 1
        %v1112 = vperm.slane %v1108, 2
        %v1113 = vperm.slane %v1108, 3
        %v1114 = vperm.slane %v1108, 4
        %v1115 = vperm.slane %v1108, 5
        %v1116 = vperm.slane %v1108, 6
        %v1117 = vperm.slane %v1108, 7
        %v1190 = vunpack.c.l.b16 %v1044
        %v1191 = vunpack.c.h.b16 %v1044
        %v1192 = vunpack.c.l.b16 %v1045
        %v1193 = vunpack.c.h.b16 %v1045
        %v1194 = vunpack.c.l.b16 %v1046
        %v1195 = vunpack.c.h.b16 %v1046
        %v1196 = vunpack.c.l.b16 %v1047
        %v1197 = vunpack.c.h.b16 %v1047
        %v1198 = vunpack.c.l.b16 %v1048
        %v1199 = vunpack.c.h.b16 %v1048
        %v1200 = vunpack.c.l.b16 %v1049
        %v1201 = vunpack.c.h.b16 %v1049
        %v1202 = vunpack.c.l.b16 %v1050
        %v1203 = vunpack.c.h.b16 %v1050
        %v1204 = vunpack.c.l.b16 %v1051
        %v1205 = vunpack.c.h.b16 %v1051
        %v1206 = vunpack.c.l.b16 %v1052
        %v1207 = vunpack.c.h.b16 %v1052
        %v1208 = vunpack.c.l.b16 %v1053
        %v1209 = vunpack.c.h.b16 %v1053
        %v1210 = vunpack.c.l.b16 %v1054
        %v1211 = vunpack.c.h.b16 %v1054
        %v1212 = vunpack.c.l.b16 %v1055
        %v1213 = vunpack.c.h.b16 %v1055
        %v1214 = vunpack.c.l.b16 %v1056
        %v1215 = vunpack.c.h.b16 %v1056
        %v1216 = vunpack.c.l.b16 %v1057
        %v1217 = vunpack.c.h.b16 %v1057
        %v1218 = vunpack.c.l.b16 %v1058
        %v1219 = vunpack.c.h.b16 %v1058
        %v1220 = vunpack.c.l.b16 %v1059
        %v1221 = vunpack.c.h.b16 %v1059
        %v1222 = vunpack.c.l.b16 %v1060
        %v1223 = vunpack.c.h.b16 %v1060
        %v1224 = vunpack.c.l.b16 %v1061
        %v1225 = vunpack.c.h.b16 %v1061
        %v1226 = vunpack.c.l.b16 %v1062
        %v1227 = vunpack.c.h.b16 %v1062
        %v1228 = vunpack.c.l.b16 %v1063
        %v1229 = vunpack.c.h.b16 %v1063
        %v1230 = vunpack.c.l.b16 %v1064
        %v1231 = vunpack.c.h.b16 %v1064
        %v1232 = vunpack.c.l.b16 %v1065
        %v1233 = vunpack.c.h.b16 %v1065
        %v1234 = vunpack.c.l.b16 %v1066
        %v1235 = vunpack.c.h.b16 %v1066
        %v1236 = vunpack.c.l.b16 %v1067
        %v1237 = vunpack.c.h.b16 %v1067
        %v1238 = vunpack.c.l.b16 %v1068
        %v1239 = vunpack.c.h.b16 %v1068
        %v1240 = vunpack.c.l.b16 %v1069
        %v1241 = vunpack.c.h.b16 %v1069
        %v1242 = vunpack.c.l.b16 %v1070
        %v1243 = vunpack.c.h.b16 %v1070
        %v1244 = vunpack.c.l.b16 %v1071
        %v1245 = vunpack.c.h.b16 %v1071
        %v1246 = vunpack.c.l.b16 %v1072
        %v1247 = vunpack.c.h.b16 %v1072
        %v1248 = vunpack.c.l.b16 %v1073
        %v1249 = vunpack.c.h.b16 %v1073
        %v1250 = vunpack.c.l.b16 %v1074
        %v1251 = vunpack.c.h.b16 %v1074
        %v1252 = vunpack.c.l.b16 %v1075
        %v1253 = vunpack.c.h.b16 %v1075
        %v1254 = vunpack.c.l.b16 %v1076
        %v1255 = vunpack.c.h.b16 %v1076
        %v1256 = vunpack.c.l.b16 %v1077
        %v1257 = vunpack.c.h.b16 %v1077
        %v1258 = vunpack.c.l.b16 %v1078
        %v1259 = vunpack.c.h.b16 %v1078
        %v1260 = vunpack.c.l.b16 %v1079
        %v1261 = vunpack.c.h.b16 %v1079
        %v1262 = vunpack.c.l.b16 %v1080
        %v1263 = vunpack.c.h.b16 %v1080
        %v1264 = vunpack.c.l.b16 %v1081
        %v1265 = vunpack.c.h.b16 %v1081
        %v1266 = vunpack.c.l.b16 %v1082
        %v1267 = vunpack.c.h.b16 %v1082
        %v1268 = vunpack.c.l.b16 %v1083
        %v1269 = vunpack.c.h.b16 %v1083
        %v1270 = vunpack.c.l.b16 %v1084
        %v1271 = vunpack.c.h.b16 %v1084
        %v1272 = vunpack.c.l.b16 %v1085
        %v1273 = vunpack.c.h.b16 %v1085
        %v1274 = vunpack.c.l.b16 %v1086
        %v1275 = vunpack.c.h.b16 %v1086
        %v1276 = vunpack.c.l.b16 %v1087
        %v1277 = vunpack.c.h.b16 %v1087
        %v1278 = vunpack.c.l.b16 %v1088
        %v1279 = vunpack.c.h.b16 %v1088
        %v1280 = vunpack.c.l.b16 %v1089
        %v1281 = vunpack.c.h.b16 %v1089
        %v1282 = vunpack.c.l.b16 %v1090
        %v1283 = vunpack.c.h.b16 %v1090
        %v1284 = vunpack.c.l.b16 %v1091
        %v1285 = vunpack.c.h.b16 %v1091
        %v1286 = vunpack.c.l.b16 %v1092
        %v1287 = vunpack.c.h.b16 %v1092
        %v1288 = vunpack.c.l.b16 %v1093
        %v1289 = vunpack.c.h.b16 %v1093
        %v1290 = vunpack.c.l.b16 %v1094
        %v1291 = vunpack.c.h.b16 %v1094
        %v1292 = vunpack.c.l.b16 %v1095
        %v1293 = vunpack.c.h.b16 %v1095
        %v1294 = vunpack.c.l.b16 %v1096
        %v1295 = vunpack.c.h.b16 %v1096
        %v1296 = vunpack.c.l.b16 %v1097
        %v1297 = vunpack.c.h.b16 %v1097
        %v1298 = vunpack.c.l.b16 %v1098
        %v1299 = vunpack.c.h.b16 %v1098
        %v1300 = vunpack.c.l.b16 %v1099
        %v1301 = vunpack.c.h.b16 %v1099
        %v1302 = vunpack.c.l.b16 %v1100
        %v1303 = vunpack.c.h.b16 %v1100
        %v1304 = vunpack.c.l.b16 %v1101
        %v1305 = vunpack.c.h.b16 %v1101
        %v1306 = vunpack.c.l.b16 %v1102
        %v1307 = vunpack.c.h.b16 %v1102
        %v1308 = vunpack.c.l.b16 %v1103
        %v1309 = vunpack.c.h.b16 %v1103
        %v1310 = vunpack.c.l.b16 %v1104
        %v1311 = vunpack.c.h.b16 %v1104
        %v1312 = vunpack.c.l.b16 %v1105
        %v1313 = vunpack.c.h.b16 %v1105
        %v1314 = vunpack.c.l.b16 %v1106
        %v1315 = vunpack.c.h.b16 %v1106
        %v1316 = vunpack.c.l.b16 %v1107
        %v1317 = vunpack.c.h.b16 %v1107
        %v1318 = vpack.c.b16 %v1198, %v1190
        %v1319 = vpack.c.b16 %v1199, %v1191
        %v1320 = vpack.c.b16 %v1200, %v1192
        %v1321 = vpack.c.b16 %v1201, %v1193
        %v1322 = vpack.c.b16 %v1202, %v1194
        %v1323 = vpack.c.b16 %v1203, %v1195
        %v1324 = vpack.c.b16 %v1204, %v1196
        %v1325 = vpack.c.b16 %v1205, %v1197
        %v1326 = vpack.c.b16 %v1214, %v1206
        %v1327 = vpack.c.b16 %v1215, %v1207
        %v1328 = vpack.c.b16 %v1216, %v1208
        %v1329 = vpack.c.b16 %v1217, %v1209
        %v1330 = vpack.c.b16 %v1218, %v1210
        %v1331 = vpack.c.b16 %v1219, %v1211
        %v1332 = vpack.c.b16 %v1220, %v1212
        %v1333 = vpack.c.b16 %v1221, %v1213
        %v1334 = vpack.c.b16 %v1230, %v1222
        %v1335 = vpack.c.b16 %v1231, %v1223
        %v1336 = vpack.c.b16 %v1232, %v1224
        %v1337 = vpack.c.b16 %v1233, %v1225
        %v1338 = vpack.c.b16 %v1234, %v1226
        %v1339 = vpack.c.b16 %v1235, %v1227
        %v1340 = vpack.c.b16 %v1236, %v1228
        %v1341 = vpack.c.b16 %v1237, %v1229
        %v1342 = vpack.c.b16 %v1246, %v1238
        %v1343 = vpack.c.b16 %v1247, %v1239
        %v1344 = vpack.c.b16 %v1248, %v1240
        %v1345 = vpack.c.b16 %v1249, %v1241
        %v1346 = vpack.c.b16 %v1250, %v1242
        %v1347 = vpack.c.b16 %v1251, %v1243
        %v1348 = vpack.c.b16 %v1252, %v1244
        %v1349 = vpack.c.b16 %v1253, %v1245
        %v1350 = vpack.c.b16 %v1262, %v1254
        %v1351 = vpack.c.b16 %v1263, %v1255
        %v1352 = vpack.c.b16 %v1264, %v1256
        %v1353 = vpack.c.b16 %v1265, %v1257
        %v1354 = vpack.c.b16 %v1266, %v1258
        %v1355 = vpack.c.b16 %v1267, %v1259
        %v1356 = vpack.c.b16 %v1268, %v1260
        %v1357 = vpack.c.b16 %v1269, %v1261
        %v1358 = vpack.c.b16 %v1278, %v1270
        %v1359 = vpack.c.b16 %v1279, %v1271
        %v1360 = vpack.c.b16 %v1280, %v1272
        %v1361 = vpack.c.b16 %v1281, %v1273
        %v1362 = vpack.c.b16 %v1282, %v1274
        %v1363 = vpack.c.b16 %v1283, %v1275
        %v1364 = vpack.c.b16 %v1284, %v1276
        %v1365 = vpack.c.b16 %v1285, %v1277
        %v1366 = vpack.c.b16 %v1294, %v1286
        %v1367 = vpack.c.b16 %v1295, %v1287
        %v1368 = vpack.c.b16 %v1296, %v1288
        %v1369 = vpack.c.b16 %v1297, %v1289
        %v1370 = vpack.c.b16 %v1298, %v1290
        %v1371 = vpack.c.b16 %v1299, %v1291
        %v1372 = vpack.c.b16 %v1300, %v1292
        %v1373 = vpack.c.b16 %v1301, %v1293
        %v1374 = vpack.c.b16 %v1310, %v1302
        %v1375 = vpack.c.b16 %v1311, %v1303
        %v1376 = vpack.c.b16 %v1312, %v1304
        %v1377 = vpack.c.b16 %v1313, %v1305
        %v1378 = vpack.c.b16 %v1314, %v1306
        %v1379 = vpack.c.b16 %v1315, %v1307
        %v1380 = vpack.c.b16 %v1316, %v1308
        %v1381 = vpack.c.b16 %v1317, %v1309
        %1446 = vmatpush.bf16.msra.mxu0 %v1374
        %1447 = vmatpush.bf16.msra.mxu0 %v1366
        %1448 = vmatpush.bf16.msra.mxu0 %v1358
        %1449 = vmatpush.bf16.msra.mxu0 %v1350
        %1450 = vmatpush.bf16.msra.mxu0 %v1342
        %1451 = vmatpush.bf16.msra.mxu0 %v1334
        %1452 = vmatpush.bf16.msra.mxu0 %v1326
        %1453 = vmatpush.bf16.msra.mxu0 %v1318
        %1454 = vmatmul.bf16.gmra.mxu0 %v1036
        %v1455 = vpop.f32.mrf.mxu0
        %v1456 = vadd.f32 %v1110, %v1455
        %v1457 = vpop.f32.mrf.mxu0
        %v1458 = vadd.f32 %v1110, %v1457
        %1459 = vmatmul.bf16.gmra.mxu0 %v1037
        %v1460 = vpop.f32.mrf.mxu0
        %v1461 = vadd.f32 %v1110, %v1460
        %v1462 = vpop.f32.mrf.mxu0
        %v1463 = vadd.f32 %v1110, %v1462
        %1464 = vmatmul.bf16.gmra.mxu0 %v1038
        %v1465 = vpop.f32.mrf.mxu0
        %v1466 = vadd.f32 %v1110, %v1465
        %v1467 = vpop.f32.mrf.mxu0
        %v1468 = vadd.f32 %v1110, %v1467
        %1469 = vmatmul.bf16.gmra.mxu0 %v1039
        %v1470 = vpop.f32.mrf.mxu0
        %v1471 = vadd.f32 %v1110, %v1470
        %v1472 = vpop.f32.mrf.mxu0
        %v1473 = vadd.f32 %v1110, %v1472
        %1474 = vmatmul.bf16.gmra.mxu0 %v1040
        %v1475 = vpop.f32.mrf.mxu0
        %v1476 = vadd.f32 %v1110, %v1475
        %v1477 = vpop.f32.mrf.mxu0
        %v1478 = vadd.f32 %v1110, %v1477
        %1479 = vmatmul.bf16.gmra.mxu0 %v1041
        %v1480 = vpop.f32.mrf.mxu0
        %v1481 = vadd.f32 %v1110, %v1480
        %v1482 = vpop.f32.mrf.mxu0
        %v1483 = vadd.f32 %v1110, %v1482
        %1484 = vmatmul.bf16.gmra.mxu0 %v1042
        %v1485 = vpop.f32.mrf.mxu0
        %v1486 = vadd.f32 %v1110, %v1485
        %v1487 = vpop.f32.mrf.mxu0
        %v1488 = vadd.f32 %v1110, %v1487
        %1489 = vmatmul.bf16.gmra.mxu0 %v1043
        %v1490 = vpop.f32.mrf.mxu0
        %v1491 = vadd.f32 %v1110, %v1490
        %v1492 = vpop.f32.mrf.mxu0
        %v1493 = vadd.f32 %v1110, %v1492
        %1494 = vdwg.mxu0
        %1495 = vmatpush.bf16.msra.mxu0 %v1375
        %1496 = vmatpush.bf16.msra.mxu0 %v1367
        %1497 = vmatpush.bf16.msra.mxu0 %v1359
        %1498 = vmatpush.bf16.msra.mxu0 %v1351
        %1499 = vmatpush.bf16.msra.mxu0 %v1343
        %1500 = vmatpush.bf16.msra.mxu0 %v1335
        %1501 = vmatpush.bf16.msra.mxu0 %v1327
        %1502 = vmatpush.bf16.msra.mxu0 %v1319
        %1503 = vmatmul.bf16.gmra.mxu0 %v1036
        %v1504 = vpop.f32.mrf.mxu0
        %v1505 = vadd.f32 %v1111, %v1504
        %v1506 = vpop.f32.mrf.mxu0
        %v1507 = vadd.f32 %v1111, %v1506
        %1508 = vmatmul.bf16.gmra.mxu0 %v1037
        %v1509 = vpop.f32.mrf.mxu0
        %v1510 = vadd.f32 %v1111, %v1509
        %v1511 = vpop.f32.mrf.mxu0
        %v1512 = vadd.f32 %v1111, %v1511
        %1513 = vmatmul.bf16.gmra.mxu0 %v1038
        %v1514 = vpop.f32.mrf.mxu0
        %v1515 = vadd.f32 %v1111, %v1514
        %v1516 = vpop.f32.mrf.mxu0
        %v1517 = vadd.f32 %v1111, %v1516
        %1518 = vmatmul.bf16.gmra.mxu0 %v1039
        %v1519 = vpop.f32.mrf.mxu0
        %v1520 = vadd.f32 %v1111, %v1519
        %v1521 = vpop.f32.mrf.mxu0
        %v1522 = vadd.f32 %v1111, %v1521
        %1523 = vmatmul.bf16.gmra.mxu0 %v1040
        %v1524 = vpop.f32.mrf.mxu0
        %v1525 = vadd.f32 %v1111, %v1524
        %v1526 = vpop.f32.mrf.mxu0
        %v1527 = vadd.f32 %v1111, %v1526
        %1528 = vmatmul.bf16.gmra.mxu0 %v1041
        %v1529 = vpop.f32.mrf.mxu0
        %v1530 = vadd.f32 %v1111, %v1529
        %v1531 = vpop.f32.mrf.mxu0
        %v1532 = vadd.f32 %v1111, %v1531
        %1533 = vmatmul.bf16.gmra.mxu0 %v1042
        %v1534 = vpop.f32.mrf.mxu0
        %v1535 = vadd.f32 %v1111, %v1534
        %v1536 = vpop.f32.mrf.mxu0
        %v1537 = vadd.f32 %v1111, %v1536
        %1538 = vmatmul.bf16.gmra.mxu0 %v1043
        %v1539 = vpop.f32.mrf.mxu0
        %v1540 = vadd.f32 %v1111, %v1539
        %v1541 = vpop.f32.mrf.mxu0
        %v1542 = vadd.f32 %v1111, %v1541
        %1543 = vdwg.mxu0
        %1544 = vmatpush.bf16.msra.mxu0 %v1376
        %1545 = vmatpush.bf16.msra.mxu0 %v1368
        %1546 = vmatpush.bf16.msra.mxu0 %v1360
        %1547 = vmatpush.bf16.msra.mxu0 %v1352
        %1548 = vmatpush.bf16.msra.mxu0 %v1344
        %1549 = vmatpush.bf16.msra.mxu0 %v1336
        %1550 = vmatpush.bf16.msra.mxu0 %v1328
        %1551 = vmatpush.bf16.msra.mxu0 %v1320
        %1552 = vmatmul.bf16.gmra.mxu0 %v1036
        %v1553 = vpop.f32.mrf.mxu0
        %v1554 = vadd.f32 %v1112, %v1553
        %v1555 = vpop.f32.mrf.mxu0
        %v1556 = vadd.f32 %v1112, %v1555
        %1557 = vmatmul.bf16.gmra.mxu0 %v1037
        %v1558 = vpop.f32.mrf.mxu0
        %v1559 = vadd.f32 %v1112, %v1558
        %v1560 = vpop.f32.mrf.mxu0
        %v1561 = vadd.f32 %v1112, %v1560
        %1562 = vmatmul.bf16.gmra.mxu0 %v1038
        %v1563 = vpop.f32.mrf.mxu0
        %v1564 = vadd.f32 %v1112, %v1563
        %v1565 = vpop.f32.mrf.mxu0
        %v1566 = vadd.f32 %v1112, %v1565
        %1567 = vmatmul.bf16.gmra.mxu0 %v1039
        %v1568 = vpop.f32.mrf.mxu0
        %v1569 = vadd.f32 %v1112, %v1568
        %v1570 = vpop.f32.mrf.mxu0
        %v1571 = vadd.f32 %v1112, %v1570
        %1572 = vmatmul.bf16.gmra.mxu0 %v1040
        %v1573 = vpop.f32.mrf.mxu0
        %v1574 = vadd.f32 %v1112, %v1573
        %v1575 = vpop.f32.mrf.mxu0
        %v1576 = vadd.f32 %v1112, %v1575
        %1577 = vmatmul.bf16.gmra.mxu0 %v1041
        %v1578 = vpop.f32.mrf.mxu0
        %v1579 = vadd.f32 %v1112, %v1578
        %v1580 = vpop.f32.mrf.mxu0
        %v1581 = vadd.f32 %v1112, %v1580
        %1582 = vmatmul.bf16.gmra.mxu0 %v1042
        %v1583 = vpop.f32.mrf.mxu0
        %v1584 = vadd.f32 %v1112, %v1583
        %v1585 = vpop.f32.mrf.mxu0
        %v1586 = vadd.f32 %v1112, %v1585
        %1587 = vmatmul.bf16.gmra.mxu0 %v1043
        %v1588 = vpop.f32.mrf.mxu0
        %v1589 = vadd.f32 %v1112, %v1588
        %v1590 = vpop.f32.mrf.mxu0
        %v1591 = vadd.f32 %v1112, %v1590
        %1592 = vdwg.mxu0
        %1593 = vmatpush.bf16.msra.mxu0 %v1377
        %1594 = vmatpush.bf16.msra.mxu0 %v1369
        %1595 = vmatpush.bf16.msra.mxu0 %v1361
        %1596 = vmatpush.bf16.msra.mxu0 %v1353
        %1597 = vmatpush.bf16.msra.mxu0 %v1345
        %1598 = vmatpush.bf16.msra.mxu0 %v1337
        %1599 = vmatpush.bf16.msra.mxu0 %v1329
        %1600 = vmatpush.bf16.msra.mxu0 %v1321
        %1601 = vmatmul.bf16.gmra.mxu0 %v1036
        %v1602 = vpop.f32.mrf.mxu0
        %v1603 = vadd.f32 %v1113, %v1602
        %v1604 = vpop.f32.mrf.mxu0
        %v1605 = vadd.f32 %v1113, %v1604
        %1606 = vmatmul.bf16.gmra.mxu0 %v1037
        %v1607 = vpop.f32.mrf.mxu0
        %v1608 = vadd.f32 %v1113, %v1607
        %v1609 = vpop.f32.mrf.mxu0
        %v1610 = vadd.f32 %v1113, %v1609
        %1611 = vmatmul.bf16.gmra.mxu0 %v1038
        %v1612 = vpop.f32.mrf.mxu0
        %v1613 = vadd.f32 %v1113, %v1612
        %v1614 = vpop.f32.mrf.mxu0
        %v1615 = vadd.f32 %v1113, %v1614
        %1616 = vmatmul.bf16.gmra.mxu0 %v1039
        %v1617 = vpop.f32.mrf.mxu0
        %v1618 = vadd.f32 %v1113, %v1617
        %v1619 = vpop.f32.mrf.mxu0
        %v1620 = vadd.f32 %v1113, %v1619
        %1621 = vmatmul.bf16.gmra.mxu0 %v1040
        %v1622 = vpop.f32.mrf.mxu0
        %v1623 = vadd.f32 %v1113, %v1622
        %v1624 = vpop.f32.mrf.mxu0
        %v1625 = vadd.f32 %v1113, %v1624
        %1626 = vmatmul.bf16.gmra.mxu0 %v1041
        %v1627 = vpop.f32.mrf.mxu0
        %v1628 = vadd.f32 %v1113, %v1627
        %v1629 = vpop.f32.mrf.mxu0
        %v1630 = vadd.f32 %v1113, %v1629
        %1631 = vmatmul.bf16.gmra.mxu0 %v1042
        %v1632 = vpop.f32.mrf.mxu0
        %v1633 = vadd.f32 %v1113, %v1632
        %v1634 = vpop.f32.mrf.mxu0
        %v1635 = vadd.f32 %v1113, %v1634
        %1636 = vmatmul.bf16.gmra.mxu0 %v1043
        %v1637 = vpop.f32.mrf.mxu0
        %v1638 = vadd.f32 %v1113, %v1637
        %v1639 = vpop.f32.mrf.mxu0
        %v1640 = vadd.f32 %v1113, %v1639
        %1641 = vdwg.mxu0
        %1642 = vmatpush.bf16.msra.mxu0 %v1378
        %1643 = vmatpush.bf16.msra.mxu0 %v1370
        %1644 = vmatpush.bf16.msra.mxu0 %v1362
        %1645 = vmatpush.bf16.msra.mxu0 %v1354
        %1646 = vmatpush.bf16.msra.mxu0 %v1346
        %1647 = vmatpush.bf16.msra.mxu0 %v1338
        %1648 = vmatpush.bf16.msra.mxu0 %v1330
        %1649 = vmatpush.bf16.msra.mxu0 %v1322
        %1650 = vmatmul.bf16.gmra.mxu0 %v1036
        %v1651 = vpop.f32.mrf.mxu0
        %v1652 = vadd.f32 %v1114, %v1651
        %v1653 = vpop.f32.mrf.mxu0
        %v1654 = vadd.f32 %v1114, %v1653
        %1655 = vmatmul.bf16.gmra.mxu0 %v1037
        %v1656 = vpop.f32.mrf.mxu0
        %v1657 = vadd.f32 %v1114, %v1656
        %v1658 = vpop.f32.mrf.mxu0
        %v1659 = vadd.f32 %v1114, %v1658
        %1660 = vmatmul.bf16.gmra.mxu0 %v1038
        %v1661 = vpop.f32.mrf.mxu0
        %v1662 = vadd.f32 %v1114, %v1661
        %v1663 = vpop.f32.mrf.mxu0
        %v1664 = vadd.f32 %v1114, %v1663
        %1665 = vmatmul.bf16.gmra.mxu0 %v1039
        %v1666 = vpop.f32.mrf.mxu0
        %v1667 = vadd.f32 %v1114, %v1666
        %v1668 = vpop.f32.mrf.mxu0
        %v1669 = vadd.f32 %v1114, %v1668
        %1670 = vmatmul.bf16.gmra.mxu0 %v1040
        %v1671 = vpop.f32.mrf.mxu0
        %v1672 = vadd.f32 %v1114, %v1671
        %v1673 = vpop.f32.mrf.mxu0
        %v1674 = vadd.f32 %v1114, %v1673
        %1675 = vmatmul.bf16.gmra.mxu0 %v1041
        %v1676 = vpop.f32.mrf.mxu0
        %v1677 = vadd.f32 %v1114, %v1676
        %v1678 = vpop.f32.mrf.mxu0
        %v1679 = vadd.f32 %v1114, %v1678
        %1680 = vmatmul.bf16.gmra.mxu0 %v1042
        %v1681 = vpop.f32.mrf.mxu0
        %v1682 = vadd.f32 %v1114, %v1681
        %v1683 = vpop.f32.mrf.mxu0
        %v1684 = vadd.f32 %v1114, %v1683
        %1685 = vmatmul.bf16.gmra.mxu0 %v1043
        %v1686 = vpop.f32.mrf.mxu0
        %v1687 = vadd.f32 %v1114, %v1686
        %v1688 = vpop.f32.mrf.mxu0
        %v1689 = vadd.f32 %v1114, %v1688
        %1690 = vdwg.mxu0
        %1691 = vmatpush.bf16.msra.mxu0 %v1379
        %1692 = vmatpush.bf16.msra.mxu0 %v1371
        %1693 = vmatpush.bf16.msra.mxu0 %v1363
        %1694 = vmatpush.bf16.msra.mxu0 %v1355
        %1695 = vmatpush.bf16.msra.mxu0 %v1347
        %1696 = vmatpush.bf16.msra.mxu0 %v1339
        %1697 = vmatpush.bf16.msra.mxu0 %v1331
        %1698 = vmatpush.bf16.msra.mxu0 %v1323
        %1699 = vmatmul.bf16.gmra.mxu0 %v1036
        %v1700 = vpop.f32.mrf.mxu0
        %v1701 = vadd.f32 %v1115, %v1700
        %v1702 = vpop.f32.mrf.mxu0
        %v1703 = vadd.f32 %v1115, %v1702
        %1704 = vmatmul.bf16.gmra.mxu0 %v1037
        %v1705 = vpop.f32.mrf.mxu0
        %v1706 = vadd.f32 %v1115, %v1705
        %v1707 = vpop.f32.mrf.mxu0
        %v1708 = vadd.f32 %v1115, %v1707
        %1709 = vmatmul.bf16.gmra.mxu0 %v1038
        %v1710 = vpop.f32.mrf.mxu0
        %v1711 = vadd.f32 %v1115, %v1710
        %v1712 = vpop.f32.mrf.mxu0
        %v1713 = vadd.f32 %v1115, %v1712
        %1714 = vmatmul.bf16.gmra.mxu0 %v1039
        %v1715 = vpop.f32.mrf.mxu0
        %v1716 = vadd.f32 %v1115, %v1715
        %v1717 = vpop.f32.mrf.mxu0
        %v1718 = vadd.f32 %v1115, %v1717
        %1719 = vmatmul.bf16.gmra.mxu0 %v1040
        %v1720 = vpop.f32.mrf.mxu0
        %v1721 = vadd.f32 %v1115, %v1720
        %v1722 = vpop.f32.mrf.mxu0
        %v1723 = vadd.f32 %v1115, %v1722
        %1724 = vmatmul.bf16.gmra.mxu0 %v1041
        %v1725 = vpop.f32.mrf.mxu0
        %v1726 = vadd.f32 %v1115, %v1725
        %v1727 = vpop.f32.mrf.mxu0
        %v1728 = vadd.f32 %v1115, %v1727
        %1729 = vmatmul.bf16.gmra.mxu0 %v1042
        %v1730 = vpop.f32.mrf.mxu0
        %v1731 = vadd.f32 %v1115, %v1730
        %v1732 = vpop.f32.mrf.mxu0
        %v1733 = vadd.f32 %v1115, %v1732
        %1734 = vmatmul.bf16.gmra.mxu0 %v1043
        %v1735 = vpop.f32.mrf.mxu0
        %v1736 = vadd.f32 %v1115, %v1735
        %v1737 = vpop.f32.mrf.mxu0
        %v1738 = vadd.f32 %v1115, %v1737
        %1739 = vdwg.mxu0
        %1740 = vmatpush.bf16.msra.mxu0 %v1380
        %1741 = vmatpush.bf16.msra.mxu0 %v1372
        %1742 = vmatpush.bf16.msra.mxu0 %v1364
        %1743 = vmatpush.bf16.msra.mxu0 %v1356
        %1744 = vmatpush.bf16.msra.mxu0 %v1348
        %1745 = vmatpush.bf16.msra.mxu0 %v1340
        %1746 = vmatpush.bf16.msra.mxu0 %v1332
        %1747 = vmatpush.bf16.msra.mxu0 %v1324
        %1748 = vmatmul.bf16.gmra.mxu0 %v1036
        %v1749 = vpop.f32.mrf.mxu0
        %v1750 = vadd.f32 %v1116, %v1749
        %v1751 = vpop.f32.mrf.mxu0
        %v1752 = vadd.f32 %v1116, %v1751
        %1753 = vmatmul.bf16.gmra.mxu0 %v1037
        %v1754 = vpop.f32.mrf.mxu0
        %v1755 = vadd.f32 %v1116, %v1754
        %v1756 = vpop.f32.mrf.mxu0
        %v1757 = vadd.f32 %v1116, %v1756
        %1758 = vmatmul.bf16.gmra.mxu0 %v1038
        %v1759 = vpop.f32.mrf.mxu0
        %v1760 = vadd.f32 %v1116, %v1759
        %v1761 = vpop.f32.mrf.mxu0
        %v1762 = vadd.f32 %v1116, %v1761
        %1763 = vmatmul.bf16.gmra.mxu0 %v1039
        %v1764 = vpop.f32.mrf.mxu0
        %v1765 = vadd.f32 %v1116, %v1764
        %v1766 = vpop.f32.mrf.mxu0
        %v1767 = vadd.f32 %v1116, %v1766
        %1768 = vmatmul.bf16.gmra.mxu0 %v1040
        %v1769 = vpop.f32.mrf.mxu0
        %v1770 = vadd.f32 %v1116, %v1769
        %v1771 = vpop.f32.mrf.mxu0
        %v1772 = vadd.f32 %v1116, %v1771
        %1773 = vmatmul.bf16.gmra.mxu0 %v1041
        %v1774 = vpop.f32.mrf.mxu0
        %v1775 = vadd.f32 %v1116, %v1774
        %v1776 = vpop.f32.mrf.mxu0
        %v1777 = vadd.f32 %v1116, %v1776
        %1778 = vmatmul.bf16.gmra.mxu0 %v1042
        %v1779 = vpop.f32.mrf.mxu0
        %v1780 = vadd.f32 %v1116, %v1779
        %v1781 = vpop.f32.mrf.mxu0
        %v1782 = vadd.f32 %v1116, %v1781
        %1783 = vmatmul.bf16.gmra.mxu0 %v1043
        %v1784 = vpop.f32.mrf.mxu0
        %v1785 = vadd.f32 %v1116, %v1784
        %v1786 = vpop.f32.mrf.mxu0
        %v1787 = vadd.f32 %v1116, %v1786
        %1788 = vdwg.mxu0
        %1789 = vmatpush.bf16.msra.mxu0 %v1381
        %1790 = vmatpush.bf16.msra.mxu0 %v1373
        %1791 = vmatpush.bf16.msra.mxu0 %v1365
        %1792 = vmatpush.bf16.msra.mxu0 %v1357
        %1793 = vmatpush.bf16.msra.mxu0 %v1349
        %1794 = vmatpush.bf16.msra.mxu0 %v1341
        %1795 = vmatpush.bf16.msra.mxu0 %v1333
        %1796 = vmatpush.bf16.msra.mxu0 %v1325
        %1797 = vmatmul.bf16.gmra.mxu0 %v1036
        %v1798 = vpop.f32.mrf.mxu0
        %v1799 = vadd.f32 %v1117, %v1798
        %v1800 = vpop.f32.mrf.mxu0
        %v1801 = vadd.f32 %v1117, %v1800
        %1802 = vmatmul.bf16.gmra.mxu0 %v1037
        %v1803 = vpop.f32.mrf.mxu0
        %v1804 = vadd.f32 %v1117, %v1803
        %v1805 = vpop.f32.mrf.mxu0
        %v1806 = vadd.f32 %v1117, %v1805
        %1807 = vmatmul.bf16.gmra.mxu0 %v1038
        %v1808 = vpop.f32.mrf.mxu0
        %v1809 = vadd.f32 %v1117, %v1808
        %v1810 = vpop.f32.mrf.mxu0
        %v1811 = vadd.f32 %v1117, %v1810
        %1812 = vmatmul.bf16.gmra.mxu0 %v1039
        %v1813 = vpop.f32.mrf.mxu0
        %v1814 = vadd.f32 %v1117, %v1813
        %v1815 = vpop.f32.mrf.mxu0
        %v1816 = vadd.f32 %v1117, %v1815
        %1817 = vmatmul.bf16.gmra.mxu0 %v1040
        %v1818 = vpop.f32.mrf.mxu0
        %v1819 = vadd.f32 %v1117, %v1818
        %v1820 = vpop.f32.mrf.mxu0
        %v1821 = vadd.f32 %v1117, %v1820
        %1822 = vmatmul.bf16.gmra.mxu0 %v1041
        %v1823 = vpop.f32.mrf.mxu0
        %v1824 = vadd.f32 %v1117, %v1823
        %v1825 = vpop.f32.mrf.mxu0
        %v1826 = vadd.f32 %v1117, %v1825
        %1827 = vmatmul.bf16.gmra.mxu0 %v1042
        %v1828 = vpop.f32.mrf.mxu0
        %v1829 = vadd.f32 %v1117, %v1828
        %v1830 = vpop.f32.mrf.mxu0
        %v1831 = vadd.f32 %v1117, %v1830
        %1832 = vmatmul.bf16.gmra.mxu0 %v1043
        %v1833 = vpop.f32.mrf.mxu0
        %v1834 = vadd.f32 %v1117, %v1833
        %v1835 = vpop.f32.mrf.mxu0
        %v1836 = vadd.f32 %v1117, %v1835
        %1837 = vdwg.mxu0
        %v1838 = vmax.f32 %v1456, 0.0
        %v1839 = vmax.f32 %v1505, 0.0
        %v1840 = vmax.f32 %v1554, 0.0
        %v1841 = vmax.f32 %v1603, 0.0
        %v1842 = vmax.f32 %v1652, 0.0
        %v1843 = vmax.f32 %v1701, 0.0
        %v1844 = vmax.f32 %v1750, 0.0
        %v1845 = vmax.f32 %v1799, 0.0
        %v1846 = vmax.f32 %v1458, 0.0
        %v1847 = vmax.f32 %v1507, 0.0
        %v1848 = vmax.f32 %v1556, 0.0
        %v1849 = vmax.f32 %v1605, 0.0
        %v1850 = vmax.f32 %v1654, 0.0
        %v1851 = vmax.f32 %v1703, 0.0
        %v1852 = vmax.f32 %v1752, 0.0
        %v1853 = vmax.f32 %v1801, 0.0
        %v1854 = vmax.f32 %v1461, 0.0
        %v1855 = vmax.f32 %v1510, 0.0
        %v1856 = vmax.f32 %v1559, 0.0
        %v1857 = vmax.f32 %v1608, 0.0
        %v1858 = vmax.f32 %v1657, 0.0
        %v1859 = vmax.f32 %v1706, 0.0
        %v1860 = vmax.f32 %v1755, 0.0
        %v1861 = vmax.f32 %v1804, 0.0
        %v1862 = vmax.f32 %v1463, 0.0
        %v1863 = vmax.f32 %v1512, 0.0
        %v1864 = vmax.f32 %v1561, 0.0
        %v1865 = vmax.f32 %v1610, 0.0
        %v1866 = vmax.f32 %v1659, 0.0
        %v1867 = vmax.f32 %v1708, 0.0
        %v1868 = vmax.f32 %v1757, 0.0
        %v1869 = vmax.f32 %v1806, 0.0
        %v1870 = vmax.f32 %v1466, 0.0
        %v1871 = vmax.f32 %v1515, 0.0
        %v1872 = vmax.f32 %v1564, 0.0
        %v1873 = vmax.f32 %v1613, 0.0
        %v1874 = vmax.f32 %v1662, 0.0
        %v1875 = vmax.f32 %v1711, 0.0
        %v1876 = vmax.f32 %v1760, 0.0
        %v1877 = vmax.f32 %v1809, 0.0
        %v1878 = vmax.f32 %v1468, 0.0
        %v1879 = vmax.f32 %v1517, 0.0
        %v1880 = vmax.f32 %v1566, 0.0
        %v1881 = vmax.f32 %v1615, 0.0
        %v1882 = vmax.f32 %v1664, 0.0
        %v1883 = vmax.f32 %v1713, 0.0
        %v1884 = vmax.f32 %v1762, 0.0
        %v1885 = vmax.f32 %v1811, 0.0
        %v1886 = vmax.f32 %v1471, 0.0
        %v1887 = vmax.f32 %v1520, 0.0
        %v1888 = vmax.f32 %v1569, 0.0
        %v1889 = vmax.f32 %v1618, 0.0
        %v1890 = vmax.f32 %v1667, 0.0
        %v1891 = vmax.f32 %v1716, 0.0
        %v1892 = vmax.f32 %v1765, 0.0
        %v1893 = vmax.f32 %v1814, 0.0
        %v1894 = vmax.f32 %v1473, 0.0
        %v1895 = vmax.f32 %v1522, 0.0
        %v1896 = vmax.f32 %v1571, 0.0
        %v1897 = vmax.f32 %v1620, 0.0
        %v1898 = vmax.f32 %v1669, 0.0
        %v1899 = vmax.f32 %v1718, 0.0
        %v1900 = vmax.f32 %v1767, 0.0
        %v1901 = vmax.f32 %v1816, 0.0
        %v1902 = vmax.f32 %v1476, 0.0
        %v1903 = vmax.f32 %v1525, 0.0
        %v1904 = vmax.f32 %v1574, 0.0
        %v1905 = vmax.f32 %v1623, 0.0
        %v1906 = vmax.f32 %v1672, 0.0
        %v1907 = vmax.f32 %v1721, 0.0
        %v1908 = vmax.f32 %v1770, 0.0
        %v1909 = vmax.f32 %v1819, 0.0
        %v1910 = vmax.f32 %v1478, 0.0
        %v1911 = vmax.f32 %v1527, 0.0
        %v1912 = vmax.f32 %v1576, 0.0
        %v1913 = vmax.f32 %v1625, 0.0
        %v1914 = vmax.f32 %v1674, 0.0
        %v1915 = vmax.f32 %v1723, 0.0
        %v1916 = vmax.f32 %v1772, 0.0
        %v1917 = vmax.f32 %v1821, 0.0
        %v1918 = vmax.f32 %v1481, 0.0
        %v1919 = vmax.f32 %v1530, 0.0
        %v1920 = vmax.f32 %v1579, 0.0
        %v1921 = vmax.f32 %v1628, 0.0
        %v1922 = vmax.f32 %v1677, 0.0
        %v1923 = vmax.f32 %v1726, 0.0
        %v1924 = vmax.f32 %v1775, 0.0
        %v1925 = vmax.f32 %v1824, 0.0
        %v1926 = vmax.f32 %v1483, 0.0
        %v1927 = vmax.f32 %v1532, 0.0
        %v1928 = vmax.f32 %v1581, 0.0
        %v1929 = vmax.f32 %v1630, 0.0
        %v1930 = vmax.f32 %v1679, 0.0
        %v1931 = vmax.f32 %v1728, 0.0
        %v1932 = vmax.f32 %v1777, 0.0
        %v1933 = vmax.f32 %v1826, 0.0
        %v1934 = vmax.f32 %v1486, 0.0
        %v1935 = vmax.f32 %v1535, 0.0
        %v1936 = vmax.f32 %v1584, 0.0
        %v1937 = vmax.f32 %v1633, 0.0
        %v1938 = vmax.f32 %v1682, 0.0
        %v1939 = vmax.f32 %v1731, 0.0
        %v1940 = vmax.f32 %v1780, 0.0
        %v1941 = vmax.f32 %v1829, 0.0
        %v1942 = vmax.f32 %v1488, 0.0
        %v1943 = vmax.f32 %v1537, 0.0
        %v1944 = vmax.f32 %v1586, 0.0
        %v1945 = vmax.f32 %v1635, 0.0
        %v1946 = vmax.f32 %v1684, 0.0
        %v1947 = vmax.f32 %v1733, 0.0
        %v1948 = vmax.f32 %v1782, 0.0
        %v1949 = vmax.f32 %v1831, 0.0
        %v1950 = vmax.f32 %v1491, 0.0
        %v1951 = vmax.f32 %v1540, 0.0
        %v1952 = vmax.f32 %v1589, 0.0
        %v1953 = vmax.f32 %v1638, 0.0
        %v1954 = vmax.f32 %v1687, 0.0
        %v1955 = vmax.f32 %v1736, 0.0
        %v1956 = vmax.f32 %v1785, 0.0
        %v1957 = vmax.f32 %v1834, 0.0
        %v1958 = vmax.f32 %v1493, 0.0
        %v1959 = vmax.f32 %v1542, 0.0
        %v1960 = vmax.f32 %v1591, 0.0
        %v1961 = vmax.f32 %v1640, 0.0
        %v1962 = vmax.f32 %v1689, 0.0
        %v1963 = vmax.f32 %v1738, 0.0
        %v1964 = vmax.f32 %v1787, 0.0
        %v1965 = vmax.f32 %v1836, 0.0
        %v1966 = vmax.f32 %v1838, %v1846
        %v1967 = vmax.f32 %v1966, %v1854
        %v1968 = vmax.f32 %v1967, %v1862
        %v1969 = vmax.f32 %v1968, %v1870
        %v1970 = vmax.f32 %v1969, %v1878
        %v1971 = vmax.f32 %v1970, %v1886
        %v1972 = vmax.f32 %v1971, %v1894
        %v1973 = vmax.f32 %v1972, %v1902
        %v1974 = vmax.f32 %v1973, %v1910
        %v1975 = vmax.f32 %v1974, %v1918
        %v1976 = vmax.f32 %v1975, %v1926
        %v1977 = vmax.f32 %v1976, %v1934
        %v1978 = vmax.f32 %v1977, %v1942
        %v1979 = vmax.f32 %v1978, %v1950
        %v1980 = vmax.f32 %v1979, %v1958
        %v1981 = vrot.slane %v1980, 4
        %v1982 = vmax.f32 %v1980, %v1981
        %v1983 = vrot.slane %v1982, 2
        %v1984 = vmax.f32 %v1982, %v1983
        %v1985 = vrot.slane %v1984, 1
        %v1986 = vmax.f32 %v1984, %v1985
        %v1987 = vmax.f32 %v1839, %v1847
        %v1988 = vmax.f32 %v1987, %v1855
        %v1989 = vmax.f32 %v1988, %v1863
        %v1990 = vmax.f32 %v1989, %v1871
        %v1991 = vmax.f32 %v1990, %v1879
        %v1992 = vmax.f32 %v1991, %v1887
        %v1993 = vmax.f32 %v1992, %v1895
        %v1994 = vmax.f32 %v1993, %v1903
        %v1995 = vmax.f32 %v1994, %v1911
        %v1996 = vmax.f32 %v1995, %v1919
        %v1997 = vmax.f32 %v1996, %v1927
        %v1998 = vmax.f32 %v1997, %v1935
        %v1999 = vmax.f32 %v1998, %v1943
        %v2000 = vmax.f32 %v1999, %v1951
        %v2001 = vmax.f32 %v2000, %v1959
        %v2002 = vrot.slane %v2001, 4
        %v2003 = vmax.f32 %v2001, %v2002
        %v2004 = vrot.slane %v2003, 2
        %v2005 = vmax.f32 %v2003, %v2004
        %v2006 = vrot.slane %v2005, 1
        %v2007 = vmax.f32 %v2005, %v2006
        %v2008 = vmax.f32 %v1840, %v1848
        %v2009 = vmax.f32 %v2008, %v1856
        %v2010 = vmax.f32 %v2009, %v1864
        %v2011 = vmax.f32 %v2010, %v1872
        %v2012 = vmax.f32 %v2011, %v1880
        %v2013 = vmax.f32 %v2012, %v1888
        %v2014 = vmax.f32 %v2013, %v1896
        %v2015 = vmax.f32 %v2014, %v1904
        %v2016 = vmax.f32 %v2015, %v1912
        %v2017 = vmax.f32 %v2016, %v1920
        %v2018 = vmax.f32 %v2017, %v1928
        %v2019 = vmax.f32 %v2018, %v1936
        %v2020 = vmax.f32 %v2019, %v1944
        %v2021 = vmax.f32 %v2020, %v1952
        %v2022 = vmax.f32 %v2021, %v1960
        %v2023 = vrot.slane %v2022, 4
        %v2024 = vmax.f32 %v2022, %v2023
        %v2025 = vrot.slane %v2024, 2
        %v2026 = vmax.f32 %v2024, %v2025
        %v2027 = vrot.slane %v2026, 1
        %v2028 = vmax.f32 %v2026, %v2027
        %v2029 = vmax.f32 %v1841, %v1849
        %v2030 = vmax.f32 %v2029, %v1857
        %v2031 = vmax.f32 %v2030, %v1865
        %v2032 = vmax.f32 %v2031, %v1873
        %v2033 = vmax.f32 %v2032, %v1881
        %v2034 = vmax.f32 %v2033, %v1889
        %v2035 = vmax.f32 %v2034, %v1897
        %v2036 = vmax.f32 %v2035, %v1905
        %v2037 = vmax.f32 %v2036, %v1913
        %v2038 = vmax.f32 %v2037, %v1921
        %v2039 = vmax.f32 %v2038, %v1929
        %v2040 = vmax.f32 %v2039, %v1937
        %v2041 = vmax.f32 %v2040, %v1945
        %v2042 = vmax.f32 %v2041, %v1953
        %v2043 = vmax.f32 %v2042, %v1961
        %v2044 = vrot.slane %v2043, 4
        %v2045 = vmax.f32 %v2043, %v2044
        %v2046 = vrot.slane %v2045, 2
        %v2047 = vmax.f32 %v2045, %v2046
        %v2048 = vrot.slane %v2047, 1
        %v2049 = vmax.f32 %v2047, %v2048
        %v2050 = vmax.f32 %v1842, %v1850
        %v2051 = vmax.f32 %v2050, %v1858
        %v2052 = vmax.f32 %v2051, %v1866
        %v2053 = vmax.f32 %v2052, %v1874
        %v2054 = vmax.f32 %v2053, %v1882
        %v2055 = vmax.f32 %v2054, %v1890
        %v2056 = vmax.f32 %v2055, %v1898
        %v2057 = vmax.f32 %v2056, %v1906
        %v2058 = vmax.f32 %v2057, %v1914
        %v2059 = vmax.f32 %v2058, %v1922
        %v2060 = vmax.f32 %v2059, %v1930
        %v2061 = vmax.f32 %v2060, %v1938
        %v2062 = vmax.f32 %v2061, %v1946
        %v2063 = vmax.f32 %v2062, %v1954
        %v2064 = vmax.f32 %v2063, %v1962
        %v2065 = vrot.slane %v2064, 4
        %v2066 = vmax.f32 %v2064, %v2065
        %v2067 = vrot.slane %v2066, 2
        %v2068 = vmax.f32 %v2066, %v2067
        %v2069 = vrot.slane %v2068, 1
        %v2070 = vmax.f32 %v2068, %v2069
        %v2071 = vmax.f32 %v1843, %v1851
        %v2072 = vmax.f32 %v2071, %v1859
        %v2073 = vmax.f32 %v2072, %v1867
        %v2074 = vmax.f32 %v2073, %v1875
        %v2075 = vmax.f32 %v2074, %v1883
        %v2076 = vmax.f32 %v2075, %v1891
        %v2077 = vmax.f32 %v2076, %v1899
        %v2078 = vmax.f32 %v2077, %v1907
        %v2079 = vmax.f32 %v2078, %v1915
        %v2080 = vmax.f32 %v2079, %v1923
        %v2081 = vmax.f32 %v2080, %v1931
        %v2082 = vmax.f32 %v2081, %v1939
        %v2083 = vmax.f32 %v2082, %v1947
        %v2084 = vmax.f32 %v2083, %v1955
        %v2085 = vmax.f32 %v2084, %v1963
        %v2086 = vrot.slane %v2085, 4
        %v2087 = vmax.f32 %v2085, %v2086
        %v2088 = vrot.slane %v2087, 2
        %v2089 = vmax.f32 %v2087, %v2088
        %v2090 = vrot.slane %v2089, 1
        %v2091 = vmax.f32 %v2089, %v2090
        %v2092 = vmax.f32 %v1844, %v1852
        %v2093 = vmax.f32 %v2092, %v1860
        %v2094 = vmax.f32 %v2093, %v1868
        %v2095 = vmax.f32 %v2094, %v1876
        %v2096 = vmax.f32 %v2095, %v1884
        %v2097 = vmax.f32 %v2096, %v1892
        %v2098 = vmax.f32 %v2097, %v1900
        %v2099 = vmax.f32 %v2098, %v1908
        %v2100 = vmax.f32 %v2099, %v1916
        %v2101 = vmax.f32 %v2100, %v1924
        %v2102 = vmax.f32 %v2101, %v1932
        %v2103 = vmax.f32 %v2102, %v1940
        %v2104 = vmax.f32 %v2103, %v1948
        %v2105 = vmax.f32 %v2104, %v1956
        %v2106 = vmax.f32 %v2105, %v1964
        %v2107 = vrot.slane %v2106, 4
        %v2108 = vmax.f32 %v2106, %v2107
        %v2109 = vrot.slane %v2108, 2
        %v2110 = vmax.f32 %v2108, %v2109
        %v2111 = vrot.slane %v2110, 1
        %v2112 = vmax.f32 %v2110, %v2111
        %v2113 = vmax.f32 %v1845, %v1853
        %v2114 = vmax.f32 %v2113, %v1861
        %v2115 = vmax.f32 %v2114, %v1869
        %v2116 = vmax.f32 %v2115, %v1877
        %v2117 = vmax.f32 %v2116, %v1885
        %v2118 = vmax.f32 %v2117, %v1893
        %v2119 = vmax.f32 %v2118, %v1901
        %v2120 = vmax.f32 %v2119, %v1909
        %v2121 = vmax.f32 %v2120, %v1917
        %v2122 = vmax.f32 %v2121, %v1925
        %v2123 = vmax.f32 %v2122, %v1933
        %v2124 = vmax.f32 %v2123, %v1941
        %v2125 = vmax.f32 %v2124, %v1949
        %v2126 = vmax.f32 %v2125, %v1957
        %v2127 = vmax.f32 %v2126, %v1965
        %v2128 = vrot.slane %v2127, 4
        %v2129 = vmax.f32 %v2127, %v2128
        %v2130 = vrot.slane %v2129, 2
        %v2131 = vmax.f32 %v2129, %v2130
        %v2132 = vrot.slane %v2131, 1
        %v2133 = vmax.f32 %v2131, %v2132
        %v2134 = vpack.c.bf16 %v1986, %v1986
        %v2135 = vpack.c.bf16 %v2007, %v2007
        %v2136 = vpack.c.bf16 %v2028, %v2028
        %v2137 = vpack.c.bf16 %v2049, %v2049
        %v2138 = vpack.c.bf16 %v2070, %v2070
        %v2139 = vpack.c.bf16 %v2091, %v2091
        %v2140 = vpack.c.bf16 %v2112, %v2112
        %v2141 = vpack.c.bf16 %v2133, %v2133
        %v2142 = vld [vmem:[#allocation4] sm:$0xff]
        %v2143 = vld [vmem:[#allocation4 + $0x8] sm:$0xff]
        %v2144 = vld [vmem:[#allocation4 + $0x10] sm:$0xff]
        %v2145 = vld [vmem:[#allocation4 + $0x18] sm:$0xff]
        %v2146 = vld [vmem:[#allocation4 + $0x20] sm:$0xff]
        %v2147 = vld [vmem:[#allocation4 + $0x28] sm:$0xff]
        %v2148 = vld [vmem:[#allocation4 + $0x30] sm:$0xff]
        %v2149 = vld [vmem:[#allocation4 + $0x38] sm:$0xff]
        %v2150 = vld [vmem:[#allocation4 + $0x40] sm:$0xff]
        %v2151 = vld [vmem:[#allocation4 + $0x48] sm:$0xff]
        %v2152 = vld [vmem:[#allocation4 + $0x50] sm:$0xff]
        %v2153 = vld [vmem:[#allocation4 + $0x58] sm:$0xff]
        %v2154 = vld [vmem:[#allocation4 + $0x60] sm:$0xff]
        %v2155 = vld [vmem:[#allocation4 + $0x68] sm:$0xff]
        %v2156 = vld [vmem:[#allocation4 + $0x70] sm:$0xff]
        %v2157 = vld [vmem:[#allocation4 + $0x78] sm:$0xff]
        %v2158 = vld [vmem:[#allocation4 + $0x80] sm:$0xff]
        %v2159 = vld [vmem:[#allocation4 + $0x88] sm:$0xff]
        %v2160 = vld [vmem:[#allocation4 + $0x90] sm:$0xff]
        %v2161 = vld [vmem:[#allocation4 + $0x98] sm:$0xff]
        %v2162 = vld [vmem:[#allocation4 + $0xa0] sm:$0xff]
        %v2163 = vld [vmem:[#allocation4 + $0xa8] sm:$0xff]
        %v2164 = vld [vmem:[#allocation4 + $0xb0] sm:$0xff]
        %v2165 = vld [vmem:[#allocation4 + $0xb8] sm:$0xff]
        %v2166 = vld [vmem:[#allocation4 + $0xc0] sm:$0xff]
        %v2167 = vld [vmem:[#allocation4 + $0xc8] sm:$0xff]
        %v2168 = vld [vmem:[#allocation4 + $0xd0] sm:$0xff]
        %v2169 = vld [vmem:[#allocation4 + $0xd8] sm:$0xff]
        %v2170 = vld [vmem:[#allocation4 + $0xe0] sm:$0xff]
        %v2171 = vld [vmem:[#allocation4 + $0xe8] sm:$0xff]
        %v2172 = vld [vmem:[#allocation4 + $0xf0] sm:$0xff]
        %v2173 = vld [vmem:[#allocation4 + $0xf8] sm:$0xff]
        %v2174 = vld [vmem:[#allocation4 + $0x100] sm:$0xff]
        %v2175 = vld [vmem:[#allocation4 + $0x108] sm:$0xff]
        %v2176 = vld [vmem:[#allocation4 + $0x110] sm:$0xff]
        %v2177 = vld [vmem:[#allocation4 + $0x118] sm:$0xff]
        %v2178 = vld [vmem:[#allocation4 + $0x120] sm:$0xff]
        %v2179 = vld [vmem:[#allocation4 + $0x128] sm:$0xff]
        %v2180 = vld [vmem:[#allocation4 + $0x130] sm:$0xff]
        %v2181 = vld [vmem:[#allocation4 + $0x138] sm:$0xff]
        %v2182 = vld [vmem:[#allocation4 + $0x140] sm:$0xff]
        %v2183 = vld [vmem:[#allocation4 + $0x148] sm:$0xff]
        %v2184 = vld [vmem:[#allocation4 + $0x150] sm:$0xff]
        %v2185 = vld [vmem:[#allocation4 + $0x158] sm:$0xff]
        %v2186 = vld [vmem:[#allocation4 + $0x160] sm:$0xff]
        %v2187 = vld [vmem:[#allocation4 + $0x168] sm:$0xff]
        %v2188 = vld [vmem:[#allocation4 + $0x170] sm:$0xff]
        %v2189 = vld [vmem:[#allocation4 + $0x178] sm:$0xff]
        %v2190 = vld [vmem:[#allocation4 + $0x180] sm:$0xff]
        %v2191 = vld [vmem:[#allocation4 + $0x188] sm:$0xff]
        %v2192 = vld [vmem:[#allocation4 + $0x190] sm:$0xff]
        %v2193 = vld [vmem:[#allocation4 + $0x198] sm:$0xff]
        %v2194 = vld [vmem:[#allocation4 + $0x1a0] sm:$0xff]
        %v2195 = vld [vmem:[#allocation4 + $0x1a8] sm:$0xff]
        %v2196 = vld [vmem:[#allocation4 + $0x1b0] sm:$0xff]
        %v2197 = vld [vmem:[#allocation4 + $0x1b8] sm:$0xff]
        %v2198 = vld [vmem:[#allocation4 + $0x1c0] sm:$0xff]
        %v2199 = vld [vmem:[#allocation4 + $0x1c8] sm:$0xff]
        %v2200 = vld [vmem:[#allocation4 + $0x1d0] sm:$0xff]
        %v2201 = vld [vmem:[#allocation4 + $0x1d8] sm:$0xff]
        %v2202 = vld [vmem:[#allocation4 + $0x1e0] sm:$0xff]
        %v2203 = vld [vmem:[#allocation4 + $0x1e8] sm:$0xff]
        %v2204 = vld [vmem:[#allocation4 + $0x1f0] sm:$0xff]
        %v2205 = vld [vmem:[#allocation4 + $0x1f8] sm:$0xff]
        %v2206 = vld [vmem:[#allocation4 + $0x200] sm:$0xff]
        %v2207 = vld [vmem:[#allocation4 + $0x208] sm:$0xff]
        %v2208 = vld [vmem:[#allocation4 + $0x210] sm:$0xff]
        %v2209 = vld [vmem:[#allocation4 + $0x218] sm:$0xff]
        %v2210 = vld [vmem:[#allocation4 + $0x220] sm:$0xff]
        %v2211 = vld [vmem:[#allocation4 + $0x228] sm:$0xff]
        %v2212 = vld [vmem:[#allocation4 + $0x230] sm:$0xff]
        %v2213 = vld [vmem:[#allocation4 + $0x238] sm:$0xff]
        %v2214 = vld [vmem:[#allocation4 + $0x240] sm:$0xff]
        %v2215 = vld [vmem:[#allocation4 + $0x248] sm:$0xff]
        %v2216 = vld [vmem:[#allocation4 + $0x250] sm:$0xff]
        %v2217 = vld [vmem:[#allocation4 + $0x258] sm:$0xff]
        %v2218 = vld [vmem:[#allocation4 + $0x260] sm:$0xff]
        %v2219 = vld [vmem:[#allocation4 + $0x268] sm:$0xff]
        %v2220 = vld [vmem:[#allocation4 + $0x270] sm:$0xff]
        %v2221 = vld [vmem:[#allocation4 + $0x278] sm:$0xff]
        %v2222 = vld [vmem:[#allocation4 + $0x280] sm:$0xff]
        %v2223 = vld [vmem:[#allocation4 + $0x288] sm:$0xff]
        %v2224 = vld [vmem:[#allocation4 + $0x290] sm:$0xff]
        %v2225 = vld [vmem:[#allocation4 + $0x298] sm:$0xff]
        %v2226 = vld [vmem:[#allocation4 + $0x2a0] sm:$0xff]
        %v2227 = vld [vmem:[#allocation4 + $0x2a8] sm:$0xff]
        %v2228 = vld [vmem:[#allocation4 + $0x2b0] sm:$0xff]
        %v2229 = vld [vmem:[#allocation4 + $0x2b8] sm:$0xff]
        %v2230 = vld [vmem:[#allocation4 + $0x2c0] sm:$0xff]
        %v2231 = vld [vmem:[#allocation4 + $0x2c8] sm:$0xff]
        %v2232 = vld [vmem:[#allocation4 + $0x2d0] sm:$0xff]
        %v2233 = vld [vmem:[#allocation4 + $0x2d8] sm:$0xff]
        %v2234 = vld [vmem:[#allocation4 + $0x2e0] sm:$0xff]
        %v2235 = vld [vmem:[#allocation4 + $0x2e8] sm:$0xff]
        %v2236 = vld [vmem:[#allocation4 + $0x2f0] sm:$0xff]
        %v2237 = vld [vmem:[#allocation4 + $0x2f8] sm:$0xff]
        %v2238 = vld [vmem:[#allocation4 + $0x300] sm:$0xff]
        %v2239 = vld [vmem:[#allocation4 + $0x308] sm:$0xff]
        %v2240 = vld [vmem:[#allocation4 + $0x310] sm:$0xff]
        %v2241 = vld [vmem:[#allocation4 + $0x318] sm:$0xff]
        %v2242 = vld [vmem:[#allocation4 + $0x320] sm:$0xff]
        %v2243 = vld [vmem:[#allocation4 + $0x328] sm:$0xff]
        %v2244 = vld [vmem:[#allocation4 + $0x330] sm:$0xff]
        %v2245 = vld [vmem:[#allocation4 + $0x338] sm:$0xff]
        %v2246 = vld [vmem:[#allocation4 + $0x340] sm:$0xff]
        %v2247 = vld [vmem:[#allocation4 + $0x348] sm:$0xff]
        %v2248 = vld [vmem:[#allocation4 + $0x350] sm:$0xff]
        %v2249 = vld [vmem:[#allocation4 + $0x358] sm:$0xff]
        %v2250 = vld [vmem:[#allocation4 + $0x360] sm:$0xff]
        %v2251 = vld [vmem:[#allocation4 + $0x368] sm:$0xff]
        %v2252 = vld [vmem:[#allocation4 + $0x370] sm:$0xff]
        %v2253 = vld [vmem:[#allocation4 + $0x378] sm:$0xff]
        %v2254 = vld [vmem:[#allocation4 + $0x380] sm:$0xff]
        %v2255 = vld [vmem:[#allocation4 + $0x388] sm:$0xff]
        %v2256 = vld [vmem:[#allocation4 + $0x390] sm:$0xff]
        %v2257 = vld [vmem:[#allocation4 + $0x398] sm:$0xff]
        %v2258 = vld [vmem:[#allocation4 + $0x3a0] sm:$0xff]
        %v2259 = vld [vmem:[#allocation4 + $0x3a8] sm:$0xff]
        %v2260 = vld [vmem:[#allocation4 + $0x3b0] sm:$0xff]
        %v2261 = vld [vmem:[#allocation4 + $0x3b8] sm:$0xff]
        %v2262 = vld [vmem:[#allocation4 + $0x3c0] sm:$0xff]
        %v2263 = vld [vmem:[#allocation4 + $0x3c8] sm:$0xff]
        %v2264 = vld [vmem:[#allocation4 + $0x3d0] sm:$0xff]
        %v2265 = vld [vmem:[#allocation4 + $0x3d8] sm:$0xff]
        %v2266 = vld [vmem:[#allocation4 + $0x3e0] sm:$0xff]
        %v2267 = vld [vmem:[#allocation4 + $0x3e8] sm:$0xff]
        %v2268 = vld [vmem:[#allocation4 + $0x3f0] sm:$0xff]
        %v2269 = vld [vmem:[#allocation4 + $0x3f8] sm:$0xff]
        %v2270 = vld [vmem:[#allocation4 + $0x400] sm:$0xff]
        %v2271 = vld [vmem:[#allocation4 + $0x408] sm:$0xff]
        %v2272 = vld [vmem:[#allocation4 + $0x410] sm:$0xff]
        %v2273 = vld [vmem:[#allocation4 + $0x418] sm:$0xff]
        %v2274 = vld [vmem:[#allocation4 + $0x420] sm:$0xff]
        %v2275 = vld [vmem:[#allocation4 + $0x428] sm:$0xff]
        %v2276 = vld [vmem:[#allocation4 + $0x430] sm:$0xff]
        %v2277 = vld [vmem:[#allocation4 + $0x438] sm:$0xff]
        %v2278 = vld [vmem:[#allocation4 + $0x440] sm:$0xff]
        %v2279 = vld [vmem:[#allocation4 + $0x448] sm:$0xff]
        %v2280 = vld [vmem:[#allocation4 + $0x450] sm:$0xff]
        %v2281 = vld [vmem:[#allocation4 + $0x458] sm:$0xff]
        %v2282 = vld [vmem:[#allocation4 + $0x460] sm:$0xff]
        %v2283 = vld [vmem:[#allocation4 + $0x468] sm:$0xff]
        %v2284 = vld [vmem:[#allocation4 + $0x470] sm:$0xff]
        %v2285 = vld [vmem:[#allocation4 + $0x478] sm:$0xff]
        %v2286 = vld [vmem:[#allocation4 + $0x480] sm:$0xff]
        %v2287 = vld [vmem:[#allocation4 + $0x488] sm:$0xff]
        %v2288 = vld [vmem:[#allocation4 + $0x490] sm:$0xff]
        %v2289 = vld [vmem:[#allocation4 + $0x498] sm:$0xff]
        %v2290 = vld [vmem:[#allocation4 + $0x4a0] sm:$0xff]
        %v2291 = vld [vmem:[#allocation4 + $0x4a8] sm:$0xff]
        %v2292 = vld [vmem:[#allocation4 + $0x4b0] sm:$0xff]
        %v2293 = vld [vmem:[#allocation4 + $0x4b8] sm:$0xff]
        %v2294 = vld [vmem:[#allocation4 + $0x4c0] sm:$0xff]
        %v2295 = vld [vmem:[#allocation4 + $0x4c8] sm:$0xff]
        %v2296 = vld [vmem:[#allocation4 + $0x4d0] sm:$0xff]
        %v2297 = vld [vmem:[#allocation4 + $0x4d8] sm:$0xff]
        %v2298 = vld [vmem:[#allocation4 + $0x4e0] sm:$0xff]
        %v2299 = vld [vmem:[#allocation4 + $0x4e8] sm:$0xff]
        %v2300 = vld [vmem:[#allocation4 + $0x4f0] sm:$0xff]
        %v2301 = vld [vmem:[#allocation4 + $0x4f8] sm:$0xff]
        %v2302 = vld [vmem:[#allocation4 + $0x500] sm:$0xff]
        %v2303 = vld [vmem:[#allocation4 + $0x508] sm:$0xff]
        %v2304 = vld [vmem:[#allocation4 + $0x510] sm:$0xff]
        %v2305 = vld [vmem:[#allocation4 + $0x518] sm:$0xff]
        %v2306 = vld [vmem:[#allocation4 + $0x520] sm:$0xff]
        %v2307 = vld [vmem:[#allocation4 + $0x528] sm:$0xff]
        %v2308 = vld [vmem:[#allocation4 + $0x530] sm:$0xff]
        %v2309 = vld [vmem:[#allocation4 + $0x538] sm:$0xff]
        %v2310 = vld [vmem:[#allocation4 + $0x540] sm:$0xff]
        %v2311 = vld [vmem:[#allocation4 + $0x548] sm:$0xff]
        %v2312 = vld [vmem:[#allocation4 + $0x550] sm:$0xff]
        %v2313 = vld [vmem:[#allocation4 + $0x558] sm:$0xff]
        %v2314 = vld [vmem:[#allocation4 + $0x560] sm:$0xff]
        %v2315 = vld [vmem:[#allocation4 + $0x568] sm:$0xff]
        %v2316 = vld [vmem:[#allocation4 + $0x570] sm:$0xff]
        %v2317 = vld [vmem:[#allocation4 + $0x578] sm:$0xff]
        %v2318 = vld [vmem:[#allocation4 + $0x580] sm:$0xff]
        %v2319 = vld [vmem:[#allocation4 + $0x588] sm:$0xff]
        %v2320 = vld [vmem:[#allocation4 + $0x590] sm:$0xff]
        %v2321 = vld [vmem:[#allocation4 + $0x598] sm:$0xff]
        %v2322 = vld [vmem:[#allocation4 + $0x5a0] sm:$0xff]
        %v2323 = vld [vmem:[#allocation4 + $0x5a8] sm:$0xff]
        %v2324 = vld [vmem:[#allocation4 + $0x5b0] sm:$0xff]
        %v2325 = vld [vmem:[#allocation4 + $0x5b8] sm:$0xff]
        %v2326 = vld [vmem:[#allocation4 + $0x5c0] sm:$0xff]
        %v2327 = vld [vmem:[#allocation4 + $0x5c8] sm:$0xff]
        %v2328 = vld [vmem:[#allocation4 + $0x5d0] sm:$0xff]
        %v2329 = vld [vmem:[#allocation4 + $0x5d8] sm:$0xff]
        %v2330 = vld [vmem:[#allocation4 + $0x5e0] sm:$0xff]
        %v2331 = vld [vmem:[#allocation4 + $0x5e8] sm:$0xff]
        %v2332 = vld [vmem:[#allocation4 + $0x5f0] sm:$0xff]
        %v2333 = vld [vmem:[#allocation4 + $0x5f8] sm:$0xff]
        %v2334 = vld [vmem:[#allocation4 + $0x600] sm:$0xff]
        %v2335 = vld [vmem:[#allocation4 + $0x608] sm:$0xff]
        %v2336 = vld [vmem:[#allocation4 + $0x610] sm:$0xff]
        %v2337 = vld [vmem:[#allocation4 + $0x618] sm:$0xff]
        %v2338 = vld [vmem:[#allocation4 + $0x620] sm:$0xff]
        %v2339 = vld [vmem:[#allocation4 + $0x628] sm:$0xff]
        %v2340 = vld [vmem:[#allocation4 + $0x630] sm:$0xff]
        %v2341 = vld [vmem:[#allocation4 + $0x638] sm:$0xff]
        %v2342 = vld [vmem:[#allocation4 + $0x640] sm:$0xff]
        %v2343 = vld [vmem:[#allocation4 + $0x648] sm:$0xff]
        %v2344 = vld [vmem:[#allocation4 + $0x650] sm:$0xff]
        %v2345 = vld [vmem:[#allocation4 + $0x658] sm:$0xff]
        %v2346 = vld [vmem:[#allocation4 + $0x660] sm:$0xff]
        %v2347 = vld [vmem:[#allocation4 + $0x668] sm:$0xff]
        %v2348 = vld [vmem:[#allocation4 + $0x670] sm:$0xff]
        %v2349 = vld [vmem:[#allocation4 + $0x678] sm:$0xff]
        %v2350 = vld [vmem:[#allocation4 + $0x680] sm:$0xff]
        %v2351 = vld [vmem:[#allocation4 + $0x688] sm:$0xff]
        %v2352 = vld [vmem:[#allocation4 + $0x690] sm:$0xff]
        %v2353 = vld [vmem:[#allocation4 + $0x698] sm:$0xff]
        %v2354 = vld [vmem:[#allocation4 + $0x6a0] sm:$0xff]
        %v2355 = vld [vmem:[#allocation4 + $0x6a8] sm:$0xff]
        %v2356 = vld [vmem:[#allocation4 + $0x6b0] sm:$0xff]
        %v2357 = vld [vmem:[#allocation4 + $0x6b8] sm:$0xff]
        %v2358 = vld [vmem:[#allocation4 + $0x6c0] sm:$0xff]
        %v2359 = vld [vmem:[#allocation4 + $0x6c8] sm:$0xff]
        %v2360 = vld [vmem:[#allocation4 + $0x6d0] sm:$0xff]
        %v2361 = vld [vmem:[#allocation4 + $0x6d8] sm:$0xff]
        %v2362 = vld [vmem:[#allocation4 + $0x6e0] sm:$0xff]
        %v2363 = vld [vmem:[#allocation4 + $0x6e8] sm:$0xff]
        %v2364 = vld [vmem:[#allocation4 + $0x6f0] sm:$0xff]
        %v2365 = vld [vmem:[#allocation4 + $0x6f8] sm:$0xff]
        %v2366 = vld [vmem:[#allocation4 + $0x700] sm:$0xff]
        %v2367 = vld [vmem:[#allocation4 + $0x708] sm:$0xff]
        %v2368 = vld [vmem:[#allocation4 + $0x710] sm:$0xff]
        %v2369 = vld [vmem:[#allocation4 + $0x718] sm:$0xff]
        %v2370 = vld [vmem:[#allocation4 + $0x720] sm:$0xff]
        %v2371 = vld [vmem:[#allocation4 + $0x728] sm:$0xff]
        %v2372 = vld [vmem:[#allocation4 + $0x730] sm:$0xff]
        %v2373 = vld [vmem:[#allocation4 + $0x738] sm:$0xff]
        %v2374 = vld [vmem:[#allocation4 + $0x740] sm:$0xff]
        %v2375 = vld [vmem:[#allocation4 + $0x748] sm:$0xff]
        %v2376 = vld [vmem:[#allocation4 + $0x750] sm:$0xff]
        %v2377 = vld [vmem:[#allocation4 + $0x758] sm:$0xff]
        %v2378 = vld [vmem:[#allocation4 + $0x760] sm:$0xff]
        %v2379 = vld [vmem:[#allocation4 + $0x768] sm:$0xff]
        %v2380 = vld [vmem:[#allocation4 + $0x770] sm:$0xff]
        %v2381 = vld [vmem:[#allocation4 + $0x778] sm:$0xff]
        %v2382 = vld [vmem:[#allocation4 + $0x780] sm:$0xff]
        %v2383 = vld [vmem:[#allocation4 + $0x788] sm:$0xff]
        %v2384 = vld [vmem:[#allocation4 + $0x790] sm:$0xff]
        %v2385 = vld [vmem:[#allocation4 + $0x798] sm:$0xff]
        %v2386 = vld [vmem:[#allocation4 + $0x7a0] sm:$0xff]
        %v2387 = vld [vmem:[#allocation4 + $0x7a8] sm:$0xff]
        %v2388 = vld [vmem:[#allocation4 + $0x7b0] sm:$0xff]
        %v2389 = vld [vmem:[#allocation4 + $0x7b8] sm:$0xff]
        %v2390 = vld [vmem:[#allocation4 + $0x7c0] sm:$0xff]
        %v2391 = vld [vmem:[#allocation4 + $0x7c8] sm:$0xff]
        %v2392 = vld [vmem:[#allocation4 + $0x7d0] sm:$0xff]
        %v2393 = vld [vmem:[#allocation4 + $0x7d8] sm:$0xff]
        %v2394 = vld [vmem:[#allocation4 + $0x7e0] sm:$0xff]
        %v2395 = vld [vmem:[#allocation4 + $0x7e8] sm:$0xff]
        %v2396 = vld [vmem:[#allocation4 + $0x7f0] sm:$0xff]
        %v2397 = vld [vmem:[#allocation4 + $0x7f8] sm:$0xff]
        %v2398 = vld [vmem:[#allocation9 + $0xa] sm:$0xf]
        %v2655 = vunpack.c.l.b16 %v2142
        %v2656 = vunpack.c.h.b16 %v2142
        %v2657 = vunpack.c.l.b16 %v2143
        %v2658 = vunpack.c.h.b16 %v2143
        %v2659 = vunpack.c.l.b16 %v2144
        %v2660 = vunpack.c.h.b16 %v2144
        %v2661 = vunpack.c.l.b16 %v2145
        %v2662 = vunpack.c.h.b16 %v2145
        %v2663 = vunpack.c.l.b16 %v2146
        %v2664 = vunpack.c.h.b16 %v2146
        %v2665 = vunpack.c.l.b16 %v2147
        %v2666 = vunpack.c.h.b16 %v2147
        %v2667 = vunpack.c.l.b16 %v2148
        %v2668 = vunpack.c.h.b16 %v2148
        %v2669 = vunpack.c.l.b16 %v2149
        %v2670 = vunpack.c.h.b16 %v2149
        %v2671 = vunpack.c.l.b16 %v2150
        %v2672 = vunpack.c.h.b16 %v2150
        %v2673 = vunpack.c.l.b16 %v2151
        %v2674 = vunpack.c.h.b16 %v2151
        %v2675 = vunpack.c.l.b16 %v2152
        %v2676 = vunpack.c.h.b16 %v2152
        %v2677 = vunpack.c.l.b16 %v2153
        %v2678 = vunpack.c.h.b16 %v2153
        %v2679 = vunpack.c.l.b16 %v2154
        %v2680 = vunpack.c.h.b16 %v2154
        %v2681 = vunpack.c.l.b16 %v2155
        %v2682 = vunpack.c.h.b16 %v2155
        %v2683 = vunpack.c.l.b16 %v2156
        %v2684 = vunpack.c.h.b16 %v2156
        %v2685 = vunpack.c.l.b16 %v2157
        %v2686 = vunpack.c.h.b16 %v2157
        %v2687 = vunpack.c.l.b16 %v2158
        %v2688 = vunpack.c.h.b16 %v2158
        %v2689 = vunpack.c.l.b16 %v2159
        %v2690 = vunpack.c.h.b16 %v2159
        %v2691 = vunpack.c.l.b16 %v2160
        %v2692 = vunpack.c.h.b16 %v2160
        %v2693 = vunpack.c.l.b16 %v2161
        %v2694 = vunpack.c.h.b16 %v2161
        %v2695 = vunpack.c.l.b16 %v2162
        %v2696 = vunpack.c.h.b16 %v2162
        %v2697 = vunpack.c.l.b16 %v2163
        %v2698 = vunpack.c.h.b16 %v2163
        %v2699 = vunpack.c.l.b16 %v2164
        %v2700 = vunpack.c.h.b16 %v2164
        %v2701 = vunpack.c.l.b16 %v2165
        %v2702 = vunpack.c.h.b16 %v2165
        %v2703 = vunpack.c.l.b16 %v2166
        %v2704 = vunpack.c.h.b16 %v2166
        %v2705 = vunpack.c.l.b16 %v2167
        %v2706 = vunpack.c.h.b16 %v2167
        %v2707 = vunpack.c.l.b16 %v2168
        %v2708 = vunpack.c.h.b16 %v2168
        %v2709 = vunpack.c.l.b16 %v2169
        %v2710 = vunpack.c.h.b16 %v2169
        %v2711 = vunpack.c.l.b16 %v2170
        %v2712 = vunpack.c.h.b16 %v2170
        %v2713 = vunpack.c.l.b16 %v2171
        %v2714 = vunpack.c.h.b16 %v2171
        %v2715 = vunpack.c.l.b16 %v2172
        %v2716 = vunpack.c.h.b16 %v2172
        %v2717 = vunpack.c.l.b16 %v2173
        %v2718 = vunpack.c.h.b16 %v2173
        %v2719 = vunpack.c.l.b16 %v2174
        %v2720 = vunpack.c.h.b16 %v2174
        %v2721 = vunpack.c.l.b16 %v2175
        %v2722 = vunpack.c.h.b16 %v2175
        %v2723 = vunpack.c.l.b16 %v2176
        %v2724 = vunpack.c.h.b16 %v2176
        %v2725 = vunpack.c.l.b16 %v2177
        %v2726 = vunpack.c.h.b16 %v2177
        %v2727 = vunpack.c.l.b16 %v2178
        %v2728 = vunpack.c.h.b16 %v2178
        %v2729 = vunpack.c.l.b16 %v2179
        %v2730 = vunpack.c.h.b16 %v2179
        %v2731 = vunpack.c.l.b16 %v2180
        %v2732 = vunpack.c.h.b16 %v2180
        %v2733 = vunpack.c.l.b16 %v2181
        %v2734 = vunpack.c.h.b16 %v2181
        %v2735 = vunpack.c.l.b16 %v2182
        %v2736 = vunpack.c.h.b16 %v2182
        %v2737 = vunpack.c.l.b16 %v2183
        %v2738 = vunpack.c.h.b16 %v2183
        %v2739 = vunpack.c.l.b16 %v2184
        %v2740 = vunpack.c.h.b16 %v2184
        %v2741 = vunpack.c.l.b16 %v2185
        %v2742 = vunpack.c.h.b16 %v2185
        %v2743 = vunpack.c.l.b16 %v2186
        %v2744 = vunpack.c.h.b16 %v2186
        %v2745 = vunpack.c.l.b16 %v2187
        %v2746 = vunpack.c.h.b16 %v2187
        %v2747 = vunpack.c.l.b16 %v2188
        %v2748 = vunpack.c.h.b16 %v2188
        %v2749 = vunpack.c.l.b16 %v2189
        %v2750 = vunpack.c.h.b16 %v2189
        %v2751 = vunpack.c.l.b16 %v2190
        %v2752 = vunpack.c.h.b16 %v2190
        %v2753 = vunpack.c.l.b16 %v2191
        %v2754 = vunpack.c.h.b16 %v2191
        %v2755 = vunpack.c.l.b16 %v2192
        %v2756 = vunpack.c.h.b16 %v2192
        %v2757 = vunpack.c.l.b16 %v2193
        %v2758 = vunpack.c.h.b16 %v2193
        %v2759 = vunpack.c.l.b16 %v2194
        %v2760 = vunpack.c.h.b16 %v2194
        %v2761 = vunpack.c.l.b16 %v2195
        %v2762 = vunpack.c.h.b16 %v2195
        %v2763 = vunpack.c.l.b16 %v2196
        %v2764 = vunpack.c.h.b16 %v2196
        %v2765 = vunpack.c.l.b16 %v2197
        %v2766 = vunpack.c.h.b16 %v2197
        %v2767 = vunpack.c.l.b16 %v2198
        %v2768 = vunpack.c.h.b16 %v2198
        %v2769 = vunpack.c.l.b16 %v2199
        %v2770 = vunpack.c.h.b16 %v2199
        %v2771 = vunpack.c.l.b16 %v2200
        %v2772 = vunpack.c.h.b16 %v2200
        %v2773 = vunpack.c.l.b16 %v2201
        %v2774 = vunpack.c.h.b16 %v2201
        %v2775 = vunpack.c.l.b16 %v2202
        %v2776 = vunpack.c.h.b16 %v2202
        %v2777 = vunpack.c.l.b16 %v2203
        %v2778 = vunpack.c.h.b16 %v2203
        %v2779 = vunpack.c.l.b16 %v2204
        %v2780 = vunpack.c.h.b16 %v2204
        %v2781 = vunpack.c.l.b16 %v2205
        %v2782 = vunpack.c.h.b16 %v2205
        %v2783 = vunpack.c.l.b16 %v2206
        %v2784 = vunpack.c.h.b16 %v2206
        %v2785 = vunpack.c.l.b16 %v2207
        %v2786 = vunpack.c.h.b16 %v2207
        %v2787 = vunpack.c.l.b16 %v2208
        %v2788 = vunpack.c.h.b16 %v2208
        %v2789 = vunpack.c.l.b16 %v2209
        %v2790 = vunpack.c.h.b16 %v2209
        %v2791 = vunpack.c.l.b16 %v2210
        %v2792 = vunpack.c.h.b16 %v2210
        %v2793 = vunpack.c.l.b16 %v2211
        %v2794 = vunpack.c.h.b16 %v2211
        %v2795 = vunpack.c.l.b16 %v2212
        %v2796 = vunpack.c.h.b16 %v2212
        %v2797 = vunpack.c.l.b16 %v2213
        %v2798 = vunpack.c.h.b16 %v2213
        %v2799 = vunpack.c.l.b16 %v2214
        %v2800 = vunpack.c.h.b16 %v2214
        %v2801 = vunpack.c.l.b16 %v2215
        %v2802 = vunpack.c.h.b16 %v2215
        %v2803 = vunpack.c.l.b16 %v2216
        %v2804 = vunpack.c.h.b16 %v2216
        %v2805 = vunpack.c.l.b16 %v2217
        %v2806 = vunpack.c.h.b16 %v2217
        %v2807 = vunpack.c.l.b16 %v2218
        %v2808 = vunpack.c.h.b16 %v2218
        %v2809 = vunpack.c.l.b16 %v2219
        %v2810 = vunpack.c.h.b16 %v2219
        %v2811 = vunpack.c.l.b16 %v2220
        %v2812 = vunpack.c.h.b16 %v2220
        %v2813 = vunpack.c.l.b16 %v2221
        %v2814 = vunpack.c.h.b16 %v2221
        %v2815 = vunpack.c.l.b16 %v2222
        %v2816 = vunpack.c.h.b16 %v2222
        %v2817 = vunpack.c.l.b16 %v2223
        %v2818 = vunpack.c.h.b16 %v2223
        %v2819 = vunpack.c.l.b16 %v2224
        %v2820 = vunpack.c.h.b16 %v2224
        %v2821 = vunpack.c.l.b16 %v2225
        %v2822 = vunpack.c.h.b16 %v2225
        %v2823 = vunpack.c.l.b16 %v2226
        %v2824 = vunpack.c.h.b16 %v2226
        %v2825 = vunpack.c.l.b16 %v2227
        %v2826 = vunpack.c.h.b16 %v2227
        %v2827 = vunpack.c.l.b16 %v2228
        %v2828 = vunpack.c.h.b16 %v2228
        %v2829 = vunpack.c.l.b16 %v2229
        %v2830 = vunpack.c.h.b16 %v2229
        %v2831 = vunpack.c.l.b16 %v2230
        %v2832 = vunpack.c.h.b16 %v2230
        %v2833 = vunpack.c.l.b16 %v2231
        %v2834 = vunpack.c.h.b16 %v2231
        %v2835 = vunpack.c.l.b16 %v2232
        %v2836 = vunpack.c.h.b16 %v2232
        %v2837 = vunpack.c.l.b16 %v2233
        %v2838 = vunpack.c.h.b16 %v2233
        %v2839 = vunpack.c.l.b16 %v2234
        %v2840 = vunpack.c.h.b16 %v2234
        %v2841 = vunpack.c.l.b16 %v2235
        %v2842 = vunpack.c.h.b16 %v2235
        %v2843 = vunpack.c.l.b16 %v2236
        %v2844 = vunpack.c.h.b16 %v2236
        %v2845 = vunpack.c.l.b16 %v2237
        %v2846 = vunpack.c.h.b16 %v2237
        %v2847 = vunpack.c.l.b16 %v2238
        %v2848 = vunpack.c.h.b16 %v2238
        %v2849 = vunpack.c.l.b16 %v2239
        %v2850 = vunpack.c.h.b16 %v2239
        %v2851 = vunpack.c.l.b16 %v2240
        %v2852 = vunpack.c.h.b16 %v2240
        %v2853 = vunpack.c.l.b16 %v2241
        %v2854 = vunpack.c.h.b16 %v2241
        %v2855 = vunpack.c.l.b16 %v2242
        %v2856 = vunpack.c.h.b16 %v2242
        %v2857 = vunpack.c.l.b16 %v2243
        %v2858 = vunpack.c.h.b16 %v2243
        %v2859 = vunpack.c.l.b16 %v2244
        %v2860 = vunpack.c.h.b16 %v2244
        %v2861 = vunpack.c.l.b16 %v2245
        %v2862 = vunpack.c.h.b16 %v2245
        %v2863 = vunpack.c.l.b16 %v2246
        %v2864 = vunpack.c.h.b16 %v2246
        %v2865 = vunpack.c.l.b16 %v2247
        %v2866 = vunpack.c.h.b16 %v2247
        %v2867 = vunpack.c.l.b16 %v2248
        %v2868 = vunpack.c.h.b16 %v2248
        %v2869 = vunpack.c.l.b16 %v2249
        %v2870 = vunpack.c.h.b16 %v2249
        %v2871 = vunpack.c.l.b16 %v2250
        %v2872 = vunpack.c.h.b16 %v2250
        %v2873 = vunpack.c.l.b16 %v2251
        %v2874 = vunpack.c.h.b16 %v2251
        %v2875 = vunpack.c.l.b16 %v2252
        %v2876 = vunpack.c.h.b16 %v2252
        %v2877 = vunpack.c.l.b16 %v2253
        %v2878 = vunpack.c.h.b16 %v2253
        %v2879 = vunpack.c.l.b16 %v2254
        %v2880 = vunpack.c.h.b16 %v2254
        %v2881 = vunpack.c.l.b16 %v2255
        %v2882 = vunpack.c.h.b16 %v2255
        %v2883 = vunpack.c.l.b16 %v2256
        %v2884 = vunpack.c.h.b16 %v2256
        %v2885 = vunpack.c.l.b16 %v2257
        %v2886 = vunpack.c.h.b16 %v2257
        %v2887 = vunpack.c.l.b16 %v2258
        %v2888 = vunpack.c.h.b16 %v2258
        %v2889 = vunpack.c.l.b16 %v2259
        %v2890 = vunpack.c.h.b16 %v2259
        %v2891 = vunpack.c.l.b16 %v2260
        %v2892 = vunpack.c.h.b16 %v2260
        %v2893 = vunpack.c.l.b16 %v2261
        %v2894 = vunpack.c.h.b16 %v2261
        %v2895 = vunpack.c.l.b16 %v2262
        %v2896 = vunpack.c.h.b16 %v2262
        %v2897 = vunpack.c.l.b16 %v2263
        %v2898 = vunpack.c.h.b16 %v2263
        %v2899 = vunpack.c.l.b16 %v2264
        %v2900 = vunpack.c.h.b16 %v2264
        %v2901 = vunpack.c.l.b16 %v2265
        %v2902 = vunpack.c.h.b16 %v2265
        %v2903 = vunpack.c.l.b16 %v2266
        %v2904 = vunpack.c.h.b16 %v2266
        %v2905 = vunpack.c.l.b16 %v2267
        %v2906 = vunpack.c.h.b16 %v2267
        %v2907 = vunpack.c.l.b16 %v2268
        %v2908 = vunpack.c.h.b16 %v2268
        %v2909 = vunpack.c.l.b16 %v2269
        %v2910 = vunpack.c.h.b16 %v2269
        %v2911 = vunpack.c.l.b16 %v2270
        %v2912 = vunpack.c.h.b16 %v2270
        %v2913 = vunpack.c.l.b16 %v2271
        %v2914 = vunpack.c.h.b16 %v2271
        %v2915 = vunpack.c.l.b16 %v2272
        %v2916 = vunpack.c.h.b16 %v2272
        %v2917 = vunpack.c.l.b16 %v2273
        %v2918 = vunpack.c.h.b16 %v2273
        %v2919 = vunpack.c.l.b16 %v2274
        %v2920 = vunpack.c.h.b16 %v2274
        %v2921 = vunpack.c.l.b16 %v2275
        %v2922 = vunpack.c.h.b16 %v2275
        %v2923 = vunpack.c.l.b16 %v2276
        %v2924 = vunpack.c.h.b16 %v2276
        %v2925 = vunpack.c.l.b16 %v2277
        %v2926 = vunpack.c.h.b16 %v2277
        %v2927 = vunpack.c.l.b16 %v2278
        %v2928 = vunpack.c.h.b16 %v2278
        %v2929 = vunpack.c.l.b16 %v2279
        %v2930 = vunpack.c.h.b16 %v2279
        %v2931 = vunpack.c.l.b16 %v2280
        %v2932 = vunpack.c.h.b16 %v2280
        %v2933 = vunpack.c.l.b16 %v2281
        %v2934 = vunpack.c.h.b16 %v2281
        %v2935 = vunpack.c.l.b16 %v2282
        %v2936 = vunpack.c.h.b16 %v2282
        %v2937 = vunpack.c.l.b16 %v2283
        %v2938 = vunpack.c.h.b16 %v2283
        %v2939 = vunpack.c.l.b16 %v2284
        %v2940 = vunpack.c.h.b16 %v2284
        %v2941 = vunpack.c.l.b16 %v2285
        %v2942 = vunpack.c.h.b16 %v2285
        %v2943 = vunpack.c.l.b16 %v2286
        %v2944 = vunpack.c.h.b16 %v2286
        %v2945 = vunpack.c.l.b16 %v2287
        %v2946 = vunpack.c.h.b16 %v2287
        %v2947 = vunpack.c.l.b16 %v2288
        %v2948 = vunpack.c.h.b16 %v2288
        %v2949 = vunpack.c.l.b16 %v2289
        %v2950 = vunpack.c.h.b16 %v2289
        %v2951 = vunpack.c.l.b16 %v2290
        %v2952 = vunpack.c.h.b16 %v2290
        %v2953 = vunpack.c.l.b16 %v2291
        %v2954 = vunpack.c.h.b16 %v2291
        %v2955 = vunpack.c.l.b16 %v2292
        %v2956 = vunpack.c.h.b16 %v2292
        %v2957 = vunpack.c.l.b16 %v2293
        %v2958 = vunpack.c.h.b16 %v2293
        %v2959 = vunpack.c.l.b16 %v2294
        %v2960 = vunpack.c.h.b16 %v2294
        %v2961 = vunpack.c.l.b16 %v2295
        %v2962 = vunpack.c.h.b16 %v2295
        %v2963 = vunpack.c.l.b16 %v2296
        %v2964 = vunpack.c.h.b16 %v2296
        %v2965 = vunpack.c.l.b16 %v2297
        %v2966 = vunpack.c.h.b16 %v2297
        %v2967 = vunpack.c.l.b16 %v2298
        %v2968 = vunpack.c.h.b16 %v2298
        %v2969 = vunpack.c.l.b16 %v2299
        %v2970 = vunpack.c.h.b16 %v2299
        %v2971 = vunpack.c.l.b16 %v2300
        %v2972 = vunpack.c.h.b16 %v2300
        %v2973 = vunpack.c.l.b16 %v2301
        %v2974 = vunpack.c.h.b16 %v2301
        %v2975 = vunpack.c.l.b16 %v2302
        %v2976 = vunpack.c.h.b16 %v2302
        %v2977 = vunpack.c.l.b16 %v2303
        %v2978 = vunpack.c.h.b16 %v2303
        %v2979 = vunpack.c.l.b16 %v2304
        %v2980 = vunpack.c.h.b16 %v2304
        %v2981 = vunpack.c.l.b16 %v2305
        %v2982 = vunpack.c.h.b16 %v2305
        %v2983 = vunpack.c.l.b16 %v2306
        %v2984 = vunpack.c.h.b16 %v2306
        %v2985 = vunpack.c.l.b16 %v2307
        %v2986 = vunpack.c.h.b16 %v2307
        %v2987 = vunpack.c.l.b16 %v2308
        %v2988 = vunpack.c.h.b16 %v2308
        %v2989 = vunpack.c.l.b16 %v2309
        %v2990 = vunpack.c.h.b16 %v2309
        %v2991 = vunpack.c.l.b16 %v2310
        %v2992 = vunpack.c.h.b16 %v2310
        %v2993 = vunpack.c.l.b16 %v2311
        %v2994 = vunpack.c.h.b16 %v2311
        %v2995 = vunpack.c.l.b16 %v2312
        %v2996 = vunpack.c.h.b16 %v2312
        %v2997 = vunpack.c.l.b16 %v2313
        %v2998 = vunpack.c.h.b16 %v2313
        %v2999 = vunpack.c.l.b16 %v2314
        %v3000 = vunpack.c.h.b16 %v2314
        %v3001 = vunpack.c.l.b16 %v2315
        %v3002 = vunpack.c.h.b16 %v2315
        %v3003 = vunpack.c.l.b16 %v2316
        %v3004 = vunpack.c.h.b16 %v2316
        %v3005 = vunpack.c.l.b16 %v2317
        %v3006 = vunpack.c.h.b16 %v2317
        %v3007 = vunpack.c.l.b16 %v2318
        %v3008 = vunpack.c.h.b16 %v2318
        %v3009 = vunpack.c.l.b16 %v2319
        %v3010 = vunpack.c.h.b16 %v2319
        %v3011 = vunpack.c.l.b16 %v2320
        %v3012 = vunpack.c.h.b16 %v2320
        %v3013 = vunpack.c.l.b16 %v2321
        %v3014 = vunpack.c.h.b16 %v2321
        %v3015 = vunpack.c.l.b16 %v2322
        %v3016 = vunpack.c.h.b16 %v2322
        %v3017 = vunpack.c.l.b16 %v2323
        %v3018 = vunpack.c.h.b16 %v2323
        %v3019 = vunpack.c.l.b16 %v2324
        %v3020 = vunpack.c.h.b16 %v2324
        %v3021 = vunpack.c.l.b16 %v2325
        %v3022 = vunpack.c.h.b16 %v2325
        %v3023 = vunpack.c.l.b16 %v2326
        %v3024 = vunpack.c.h.b16 %v2326
        %v3025 = vunpack.c.l.b16 %v2327
        %v3026 = vunpack.c.h.b16 %v2327
        %v3027 = vunpack.c.l.b16 %v2328
        %v3028 = vunpack.c.h.b16 %v2328
        %v3029 = vunpack.c.l.b16 %v2329
        %v3030 = vunpack.c.h.b16 %v2329
        %v3031 = vunpack.c.l.b16 %v2330
        %v3032 = vunpack.c.h.b16 %v2330
        %v3033 = vunpack.c.l.b16 %v2331
        %v3034 = vunpack.c.h.b16 %v2331
        %v3035 = vunpack.c.l.b16 %v2332
        %v3036 = vunpack.c.h.b16 %v2332
        %v3037 = vunpack.c.l.b16 %v2333
        %v3038 = vunpack.c.h.b16 %v2333
        %v3039 = vunpack.c.l.b16 %v2334
        %v3040 = vunpack.c.h.b16 %v2334
        %v3041 = vunpack.c.l.b16 %v2335
        %v3042 = vunpack.c.h.b16 %v2335
        %v3043 = vunpack.c.l.b16 %v2336
        %v3044 = vunpack.c.h.b16 %v2336
        %v3045 = vunpack.c.l.b16 %v2337
        %v3046 = vunpack.c.h.b16 %v2337
        %v3047 = vunpack.c.l.b16 %v2338
        %v3048 = vunpack.c.h.b16 %v2338
        %v3049 = vunpack.c.l.b16 %v2339
        %v3050 = vunpack.c.h.b16 %v2339
        %v3051 = vunpack.c.l.b16 %v2340
        %v3052 = vunpack.c.h.b16 %v2340
        %v3053 = vunpack.c.l.b16 %v2341
        %v3054 = vunpack.c.h.b16 %v2341
        %v3055 = vunpack.c.l.b16 %v2342
        %v3056 = vunpack.c.h.b16 %v2342
        %v3057 = vunpack.c.l.b16 %v2343
        %v3058 = vunpack.c.h.b16 %v2343
        %v3059 = vunpack.c.l.b16 %v2344
        %v3060 = vunpack.c.h.b16 %v2344
        %v3061 = vunpack.c.l.b16 %v2345
        %v3062 = vunpack.c.h.b16 %v2345
        %v3063 = vunpack.c.l.b16 %v2346
        %v3064 = vunpack.c.h.b16 %v2346
        %v3065 = vunpack.c.l.b16 %v2347
        %v3066 = vunpack.c.h.b16 %v2347
        %v3067 = vunpack.c.l.b16 %v2348
        %v3068 = vunpack.c.h.b16 %v2348
        %v3069 = vunpack.c.l.b16 %v2349
        %v3070 = vunpack.c.h.b16 %v2349
        %v3071 = vunpack.c.l.b16 %v2350
        %v3072 = vunpack.c.h.b16 %v2350
        %v3073 = vunpack.c.l.b16 %v2351
        %v3074 = vunpack.c.h.b16 %v2351
        %v3075 = vunpack.c.l.b16 %v2352
        %v3076 = vunpack.c.h.b16 %v2352
        %v3077 = vunpack.c.l.b16 %v2353
        %v3078 = vunpack.c.h.b16 %v2353
        %v3079 = vunpack.c.l.b16 %v2354
        %v3080 = vunpack.c.h.b16 %v2354
        %v3081 = vunpack.c.l.b16 %v2355
        %v3082 = vunpack.c.h.b16 %v2355
        %v3083 = vunpack.c.l.b16 %v2356
        %v3084 = vunpack.c.h.b16 %v2356
        %v3085 = vunpack.c.l.b16 %v2357
        %v3086 = vunpack.c.h.b16 %v2357
        %v3087 = vunpack.c.l.b16 %v2358
        %v3088 = vunpack.c.h.b16 %v2358
        %v3089 = vunpack.c.l.b16 %v2359
        %v3090 = vunpack.c.h.b16 %v2359
        %v3091 = vunpack.c.l.b16 %v2360
        %v3092 = vunpack.c.h.b16 %v2360
        %v3093 = vunpack.c.l.b16 %v2361
        %v3094 = vunpack.c.h.b16 %v2361
        %v3095 = vunpack.c.l.b16 %v2362
        %v3096 = vunpack.c.h.b16 %v2362
        %v3097 = vunpack.c.l.b16 %v2363
        %v3098 = vunpack.c.h.b16 %v2363
        %v3099 = vunpack.c.l.b16 %v2364
        %v3100 = vunpack.c.h.b16 %v2364
        %v3101 = vunpack.c.l.b16 %v2365
        %v3102 = vunpack.c.h.b16 %v2365
        %v3103 = vunpack.c.l.b16 %v2366
        %v3104 = vunpack.c.h.b16 %v2366
        %v3105 = vunpack.c.l.b16 %v2367
        %v3106 = vunpack.c.h.b16 %v2367
        %v3107 = vunpack.c.l.b16 %v2368
        %v3108 = vunpack.c.h.b16 %v2368
        %v3109 = vunpack.c.l.b16 %v2369
        %v3110 = vunpack.c.h.b16 %v2369
        %v3111 = vunpack.c.l.b16 %v2370
        %v3112 = vunpack.c.h.b16 %v2370
        %v3113 = vunpack.c.l.b16 %v2371
        %v3114 = vunpack.c.h.b16 %v2371
        %v3115 = vunpack.c.l.b16 %v2372
        %v3116 = vunpack.c.h.b16 %v2372
        %v3117 = vunpack.c.l.b16 %v2373
        %v3118 = vunpack.c.h.b16 %v2373
        %v3119 = vunpack.c.l.b16 %v2374
        %v3120 = vunpack.c.h.b16 %v2374
        %v3121 = vunpack.c.l.b16 %v2375
        %v3122 = vunpack.c.h.b16 %v2375
        %v3123 = vunpack.c.l.b16 %v2376
        %v3124 = vunpack.c.h.b16 %v2376
        %v3125 = vunpack.c.l.b16 %v2377
        %v3126 = vunpack.c.h.b16 %v2377
        %v3127 = vunpack.c.l.b16 %v2378
        %v3128 = vunpack.c.h.b16 %v2378
        %v3129 = vunpack.c.l.b16 %v2379
        %v3130 = vunpack.c.h.b16 %v2379
        %v3131 = vunpack.c.l.b16 %v2380
        %v3132 = vunpack.c.h.b16 %v2380
        %v3133 = vunpack.c.l.b16 %v2381
        %v3134 = vunpack.c.h.b16 %v2381
        %v3135 = vunpack.c.l.b16 %v2382
        %v3136 = vunpack.c.h.b16 %v2382
        %v3137 = vunpack.c.l.b16 %v2383
        %v3138 = vunpack.c.h.b16 %v2383
        %v3139 = vunpack.c.l.b16 %v2384
        %v3140 = vunpack.c.h.b16 %v2384
        %v3141 = vunpack.c.l.b16 %v2385
        %v3142 = vunpack.c.h.b16 %v2385
        %v3143 = vunpack.c.l.b16 %v2386
        %v3144 = vunpack.c.h.b16 %v2386
        %v3145 = vunpack.c.l.b16 %v2387
        %v3146 = vunpack.c.h.b16 %v2387
        %v3147 = vunpack.c.l.b16 %v2388
        %v3148 = vunpack.c.h.b16 %v2388
        %v3149 = vunpack.c.l.b16 %v2389
        %v3150 = vunpack.c.h.b16 %v2389
        %v3151 = vunpack.c.l.b16 %v2390
        %v3152 = vunpack.c.h.b16 %v2390
        %v3153 = vunpack.c.l.b16 %v2391
        %v3154 = vunpack.c.h.b16 %v2391
        %v3155 = vunpack.c.l.b16 %v2392
        %v3156 = vunpack.c.h.b16 %v2392
        %v3157 = vunpack.c.l.b16 %v2393
        %v3158 = vunpack.c.h.b16 %v2393
        %v3159 = vunpack.c.l.b16 %v2394
        %v3160 = vunpack.c.h.b16 %v2394
        %v3161 = vunpack.c.l.b16 %v2395
        %v3162 = vunpack.c.h.b16 %v2395
        %v3163 = vunpack.c.l.b16 %v2396
        %v3164 = vunpack.c.h.b16 %v2396
        %v3165 = vunpack.c.l.b16 %v2397
        %v3166 = vunpack.c.h.b16 %v2397
        %v3167 = vpack.c.b16 %v2659, %v2655
        %v3168 = vpack.c.b16 %v2660, %v2656
        %v3169 = vpack.c.b16 %v2661, %v2657
        %v3170 = vpack.c.b16 %v2662, %v2658
        %v3171 = vpack.c.b16 %v2667, %v2663
        %v3172 = vpack.c.b16 %v2668, %v2664
        %v3173 = vpack.c.b16 %v2669, %v2665
        %v3174 = vpack.c.b16 %v2670, %v2666
        %v3175 = vpack.c.b16 %v2675, %v2671
        %v3176 = vpack.c.b16 %v2676, %v2672
        %v3177 = vpack.c.b16 %v2677, %v2673
        %v3178 = vpack.c.b16 %v2678, %v2674
        %v3179 = vpack.c.b16 %v2683, %v2679
        %v3180 = vpack.c.b16 %v2684, %v2680
        %v3181 = vpack.c.b16 %v2685, %v2681
        %v3182 = vpack.c.b16 %v2686, %v2682
        %v3183 = vpack.c.b16 %v2691, %v2687
        %v3184 = vpack.c.b16 %v2692, %v2688
        %v3185 = vpack.c.b16 %v2693, %v2689
        %v3186 = vpack.c.b16 %v2694, %v2690
        %v3187 = vpack.c.b16 %v2699, %v2695
        %v3188 = vpack.c.b16 %v2700, %v2696
        %v3189 = vpack.c.b16 %v2701, %v2697
        %v3190 = vpack.c.b16 %v2702, %v2698
        %v3191 = vpack.c.b16 %v2707, %v2703
        %v3192 = vpack.c.b16 %v2708, %v2704
        %v3193 = vpack.c.b16 %v2709, %v2705
        %v3194 = vpack.c.b16 %v2710, %v2706
        %v3195 = vpack.c.b16 %v2715, %v2711
        %v3196 = vpack.c.b16 %v2716, %v2712
        %v3197 = vpack.c.b16 %v2717, %v2713
        %v3198 = vpack.c.b16 %v2718, %v2714
        %v3199 = vpack.c.b16 %v2723, %v2719
        %v3200 = vpack.c.b16 %v2724, %v2720
        %v3201 = vpack.c.b16 %v2725, %v2721
        %v3202 = vpack.c.b16 %v2726, %v2722
        %v3203 = vpack.c.b16 %v2731, %v2727
        %v3204 = vpack.c.b16 %v2732, %v2728
        %v3205 = vpack.c.b16 %v2733, %v2729
        %v3206 = vpack.c.b16 %v2734, %v2730
        %v3207 = vpack.c.b16 %v2739, %v2735
        %v3208 = vpack.c.b16 %v2740, %v2736
        %v3209 = vpack.c.b16 %v2741, %v2737
        %v3210 = vpack.c.b16 %v2742, %v2738
        %v3211 = vpack.c.b16 %v2747, %v2743
        %v3212 = vpack.c.b16 %v2748, %v2744
        %v3213 = vpack.c.b16 %v2749, %v2745
        %v3214 = vpack.c.b16 %v2750, %v2746
        %v3215 = vpack.c.b16 %v2755, %v2751
        %v3216 = vpack.c.b16 %v2756, %v2752
        %v3217 = vpack.c.b16 %v2757, %v2753
        %v3218 = vpack.c.b16 %v2758, %v2754
        %v3219 = vpack.c.b16 %v2763, %v2759
        %v3220 = vpack.c.b16 %v2764, %v2760
        %v3221 = vpack.c.b16 %v2765, %v2761
        %v3222 = vpack.c.b16 %v2766, %v2762
        %v3223 = vpack.c.b16 %v2771, %v2767
        %v3224 = vpack.c.b16 %v2772, %v2768
        %v3225 = vpack.c.b16 %v2773, %v2769
        %v3226 = vpack.c.b16 %v2774, %v2770
        %v3227 = vpack.c.b16 %v2779, %v2775
        %v3228 = vpack.c.b16 %v2780, %v2776
        %v3229 = vpack.c.b16 %v2781, %v2777
        %v3230 = vpack.c.b16 %v2782, %v2778
        %v3231 = vpack.c.b16 %v2787, %v2783
        %v3232 = vpack.c.b16 %v2788, %v2784
        %v3233 = vpack.c.b16 %v2789, %v2785
        %v3234 = vpack.c.b16 %v2790, %v2786
        %v3235 = vpack.c.b16 %v2795, %v2791
        %v3236 = vpack.c.b16 %v2796, %v2792
        %v3237 = vpack.c.b16 %v2797, %v2793
        %v3238 = vpack.c.b16 %v2798, %v2794
        %v3239 = vpack.c.b16 %v2803, %v2799
        %v3240 = vpack.c.b16 %v2804, %v2800
        %v3241 = vpack.c.b16 %v2805, %v2801
        %v3242 = vpack.c.b16 %v2806, %v2802
        %v3243 = vpack.c.b16 %v2811, %v2807
        %v3244 = vpack.c.b16 %v2812, %v2808
        %v3245 = vpack.c.b16 %v2813, %v2809
        %v3246 = vpack.c.b16 %v2814, %v2810
        %v3247 = vpack.c.b16 %v2819, %v2815
        %v3248 = vpack.c.b16 %v2820, %v2816
        %v3249 = vpack.c.b16 %v2821, %v2817
        %v3250 = vpack.c.b16 %v2822, %v2818
        %v3251 = vpack.c.b16 %v2827, %v2823
        %v3252 = vpack.c.b16 %v2828, %v2824
        %v3253 = vpack.c.b16 %v2829, %v2825
        %v3254 = vpack.c.b16 %v2830, %v2826
        %v3255 = vpack.c.b16 %v2835, %v2831
        %v3256 = vpack.c.b16 %v2836, %v2832
        %v3257 = vpack.c.b16 %v2837, %v2833
        %v3258 = vpack.c.b16 %v2838, %v2834
        %v3259 = vpack.c.b16 %v2843, %v2839
        %v3260 = vpack.c.b16 %v2844, %v2840
        %v3261 = vpack.c.b16 %v2845, %v2841
        %v3262 = vpack.c.b16 %v2846, %v2842
        %v3263 = vpack.c.b16 %v2851, %v2847
        %v3264 = vpack.c.b16 %v2852, %v2848
        %v3265 = vpack.c.b16 %v2853, %v2849
        %v3266 = vpack.c.b16 %v2854, %v2850
        %v3267 = vpack.c.b16 %v2859, %v2855
        %v3268 = vpack.c.b16 %v2860, %v2856
        %v3269 = vpack.c.b16 %v2861, %v2857
        %v3270 = vpack.c.b16 %v2862, %v2858
        %v3271 = vpack.c.b16 %v2867, %v2863
        %v3272 = vpack.c.b16 %v2868, %v2864
        %v3273 = vpack.c.b16 %v2869, %v2865
        %v3274 = vpack.c.b16 %v2870, %v2866
        %v3275 = vpack.c.b16 %v2875, %v2871
        %v3276 = vpack.c.b16 %v2876, %v2872
        %v3277 = vpack.c.b16 %v2877, %v2873
        %v3278 = vpack.c.b16 %v2878, %v2874
        %v3279 = vpack.c.b16 %v2883, %v2879
        %v3280 = vpack.c.b16 %v2884, %v2880
        %v3281 = vpack.c.b16 %v2885, %v2881
        %v3282 = vpack.c.b16 %v2886, %v2882
        %v3283 = vpack.c.b16 %v2891, %v2887
        %v3284 = vpack.c.b16 %v2892, %v2888
        %v3285 = vpack.c.b16 %v2893, %v2889
        %v3286 = vpack.c.b16 %v2894, %v2890
        %v3287 = vpack.c.b16 %v2899, %v2895
        %v3288 = vpack.c.b16 %v2900, %v2896
        %v3289 = vpack.c.b16 %v2901, %v2897
        %v3290 = vpack.c.b16 %v2902, %v2898
        %v3291 = vpack.c.b16 %v2907, %v2903
        %v3292 = vpack.c.b16 %v2908, %v2904
        %v3293 = vpack.c.b16 %v2909, %v2905
        %v3294 = vpack.c.b16 %v2910, %v2906
        %v3295 = vpack.c.b16 %v2915, %v2911
        %v3296 = vpack.c.b16 %v2916, %v2912
        %v3297 = vpack.c.b16 %v2917, %v2913
        %v3298 = vpack.c.b16 %v2918, %v2914
        %v3299 = vpack.c.b16 %v2923, %v2919
        %v3300 = vpack.c.b16 %v2924, %v2920
        %v3301 = vpack.c.b16 %v2925, %v2921
        %v3302 = vpack.c.b16 %v2926, %v2922
        %v3303 = vpack.c.b16 %v2931, %v2927
        %v3304 = vpack.c.b16 %v2932, %v2928
        %v3305 = vpack.c.b16 %v2933, %v2929
        %v3306 = vpack.c.b16 %v2934, %v2930
        %v3307 = vpack.c.b16 %v2939, %v2935
        %v3308 = vpack.c.b16 %v2940, %v2936
        %v3309 = vpack.c.b16 %v2941, %v2937
        %v3310 = vpack.c.b16 %v2942, %v2938
        %v3311 = vpack.c.b16 %v2947, %v2943
        %v3312 = vpack.c.b16 %v2948, %v2944
        %v3313 = vpack.c.b16 %v2949, %v2945
        %v3314 = vpack.c.b16 %v2950, %v2946
        %v3315 = vpack.c.b16 %v2955, %v2951
        %v3316 = vpack.c.b16 %v2956, %v2952
        %v3317 = vpack.c.b16 %v2957, %v2953
        %v3318 = vpack.c.b16 %v2958, %v2954
        %v3319 = vpack.c.b16 %v2963, %v2959
        %v3320 = vpack.c.b16 %v2964, %v2960
        %v3321 = vpack.c.b16 %v2965, %v2961
        %v3322 = vpack.c.b16 %v2966, %v2962
        %v3323 = vpack.c.b16 %v2971, %v2967
        %v3324 = vpack.c.b16 %v2972, %v2968
        %v3325 = vpack.c.b16 %v2973, %v2969
        %v3326 = vpack.c.b16 %v2974, %v2970
        %v3327 = vpack.c.b16 %v2979, %v2975
        %v3328 = vpack.c.b16 %v2980, %v2976
        %v3329 = vpack.c.b16 %v2981, %v2977
        %v3330 = vpack.c.b16 %v2982, %v2978
        %v3331 = vpack.c.b16 %v2987, %v2983
        %v3332 = vpack.c.b16 %v2988, %v2984
        %v3333 = vpack.c.b16 %v2989, %v2985
        %v3334 = vpack.c.b16 %v2990, %v2986
        %v3335 = vpack.c.b16 %v2995, %v2991
        %v3336 = vpack.c.b16 %v2996, %v2992
        %v3337 = vpack.c.b16 %v2997, %v2993
        %v3338 = vpack.c.b16 %v2998, %v2994
        %v3339 = vpack.c.b16 %v3003, %v2999
        %v3340 = vpack.c.b16 %v3004, %v3000
        %v3341 = vpack.c.b16 %v3005, %v3001
        %v3342 = vpack.c.b16 %v3006, %v3002
        %v3343 = vpack.c.b16 %v3011, %v3007
        %v3344 = vpack.c.b16 %v3012, %v3008
        %v3345 = vpack.c.b16 %v3013, %v3009
        %v3346 = vpack.c.b16 %v3014, %v3010
        %v3347 = vpack.c.b16 %v3019, %v3015
        %v3348 = vpack.c.b16 %v3020, %v3016
        %v3349 = vpack.c.b16 %v3021, %v3017
        %v3350 = vpack.c.b16 %v3022, %v3018
        %v3351 = vpack.c.b16 %v3027, %v3023
        %v3352 = vpack.c.b16 %v3028, %v3024
        %v3353 = vpack.c.b16 %v3029, %v3025
        %v3354 = vpack.c.b16 %v3030, %v3026
        %v3355 = vpack.c.b16 %v3035, %v3031
        %v3356 = vpack.c.b16 %v3036, %v3032
        %v3357 = vpack.c.b16 %v3037, %v3033
        %v3358 = vpack.c.b16 %v3038, %v3034
        %v3359 = vpack.c.b16 %v3043, %v3039
        %v3360 = vpack.c.b16 %v3044, %v3040
        %v3361 = vpack.c.b16 %v3045, %v3041
        %v3362 = vpack.c.b16 %v3046, %v3042
        %v3363 = vpack.c.b16 %v3051, %v3047
        %v3364 = vpack.c.b16 %v3052, %v3048
        %v3365 = vpack.c.b16 %v3053, %v3049
        %v3366 = vpack.c.b16 %v3054, %v3050
        %v3367 = vpack.c.b16 %v3059, %v3055
        %v3368 = vpack.c.b16 %v3060, %v3056
        %v3369 = vpack.c.b16 %v3061, %v3057
        %v3370 = vpack.c.b16 %v3062, %v3058
        %v3371 = vpack.c.b16 %v3067, %v3063
        %v3372 = vpack.c.b16 %v3068, %v3064
        %v3373 = vpack.c.b16 %v3069, %v3065
        %v3374 = vpack.c.b16 %v3070, %v3066
        %v3375 = vpack.c.b16 %v3075, %v3071
        %v3376 = vpack.c.b16 %v3076, %v3072
        %v3377 = vpack.c.b16 %v3077, %v3073
        %v3378 = vpack.c.b16 %v3078, %v3074
        %v3379 = vpack.c.b16 %v3083, %v3079
        %v3380 = vpack.c.b16 %v3084, %v3080
        %v3381 = vpack.c.b16 %v3085, %v3081
        %v3382 = vpack.c.b16 %v3086, %v3082
        %v3383 = vpack.c.b16 %v3091, %v3087
        %v3384 = vpack.c.b16 %v3092, %v3088
        %v3385 = vpack.c.b16 %v3093, %v3089
        %v3386 = vpack.c.b16 %v3094, %v3090
        %v3387 = vpack.c.b16 %v3099, %v3095
        %v3388 = vpack.c.b16 %v3100, %v3096
        %v3389 = vpack.c.b16 %v3101, %v3097
        %v3390 = vpack.c.b16 %v3102, %v3098
        %v3391 = vpack.c.b16 %v3107, %v3103
        %v3392 = vpack.c.b16 %v3108, %v3104
        %v3393 = vpack.c.b16 %v3109, %v3105
        %v3394 = vpack.c.b16 %v3110, %v3106
        %v3395 = vpack.c.b16 %v3115, %v3111
        %v3396 = vpack.c.b16 %v3116, %v3112
        %v3397 = vpack.c.b16 %v3117, %v3113
        %v3398 = vpack.c.b16 %v3118, %v3114
        %v3399 = vpack.c.b16 %v3123, %v3119
        %v3400 = vpack.c.b16 %v3124, %v3120
        %v3401 = vpack.c.b16 %v3125, %v3121
        %v3402 = vpack.c.b16 %v3126, %v3122
        %v3403 = vpack.c.b16 %v3131, %v3127
        %v3404 = vpack.c.b16 %v3132, %v3128
        %v3405 = vpack.c.b16 %v3133, %v3129
        %v3406 = vpack.c.b16 %v3134, %v3130
        %v3407 = vpack.c.b16 %v3139, %v3135
        %v3408 = vpack.c.b16 %v3140, %v3136
        %v3409 = vpack.c.b16 %v3141, %v3137
        %v3410 = vpack.c.b16 %v3142, %v3138
        %v3411 = vpack.c.b16 %v3147, %v3143
        %v3412 = vpack.c.b16 %v3148, %v3144
        %v3413 = vpack.c.b16 %v3149, %v3145
        %v3414 = vpack.c.b16 %v3150, %v3146
        %v3415 = vpack.c.b16 %v3155, %v3151
        %v3416 = vpack.c.b16 %v3156, %v3152
        %v3417 = vpack.c.b16 %v3157, %v3153
        %v3418 = vpack.c.b16 %v3158, %v3154
        %v3419 = vpack.c.b16 %v3163, %v3159
        %v3420 = vpack.c.b16 %v3164, %v3160
        %v3421 = vpack.c.b16 %v3165, %v3161
        %v3422 = vpack.c.b16 %v3166, %v3162
        %v3680 = vperm.slane %v2398, 0
        %v3681 = vperm.slane %v2398, 1
        %v3682 = vperm.slane %v2398, 2
        %v3683 = vperm.slane %v2398, 3
        %3688 = vmatpush.bf16.msra.mxu0 %v3195
        %3689 = vmatpush.bf16.msra.mxu0 %v3191
        %3690 = vmatpush.bf16.msra.mxu0 %v3187
        %3691 = vmatpush.bf16.msra.mxu0 %v3183
        %3692 = vmatpush.bf16.msra.mxu0 %v3179
        %3693 = vmatpush.bf16.msra.mxu0 %v3175
        %3694 = vmatpush.bf16.msra.mxu0 %v3171
        %3695 = vmatpush.bf16.msra.mxu0 %v3167
        %3696 = vmatmul.bf16.gmra.mxu0 %v2134
        %v3697 = vpop.f32.mrf.mxu0
        %v3698 = vadd.f32 %v3680, %v3697
        %v3699 = vpop.f32.mrf.mxu0
        %3700 = vdwg.mxu0
        %3701 = vmatpush.bf16.msra.mxu0 %v3227
        %3702 = vmatpush.bf16.msra.mxu0 %v3223
        %3703 = vmatpush.bf16.msra.mxu0 %v3219
        %3704 = vmatpush.bf16.msra.mxu0 %v3215
        %3705 = vmatpush.bf16.msra.mxu0 %v3211
        %3706 = vmatpush.bf16.msra.mxu0 %v3207
        %3707 = vmatpush.bf16.msra.mxu0 %v3203
        %3708 = vmatpush.bf16.msra.mxu0 %v3199
        %3709 = vmatmul.bf16.gmra.mxu0 %v2135
        %v3710 = vpop.f32.mrf.mxu0
        %v3711 = vadd.f32 %v3698, %v3710
        %v3712 = vpop.f32.mrf.mxu0
        %3713 = vdwg.mxu0
        %3714 = vmatpush.bf16.msra.mxu0 %v3259
        %3715 = vmatpush.bf16.msra.mxu0 %v3255
        %3716 = vmatpush.bf16.msra.mxu0 %v3251
        %3717 = vmatpush.bf16.msra.mxu0 %v3247
        %3718 = vmatpush.bf16.msra.mxu0 %v3243
        %3719 = vmatpush.bf16.msra.mxu0 %v3239
        %3720 = vmatpush.bf16.msra.mxu0 %v3235
        %3721 = vmatpush.bf16.msra.mxu0 %v3231
        %3722 = vmatmul.bf16.gmra.mxu0 %v2136
        %v3723 = vpop.f32.mrf.mxu0
        %v3724 = vadd.f32 %v3711, %v3723
        %v3725 = vpop.f32.mrf.mxu0
        %3726 = vdwg.mxu0
        %3727 = vmatpush.bf16.msra.mxu0 %v3291
        %3728 = vmatpush.bf16.msra.mxu0 %v3287
        %3729 = vmatpush.bf16.msra.mxu0 %v3283
        %3730 = vmatpush.bf16.msra.mxu0 %v3279
        %3731 = vmatpush.bf16.msra.mxu0 %v3275
        %3732 = vmatpush.bf16.msra.mxu0 %v3271
        %3733 = vmatpush.bf16.msra.mxu0 %v3267
        %3734 = vmatpush.bf16.msra.mxu0 %v3263
        %3735 = vmatmul.bf16.gmra.mxu0 %v2137
        %v3736 = vpop.f32.mrf.mxu0
        %v3737 = vadd.f32 %v3724, %v3736
        %v3738 = vpop.f32.mrf.mxu0
        %3739 = vdwg.mxu0
        %3740 = vmatpush.bf16.msra.mxu0 %v3323
        %3741 = vmatpush.bf16.msra.mxu0 %v3319
        %3742 = vmatpush.bf16.msra.mxu0 %v3315
        %3743 = vmatpush.bf16.msra.mxu0 %v3311
        %3744 = vmatpush.bf16.msra.mxu0 %v3307
        %3745 = vmatpush.bf16.msra.mxu0 %v3303
        %3746 = vmatpush.bf16.msra.mxu0 %v3299
        %3747 = vmatpush.bf16.msra.mxu0 %v3295
        %3748 = vmatmul.bf16.gmra.mxu0 %v2138
        %v3749 = vpop.f32.mrf.mxu0
        %v3750 = vadd.f32 %v3737, %v3749
        %v3751 = vpop.f32.mrf.mxu0
        %3752 = vdwg.mxu0
        %3753 = vmatpush.bf16.msra.mxu0 %v3355
        %3754 = vmatpush.bf16.msra.mxu0 %v3351
        %3755 = vmatpush.bf16.msra.mxu0 %v3347
        %3756 = vmatpush.bf16.msra.mxu0 %v3343
        %3757 = vmatpush.bf16.msra.mxu0 %v3339
        %3758 = vmatpush.bf16.msra.mxu0 %v3335
        %3759 = vmatpush.bf16.msra.mxu0 %v3331
        %3760 = vmatpush.bf16.msra.mxu0 %v3327
        %3761 = vmatmul.bf16.gmra.mxu0 %v2139
        %v3762 = vpop.f32.mrf.mxu0
        %v3763 = vadd.f32 %v3750, %v3762
        %v3764 = vpop.f32.mrf.mxu0
        %3765 = vdwg.mxu0
        %3766 = vmatpush.bf16.msra.mxu0 %v3387
        %3767 = vmatpush.bf16.msra.mxu0 %v3383
        %3768 = vmatpush.bf16.msra.mxu0 %v3379
        %3769 = vmatpush.bf16.msra.mxu0 %v3375
        %3770 = vmatpush.bf16.msra.mxu0 %v3371
        %3771 = vmatpush.bf16.msra.mxu0 %v3367
        %3772 = vmatpush.bf16.msra.mxu0 %v3363
        %3773 = vmatpush.bf16.msra.mxu0 %v3359
        %3774 = vmatmul.bf16.gmra.mxu0 %v2140
        %v3775 = vpop.f32.mrf.mxu0
        %v3776 = vadd.f32 %v3763, %v3775
        %v3777 = vpop.f32.mrf.mxu0
        %3778 = vdwg.mxu0
        %3779 = vmatpush.bf16.msra.mxu0 %v3419
        %3780 = vmatpush.bf16.msra.mxu0 %v3415
        %3781 = vmatpush.bf16.msra.mxu0 %v3411
        %3782 = vmatpush.bf16.msra.mxu0 %v3407
        %3783 = vmatpush.bf16.msra.mxu0 %v3403
        %3784 = vmatpush.bf16.msra.mxu0 %v3399
        %3785 = vmatpush.bf16.msra.mxu0 %v3395
        %3786 = vmatpush.bf16.msra.mxu0 %v3391
        %3787 = vmatmul.bf16.gmra.mxu0 %v2141
        %v3788 = vpop.f32.mrf.mxu0
        %v3789 = vadd.f32 %v3776, %v3788
        %v3790 = vpop.f32.mrf.mxu0
        %3791 = vdwg.mxu0
        %3792 = vmatpush.bf16.msra.mxu0 %v3196
        %3793 = vmatpush.bf16.msra.mxu0 %v3192
        %3794 = vmatpush.bf16.msra.mxu0 %v3188
        %3795 = vmatpush.bf16.msra.mxu0 %v3184
        %3796 = vmatpush.bf16.msra.mxu0 %v3180
        %3797 = vmatpush.bf16.msra.mxu0 %v3176
        %3798 = vmatpush.bf16.msra.mxu0 %v3172
        %3799 = vmatpush.bf16.msra.mxu0 %v3168
        %3800 = vmatmul.bf16.gmra.mxu0 %v2134
        %v3801 = vpop.f32.mrf.mxu0
        %v3802 = vadd.f32 %v3681, %v3801
        %v3803 = vpop.f32.mrf.mxu0
        %3804 = vdwg.mxu0
        %3805 = vmatpush.bf16.msra.mxu0 %v3228
        %3806 = vmatpush.bf16.msra.mxu0 %v3224
        %3807 = vmatpush.bf16.msra.mxu0 %v3220
        %3808 = vmatpush.bf16.msra.mxu0 %v3216
        %3809 = vmatpush.bf16.msra.mxu0 %v3212
        %3810 = vmatpush.bf16.msra.mxu0 %v3208
        %3811 = vmatpush.bf16.msra.mxu0 %v3204
        %3812 = vmatpush.bf16.msra.mxu0 %v3200
        %3813 = vmatmul.bf16.gmra.mxu0 %v2135
        %v3814 = vpop.f32.mrf.mxu0
        %v3815 = vadd.f32 %v3802, %v3814
        %v3816 = vpop.f32.mrf.mxu0
        %3817 = vdwg.mxu0
        %3818 = vmatpush.bf16.msra.mxu0 %v3260
        %3819 = vmatpush.bf16.msra.mxu0 %v3256
        %3820 = vmatpush.bf16.msra.mxu0 %v3252
        %3821 = vmatpush.bf16.msra.mxu0 %v3248
        %3822 = vmatpush.bf16.msra.mxu0 %v3244
        %3823 = vmatpush.bf16.msra.mxu0 %v3240
        %3824 = vmatpush.bf16.msra.mxu0 %v3236
        %3825 = vmatpush.bf16.msra.mxu0 %v3232
        %3826 = vmatmul.bf16.gmra.mxu0 %v2136
        %v3827 = vpop.f32.mrf.mxu0
        %v3828 = vadd.f32 %v3815, %v3827
        %v3829 = vpop.f32.mrf.mxu0
        %3830 = vdwg.mxu0
        %3831 = vmatpush.bf16.msra.mxu0 %v3292
        %3832 = vmatpush.bf16.msra.mxu0 %v3288
        %3833 = vmatpush.bf16.msra.mxu0 %v3284
        %3834 = vmatpush.bf16.msra.mxu0 %v3280
        %3835 = vmatpush.bf16.msra.mxu0 %v3276
        %3836 = vmatpush.bf16.msra.mxu0 %v3272
        %3837 = vmatpush.bf16.msra.mxu0 %v3268
        %3838 = vmatpush.bf16.msra.mxu0 %v3264
        %3839 = vmatmul.bf16.gmra.mxu0 %v2137
        %v3840 = vpop.f32.mrf.mxu0
        %v3841 = vadd.f32 %v3828, %v3840
        %v3842 = vpop.f32.mrf.mxu0
        %3843 = vdwg.mxu0
        %3844 = vmatpush.bf16.msra.mxu0 %v3324
        %3845 = vmatpush.bf16.msra.mxu0 %v3320
        %3846 = vmatpush.bf16.msra.mxu0 %v3316
        %3847 = vmatpush.bf16.msra.mxu0 %v3312
        %3848 = vmatpush.bf16.msra.mxu0 %v3308
        %3849 = vmatpush.bf16.msra.mxu0 %v3304
        %3850 = vmatpush.bf16.msra.mxu0 %v3300
        %3851 = vmatpush.bf16.msra.mxu0 %v3296
        %3852 = vmatmul.bf16.gmra.mxu0 %v2138
        %v3853 = vpop.f32.mrf.mxu0
        %v3854 = vadd.f32 %v3841, %v3853
        %v3855 = vpop.f32.mrf.mxu0
        %3856 = vdwg.mxu0
        %3857 = vmatpush.bf16.msra.mxu0 %v3356
        %3858 = vmatpush.bf16.msra.mxu0 %v3352
        %3859 = vmatpush.bf16.msra.mxu0 %v3348
        %3860 = vmatpush.bf16.msra.mxu0 %v3344
        %3861 = vmatpush.bf16.msra.mxu0 %v3340
        %3862 = vmatpush.bf16.msra.mxu0 %v3336
        %3863 = vmatpush.bf16.msra.mxu0 %v3332
        %3864 = vmatpush.bf16.msra.mxu0 %v3328
        %3865 = vmatmul.bf16.gmra.mxu0 %v2139
        %v3866 = vpop.f32.mrf.mxu0
        %v3867 = vadd.f32 %v3854, %v3866
        %v3868 = vpop.f32.mrf.mxu0
        %3869 = vdwg.mxu0
        %3870 = vmatpush.bf16.msra.mxu0 %v3388
        %3871 = vmatpush.bf16.msra.mxu0 %v3384
        %3872 = vmatpush.bf16.msra.mxu0 %v3380
        %3873 = vmatpush.bf16.msra.mxu0 %v3376
        %3874 = vmatpush.bf16.msra.mxu0 %v3372
        %3875 = vmatpush.bf16.msra.mxu0 %v3368
        %3876 = vmatpush.bf16.msra.mxu0 %v3364
        %3877 = vmatpush.bf16.msra.mxu0 %v3360
        %3878 = vmatmul.bf16.gmra.mxu0 %v2140
        %v3879 = vpop.f32.mrf.mxu0
        %v3880 = vadd.f32 %v3867, %v3879
        %v3881 = vpop.f32.mrf.mxu0
        %3882 = vdwg.mxu0
        %3883 = vmatpush.bf16.msra.mxu0 %v3420
        %3884 = vmatpush.bf16.msra.mxu0 %v3416
        %3885 = vmatpush.bf16.msra.mxu0 %v3412
        %3886 = vmatpush.bf16.msra.mxu0 %v3408
        %3887 = vmatpush.bf16.msra.mxu0 %v3404
        %3888 = vmatpush.bf16.msra.mxu0 %v3400
        %3889 = vmatpush.bf16.msra.mxu0 %v3396
        %3890 = vmatpush.bf16.msra.mxu0 %v3392
        %3891 = vmatmul.bf16.gmra.mxu0 %v2141
        %v3892 = vpop.f32.mrf.mxu0
        %v3893 = vadd.f32 %v3880, %v3892
        %v3894 = vpop.f32.mrf.mxu0
        %3895 = vdwg.mxu0
        %3896 = vmatpush.bf16.msra.mxu0 %v3197
        %3897 = vmatpush.bf16.msra.mxu0 %v3193
        %3898 = vmatpush.bf16.msra.mxu0 %v3189
        %3899 = vmatpush.bf16.msra.mxu0 %v3185
        %3900 = vmatpush.bf16.msra.mxu0 %v3181
        %3901 = vmatpush.bf16.msra.mxu0 %v3177
        %3902 = vmatpush.bf16.msra.mxu0 %v3173
        %3903 = vmatpush.bf16.msra.mxu0 %v3169
        %3904 = vmatmul.bf16.gmra.mxu0 %v2134
        %v3905 = vpop.f32.mrf.mxu0
        %v3906 = vadd.f32 %v3682, %v3905
        %v3907 = vpop.f32.mrf.mxu0
        %3908 = vdwg.mxu0
        %3909 = vmatpush.bf16.msra.mxu0 %v3229
        %3910 = vmatpush.bf16.msra.mxu0 %v3225
        %3911 = vmatpush.bf16.msra.mxu0 %v3221
        %3912 = vmatpush.bf16.msra.mxu0 %v3217
        %3913 = vmatpush.bf16.msra.mxu0 %v3213
        %3914 = vmatpush.bf16.msra.mxu0 %v3209
        %3915 = vmatpush.bf16.msra.mxu0 %v3205
        %3916 = vmatpush.bf16.msra.mxu0 %v3201
        %3917 = vmatmul.bf16.gmra.mxu0 %v2135
        %v3918 = vpop.f32.mrf.mxu0
        %v3919 = vadd.f32 %v3906, %v3918
        %v3920 = vpop.f32.mrf.mxu0
        %3921 = vdwg.mxu0
        %3922 = vmatpush.bf16.msra.mxu0 %v3261
        %3923 = vmatpush.bf16.msra.mxu0 %v3257
        %3924 = vmatpush.bf16.msra.mxu0 %v3253
        %3925 = vmatpush.bf16.msra.mxu0 %v3249
        %3926 = vmatpush.bf16.msra.mxu0 %v3245
        %3927 = vmatpush.bf16.msra.mxu0 %v3241
        %3928 = vmatpush.bf16.msra.mxu0 %v3237
        %3929 = vmatpush.bf16.msra.mxu0 %v3233
        %3930 = vmatmul.bf16.gmra.mxu0 %v2136
        %v3931 = vpop.f32.mrf.mxu0
        %v3932 = vadd.f32 %v3919, %v3931
        %v3933 = vpop.f32.mrf.mxu0
        %3934 = vdwg.mxu0
        %3935 = vmatpush.bf16.msra.mxu0 %v3293
        %3936 = vmatpush.bf16.msra.mxu0 %v3289
        %3937 = vmatpush.bf16.msra.mxu0 %v3285
        %3938 = vmatpush.bf16.msra.mxu0 %v3281
        %3939 = vmatpush.bf16.msra.mxu0 %v3277
        %3940 = vmatpush.bf16.msra.mxu0 %v3273
        %3941 = vmatpush.bf16.msra.mxu0 %v3269
        %3942 = vmatpush.bf16.msra.mxu0 %v3265
        %3943 = vmatmul.bf16.gmra.mxu0 %v2137
        %v3944 = vpop.f32.mrf.mxu0
        %v3945 = vadd.f32 %v3932, %v3944
        %v3946 = vpop.f32.mrf.mxu0
        %3947 = vdwg.mxu0
        %3948 = vmatpush.bf16.msra.mxu0 %v3325
        %3949 = vmatpush.bf16.msra.mxu0 %v3321
        %3950 = vmatpush.bf16.msra.mxu0 %v3317
        %3951 = vmatpush.bf16.msra.mxu0 %v3313
        %3952 = vmatpush.bf16.msra.mxu0 %v3309
        %3953 = vmatpush.bf16.msra.mxu0 %v3305
        %3954 = vmatpush.bf16.msra.mxu0 %v3301
        %3955 = vmatpush.bf16.msra.mxu0 %v3297
        %3956 = vmatmul.bf16.gmra.mxu0 %v2138
        %v3957 = vpop.f32.mrf.mxu0
        %v3958 = vadd.f32 %v3945, %v3957
        %v3959 = vpop.f32.mrf.mxu0
        %3960 = vdwg.mxu0
        %3961 = vmatpush.bf16.msra.mxu0 %v3357
        %3962 = vmatpush.bf16.msra.mxu0 %v3353
        %3963 = vmatpush.bf16.msra.mxu0 %v3349
        %3964 = vmatpush.bf16.msra.mxu0 %v3345
        %3965 = vmatpush.bf16.msra.mxu0 %v3341
        %3966 = vmatpush.bf16.msra.mxu0 %v3337
        %3967 = vmatpush.bf16.msra.mxu0 %v3333
        %3968 = vmatpush.bf16.msra.mxu0 %v3329
        %3969 = vmatmul.bf16.gmra.mxu0 %v2139
        %v3970 = vpop.f32.mrf.mxu0
        %v3971 = vadd.f32 %v3958, %v3970
        %v3972 = vpop.f32.mrf.mxu0
        %3973 = vdwg.mxu0
        %3974 = vmatpush.bf16.msra.mxu0 %v3389
        %3975 = vmatpush.bf16.msra.mxu0 %v3385
        %3976 = vmatpush.bf16.msra.mxu0 %v3381
        %3977 = vmatpush.bf16.msra.mxu0 %v3377
        %3978 = vmatpush.bf16.msra.mxu0 %v3373
        %3979 = vmatpush.bf16.msra.mxu0 %v3369
        %3980 = vmatpush.bf16.msra.mxu0 %v3365
        %3981 = vmatpush.bf16.msra.mxu0 %v3361
        %3982 = vmatmul.bf16.gmra.mxu0 %v2140
        %v3983 = vpop.f32.mrf.mxu0
        %v3984 = vadd.f32 %v3971, %v3983
        %v3985 = vpop.f32.mrf.mxu0
        %3986 = vdwg.mxu0
        %3987 = vmatpush.bf16.msra.mxu0 %v3421
        %3988 = vmatpush.bf16.msra.mxu0 %v3417
        %3989 = vmatpush.bf16.msra.mxu0 %v3413
        %3990 = vmatpush.bf16.msra.mxu0 %v3409
        %3991 = vmatpush.bf16.msra.mxu0 %v3405
        %3992 = vmatpush.bf16.msra.mxu0 %v3401
        %3993 = vmatpush.bf16.msra.mxu0 %v3397
        %3994 = vmatpush.bf16.msra.mxu0 %v3393
        %3995 = vmatmul.bf16.gmra.mxu0 %v2141
        %v3996 = vpop.f32.mrf.mxu0
        %v3997 = vadd.f32 %v3984, %v3996
        %v3998 = vpop.f32.mrf.mxu0
        %3999 = vdwg.mxu0
        %4000 = vmatpush.bf16.msra.mxu0 %v3198
        %4001 = vmatpush.bf16.msra.mxu0 %v3194
        %4002 = vmatpush.bf16.msra.mxu0 %v3190
        %4003 = vmatpush.bf16.msra.mxu0 %v3186
        %4004 = vmatpush.bf16.msra.mxu0 %v3182
        %4005 = vmatpush.bf16.msra.mxu0 %v3178
        %4006 = vmatpush.bf16.msra.mxu0 %v3174
        %4007 = vmatpush.bf16.msra.mxu0 %v3170
        %4008 = vmatmul.bf16.gmra.mxu0 %v2134
        %v4009 = vpop.f32.mrf.mxu0
        %v4010 = vadd.f32 %v3683, %v4009
        %v4011 = vpop.f32.mrf.mxu0
        %4012 = vdwg.mxu0
        %4013 = vmatpush.bf16.msra.mxu0 %v3230
        %4014 = vmatpush.bf16.msra.mxu0 %v3226
        %4015 = vmatpush.bf16.msra.mxu0 %v3222
        %4016 = vmatpush.bf16.msra.mxu0 %v3218
        %4017 = vmatpush.bf16.msra.mxu0 %v3214
        %4018 = vmatpush.bf16.msra.mxu0 %v3210
        %4019 = vmatpush.bf16.msra.mxu0 %v3206
        %4020 = vmatpush.bf16.msra.mxu0 %v3202
        %4021 = vmatmul.bf16.gmra.mxu0 %v2135
        %v4022 = vpop.f32.mrf.mxu0
        %v4023 = vadd.f32 %v4010, %v4022
        %v4024 = vpop.f32.mrf.mxu0
        %4025 = vdwg.mxu0
        %4026 = vmatpush.bf16.msra.mxu0 %v3262
        %4027 = vmatpush.bf16.msra.mxu0 %v3258
        %4028 = vmatpush.bf16.msra.mxu0 %v3254
        %4029 = vmatpush.bf16.msra.mxu0 %v3250
        %4030 = vmatpush.bf16.msra.mxu0 %v3246
        %4031 = vmatpush.bf16.msra.mxu0 %v3242
        %4032 = vmatpush.bf16.msra.mxu0 %v3238
        %4033 = vmatpush.bf16.msra.mxu0 %v3234
        %4034 = vmatmul.bf16.gmra.mxu0 %v2136
        %v4035 = vpop.f32.mrf.mxu0
        %v4036 = vadd.f32 %v4023, %v4035
        %v4037 = vpop.f32.mrf.mxu0
        %4038 = vdwg.mxu0
        %4039 = vmatpush.bf16.msra.mxu0 %v3294
        %4040 = vmatpush.bf16.msra.mxu0 %v3290
        %4041 = vmatpush.bf16.msra.mxu0 %v3286
        %4042 = vmatpush.bf16.msra.mxu0 %v3282
        %4043 = vmatpush.bf16.msra.mxu0 %v3278
        %4044 = vmatpush.bf16.msra.mxu0 %v3274
        %4045 = vmatpush.bf16.msra.mxu0 %v3270
        %4046 = vmatpush.bf16.msra.mxu0 %v3266
        %4047 = vmatmul.bf16.gmra.mxu0 %v2137
        %v4048 = vpop.f32.mrf.mxu0
        %v4049 = vadd.f32 %v4036, %v4048
        %v4050 = vpop.f32.mrf.mxu0
        %4051 = vdwg.mxu0
        %4052 = vmatpush.bf16.msra.mxu0 %v3326
        %4053 = vmatpush.bf16.msra.mxu0 %v3322
        %4054 = vmatpush.bf16.msra.mxu0 %v3318
        %4055 = vmatpush.bf16.msra.mxu0 %v3314
        %4056 = vmatpush.bf16.msra.mxu0 %v3310
        %4057 = vmatpush.bf16.msra.mxu0 %v3306
        %4058 = vmatpush.bf16.msra.mxu0 %v3302
        %4059 = vmatpush.bf16.msra.mxu0 %v3298
        %4060 = vmatmul.bf16.gmra.mxu0 %v2138
        %v4061 = vpop.f32.mrf.mxu0
        %v4062 = vadd.f32 %v4049, %v4061
        %v4063 = vpop.f32.mrf.mxu0
        %4064 = vdwg.mxu0
        %4065 = vmatpush.bf16.msra.mxu0 %v3358
        %4066 = vmatpush.bf16.msra.mxu0 %v3354
        %4067 = vmatpush.bf16.msra.mxu0 %v3350
        %4068 = vmatpush.bf16.msra.mxu0 %v3346
        %4069 = vmatpush.bf16.msra.mxu0 %v3342
        %4070 = vmatpush.bf16.msra.mxu0 %v3338
        %4071 = vmatpush.bf16.msra.mxu0 %v3334
        %4072 = vmatpush.bf16.msra.mxu0 %v3330
        %4073 = vmatmul.bf16.gmra.mxu0 %v2139
        %v4074 = vpop.f32.mrf.mxu0
        %v4075 = vadd.f32 %v4062, %v4074
        %v4076 = vpop.f32.mrf.mxu0
        %4077 = vdwg.mxu0
        %4078 = vmatpush.bf16.msra.mxu0 %v3390
        %4079 = vmatpush.bf16.msra.mxu0 %v3386
        %4080 = vmatpush.bf16.msra.mxu0 %v3382
        %4081 = vmatpush.bf16.msra.mxu0 %v3378
        %4082 = vmatpush.bf16.msra.mxu0 %v3374
        %4083 = vmatpush.bf16.msra.mxu0 %v3370
        %4084 = vmatpush.bf16.msra.mxu0 %v3366
        %4085 = vmatpush.bf16.msra.mxu0 %v3362
        %4086 = vmatmul.bf16.gmra.mxu0 %v2140
        %v4087 = vpop.f32.mrf.mxu0
        %v4088 = vadd.f32 %v4075, %v4087
        %v4089 = vpop.f32.mrf.mxu0
        %4090 = vdwg.mxu0
        %4091 = vmatpush.bf16.msra.mxu0 %v3422
        %4092 = vmatpush.bf16.msra.mxu0 %v3418
        %4093 = vmatpush.bf16.msra.mxu0 %v3414
        %4094 = vmatpush.bf16.msra.mxu0 %v3410
        %4095 = vmatpush.bf16.msra.mxu0 %v3406
        %4096 = vmatpush.bf16.msra.mxu0 %v3402
        %4097 = vmatpush.bf16.msra.mxu0 %v3398
        %4098 = vmatpush.bf16.msra.mxu0 %v3394
        %4099 = vmatmul.bf16.gmra.mxu0 %v2141
        %v4100 = vpop.f32.mrf.mxu0
        %v4101 = vadd.f32 %v4088, %v4100
        %v4102 = vpop.f32.mrf.mxu0
        %4103 = vdwg.mxu0
        %v4104 = vmax.f32 %v3789, 0.0
        %v4105 = vmax.f32 %v3893, 0.0
        %v4106 = vmax.f32 %v3997, 0.0
        %v4107 = vmax.f32 %v4101, 0.0
        %v4108 = vpack.c.bf16 %v4104, %v4104
        %v4109 = vpack.c.bf16 %v4105, %v4105
        %v4110 = vpack.c.bf16 %v4106, %v4106
        %v4111 = vpack.c.bf16 %v4107, %v4107
        %v4112 = vld [vmem:[#allocation6] sm:$0xff]
        %v4113 = vld [vmem:[#allocation6 + $0x8] sm:$0xff]
        %v4114 = vld [vmem:[#allocation6 + $0x10] sm:$0xff]
        %v4115 = vld [vmem:[#allocation6 + $0x18] sm:$0xff]
        %v4116 = vld [vmem:[#allocation6 + $0x20] sm:$0xff]
        %v4117 = vld [vmem:[#allocation6 + $0x28] sm:$0xff]
        %v4118 = vld [vmem:[#allocation6 + $0x30] sm:$0xff]
        %v4119 = vld [vmem:[#allocation6 + $0x38] sm:$0xff]
        %v4120 = vld [vmem:[#allocation6 + $0x40] sm:$0xff]
        %v4121 = vld [vmem:[#allocation6 + $0x48] sm:$0xff]
        %v4122 = vld [vmem:[#allocation6 + $0x50] sm:$0xff]
        %v4123 = vld [vmem:[#allocation6 + $0x58] sm:$0xff]
        %v4124 = vld [vmem:[#allocation6 + $0x60] sm:$0xff]
        %v4125 = vld [vmem:[#allocation6 + $0x68] sm:$0xff]
        %v4126 = vld [vmem:[#allocation6 + $0x70] sm:$0xff]
        %v4127 = vld [vmem:[#allocation6 + $0x78] sm:$0xff]
        %v4128 = vld [vmem:[#allocation6 + $0x80] sm:$0xff]
        %v4129 = vld [vmem:[#allocation6 + $0x88] sm:$0xff]
        %v4130 = vld [vmem:[#allocation6 + $0x90] sm:$0xff]
        %v4131 = vld [vmem:[#allocation6 + $0x98] sm:$0xff]
        %v4132 = vld [vmem:[#allocation6 + $0xa0] sm:$0xff]
        %v4133 = vld [vmem:[#allocation6 + $0xa8] sm:$0xff]
        %v4134 = vld [vmem:[#allocation6 + $0xb0] sm:$0xff]
        %v4135 = vld [vmem:[#allocation6 + $0xb8] sm:$0xff]
        %v4136 = vld [vmem:[#allocation6 + $0xc0] sm:$0xff]
        %v4137 = vld [vmem:[#allocation6 + $0xc8] sm:$0xff]
        %v4138 = vld [vmem:[#allocation6 + $0xd0] sm:$0xff]
        %v4139 = vld [vmem:[#allocation6 + $0xd8] sm:$0xff]
        %v4140 = vld [vmem:[#allocation6 + $0xe0] sm:$0xff]
        %v4141 = vld [vmem:[#allocation6 + $0xe8] sm:$0xff]
        %v4142 = vld [vmem:[#allocation6 + $0xf0] sm:$0xff]
        %v4143 = vld [vmem:[#allocation6 + $0xf8] sm:$0xff]
        %v4144 = vld [vmem:[#allocation6 + $0x100] sm:$0xff]
        %v4145 = vld [vmem:[#allocation6 + $0x108] sm:$0xff]
        %v4146 = vld [vmem:[#allocation6 + $0x110] sm:$0xff]
        %v4147 = vld [vmem:[#allocation6 + $0x118] sm:$0xff]
        %v4148 = vld [vmem:[#allocation6 + $0x120] sm:$0xff]
        %v4149 = vld [vmem:[#allocation6 + $0x128] sm:$0xff]
        %v4150 = vld [vmem:[#allocation6 + $0x130] sm:$0xff]
        %v4151 = vld [vmem:[#allocation6 + $0x138] sm:$0xff]
        %v4152 = vld [vmem:[#allocation6 + $0x140] sm:$0xff]
        %v4153 = vld [vmem:[#allocation6 + $0x148] sm:$0xff]
        %v4154 = vld [vmem:[#allocation6 + $0x150] sm:$0xff]
        %v4155 = vld [vmem:[#allocation6 + $0x158] sm:$0xff]
        %v4156 = vld [vmem:[#allocation6 + $0x160] sm:$0xff]
        %v4157 = vld [vmem:[#allocation6 + $0x168] sm:$0xff]
        %v4158 = vld [vmem:[#allocation6 + $0x170] sm:$0xff]
        %v4159 = vld [vmem:[#allocation6 + $0x178] sm:$0xff]
        %v4160 = vld [vmem:[#allocation6 + $0x180] sm:$0xff]
        %v4161 = vld [vmem:[#allocation6 + $0x188] sm:$0xff]
        %v4162 = vld [vmem:[#allocation6 + $0x190] sm:$0xff]
        %v4163 = vld [vmem:[#allocation6 + $0x198] sm:$0xff]
        %v4164 = vld [vmem:[#allocation6 + $0x1a0] sm:$0xff]
        %v4165 = vld [vmem:[#allocation6 + $0x1a8] sm:$0xff]
        %v4166 = vld [vmem:[#allocation6 + $0x1b0] sm:$0xff]
        %v4167 = vld [vmem:[#allocation6 + $0x1b8] sm:$0xff]
        %v4168 = vld [vmem:[#allocation6 + $0x1c0] sm:$0xff]
        %v4169 = vld [vmem:[#allocation6 + $0x1c8] sm:$0xff]
        %v4170 = vld [vmem:[#allocation6 + $0x1d0] sm:$0xff]
        %v4171 = vld [vmem:[#allocation6 + $0x1d8] sm:$0xff]
        %v4172 = vld [vmem:[#allocation6 + $0x1e0] sm:$0xff]
        %v4173 = vld [vmem:[#allocation6 + $0x1e8] sm:$0xff]
        %v4174 = vld [vmem:[#allocation6 + $0x1f0] sm:$0xff]
        %v4175 = vld [vmem:[#allocation6 + $0x1f8] sm:$0xff]
        %v4176 = vld [vmem:[#allocation9 + $0xe] sm:$0x3]
        %v4241 = vunpack.c.l.b16 %v4112
        %v4242 = vunpack.c.h.b16 %v4112
        %v4243 = vunpack.c.l.b16 %v4113
        %v4244 = vunpack.c.h.b16 %v4113
        %v4245 = vunpack.c.l.b16 %v4114
        %v4246 = vunpack.c.h.b16 %v4114
        %v4247 = vunpack.c.l.b16 %v4115
        %v4248 = vunpack.c.h.b16 %v4115
        %v4249 = vunpack.c.l.b16 %v4116
        %v4250 = vunpack.c.h.b16 %v4116
        %v4251 = vunpack.c.l.b16 %v4117
        %v4252 = vunpack.c.h.b16 %v4117
        %v4253 = vunpack.c.l.b16 %v4118
        %v4254 = vunpack.c.h.b16 %v4118
        %v4255 = vunpack.c.l.b16 %v4119
        %v4256 = vunpack.c.h.b16 %v4119
        %v4257 = vunpack.c.l.b16 %v4120
        %v4258 = vunpack.c.h.b16 %v4120
        %v4259 = vunpack.c.l.b16 %v4121
        %v4260 = vunpack.c.h.b16 %v4121
        %v4261 = vunpack.c.l.b16 %v4122
        %v4262 = vunpack.c.h.b16 %v4122
        %v4263 = vunpack.c.l.b16 %v4123
        %v4264 = vunpack.c.h.b16 %v4123
        %v4265 = vunpack.c.l.b16 %v4124
        %v4266 = vunpack.c.h.b16 %v4124
        %v4267 = vunpack.c.l.b16 %v4125
        %v4268 = vunpack.c.h.b16 %v4125
        %v4269 = vunpack.c.l.b16 %v4126
        %v4270 = vunpack.c.h.b16 %v4126
        %v4271 = vunpack.c.l.b16 %v4127
        %v4272 = vunpack.c.h.b16 %v4127
        %v4273 = vunpack.c.l.b16 %v4128
        %v4274 = vunpack.c.h.b16 %v4128
        %v4275 = vunpack.c.l.b16 %v4129
        %v4276 = vunpack.c.h.b16 %v4129
        %v4277 = vunpack.c.l.b16 %v4130
        %v4278 = vunpack.c.h.b16 %v4130
        %v4279 = vunpack.c.l.b16 %v4131
        %v4280 = vunpack.c.h.b16 %v4131
        %v4281 = vunpack.c.l.b16 %v4132
        %v4282 = vunpack.c.h.b16 %v4132
        %v4283 = vunpack.c.l.b16 %v4133
        %v4284 = vunpack.c.h.b16 %v4133
        %v4285 = vunpack.c.l.b16 %v4134
        %v4286 = vunpack.c.h.b16 %v4134
        %v4287 = vunpack.c.l.b16 %v4135
        %v4288 = vunpack.c.h.b16 %v4135
        %v4289 = vunpack.c.l.b16 %v4136
        %v4290 = vunpack.c.h.b16 %v4136
        %v4291 = vunpack.c.l.b16 %v4137
        %v4292 = vunpack.c.h.b16 %v4137
        %v4293 = vunpack.c.l.b16 %v4138
        %v4294 = vunpack.c.h.b16 %v4138
        %v4295 = vunpack.c.l.b16 %v4139
        %v4296 = vunpack.c.h.b16 %v4139
        %v4297 = vunpack.c.l.b16 %v4140
        %v4298 = vunpack.c.h.b16 %v4140
        %v4299 = vunpack.c.l.b16 %v4141
        %v4300 = vunpack.c.h.b16 %v4141
        %v4301 = vunpack.c.l.b16 %v4142
        %v4302 = vunpack.c.h.b16 %v4142
        %v4303 = vunpack.c.l.b16 %v4143
        %v4304 = vunpack.c.h.b16 %v4143
        %v4305 = vunpack.c.l.b16 %v4144
        %v4306 = vunpack.c.h.b16 %v4144
        %v4307 = vunpack.c.l.b16 %v4145
        %v4308 = vunpack.c.h.b16 %v4145
        %v4309 = vunpack.c.l.b16 %v4146
        %v4310 = vunpack.c.h.b16 %v4146
        %v4311 = vunpack.c.l.b16 %v4147
        %v4312 = vunpack.c.h.b16 %v4147
        %v4313 = vunpack.c.l.b16 %v4148
        %v4314 = vunpack.c.h.b16 %v4148
        %v4315 = vunpack.c.l.b16 %v4149
        %v4316 = vunpack.c.h.b16 %v4149
        %v4317 = vunpack.c.l.b16 %v4150
        %v4318 = vunpack.c.h.b16 %v4150
        %v4319 = vunpack.c.l.b16 %v4151
        %v4320 = vunpack.c.h.b16 %v4151
        %v4321 = vunpack.c.l.b16 %v4152
        %v4322 = vunpack.c.h.b16 %v4152
        %v4323 = vunpack.c.l.b16 %v4153
        %v4324 = vunpack.c.h.b16 %v4153
        %v4325 = vunpack.c.l.b16 %v4154
        %v4326 = vunpack.c.h.b16 %v4154
        %v4327 = vunpack.c.l.b16 %v4155
        %v4328 = vunpack.c.h.b16 %v4155
        %v4329 = vunpack.c.l.b16 %v4156
        %v4330 = vunpack.c.h.b16 %v4156
        %v4331 = vunpack.c.l.b16 %v4157
        %v4332 = vunpack.c.h.b16 %v4157
        %v4333 = vunpack.c.l.b16 %v4158
        %v4334 = vunpack.c.h.b16 %v4158
        %v4335 = vunpack.c.l.b16 %v4159
        %v4336 = vunpack.c.h.b16 %v4159
        %v4337 = vunpack.c.l.b16 %v4160
        %v4338 = vunpack.c.h.b16 %v4160
        %v4339 = vunpack.c.l.b16 %v4161
        %v4340 = vunpack.c.h.b16 %v4161
        %v4341 = vunpack.c.l.b16 %v4162
        %v4342 = vunpack.c.h.b16 %v4162
        %v4343 = vunpack.c.l.b16 %v4163
        %v4344 = vunpack.c.h.b16 %v4163
        %v4345 = vunpack.c.l.b16 %v4164
        %v4346 = vunpack.c.h.b16 %v4164
        %v4347 = vunpack.c.l.b16 %v4165
        %v4348 = vunpack.c.h.b16 %v4165
        %v4349 = vunpack.c.l.b16 %v4166
        %v4350 = vunpack.c.h.b16 %v4166
        %v4351 = vunpack.c.l.b16 %v4167
        %v4352 = vunpack.c.h.b16 %v4167
        %v4353 = vunpack.c.l.b16 %v4168
        %v4354 = vunpack.c.h.b16 %v4168
        %v4355 = vunpack.c.l.b16 %v4169
        %v4356 = vunpack.c.h.b16 %v4169
        %v4357 = vunpack.c.l.b16 %v4170
        %v4358 = vunpack.c.h.b16 %v4170
        %v4359 = vunpack.c.l.b16 %v4171
        %v4360 = vunpack.c.h.b16 %v4171
        %v4361 = vunpack.c.l.b16 %v4172
        %v4362 = vunpack.c.h.b16 %v4172
        %v4363 = vunpack.c.l.b16 %v4173
        %v4364 = vunpack.c.h.b16 %v4173
        %v4365 = vunpack.c.l.b16 %v4174
        %v4366 = vunpack.c.h.b16 %v4174
        %v4367 = vunpack.c.l.b16 %v4175
        %v4368 = vunpack.c.h.b16 %v4175
        %v4369 = vpack.c.b16 %v4243, %v4241
        %v4370 = vpack.c.b16 %v4244, %v4242
        %v4371 = vpack.c.b16 %v4247, %v4245
        %v4372 = vpack.c.b16 %v4248, %v4246
        %v4373 = vpack.c.b16 %v4251, %v4249
        %v4374 = vpack.c.b16 %v4252, %v4250
        %v4375 = vpack.c.b16 %v4255, %v4253
        %v4376 = vpack.c.b16 %v4256, %v4254
        %v4377 = vpack.c.b16 %v4259, %v4257
        %v4378 = vpack.c.b16 %v4260, %v4258
        %v4379 = vpack.c.b16 %v4263, %v4261
        %v4380 = vpack.c.b16 %v4264, %v4262
        %v4381 = vpack.c.b16 %v4267, %v4265
        %v4382 = vpack.c.b16 %v4268, %v4266
        %v4383 = vpack.c.b16 %v4271, %v4269
        %v4384 = vpack.c.b16 %v4272, %v4270
        %v4385 = vpack.c.b16 %v4275, %v4273
        %v4386 = vpack.c.b16 %v4276, %v4274
        %v4387 = vpack.c.b16 %v4279, %v4277
        %v4388 = vpack.c.b16 %v4280, %v4278
        %v4389 = vpack.c.b16 %v4283, %v4281
        %v4390 = vpack.c.b16 %v4284, %v4282
        %v4391 = vpack.c.b16 %v4287, %v4285
        %v4392 = vpack.c.b16 %v4288, %v4286
        %v4393 = vpack.c.b16 %v4291, %v4289
        %v4394 = vpack.c.b16 %v4292, %v4290
        %v4395 = vpack.c.b16 %v4295, %v4293
        %v4396 = vpack.c.b16 %v4296, %v4294
        %v4397 = vpack.c.b16 %v4299, %v4297
        %v4398 = vpack.c.b16 %v4300, %v4298
        %v4399 = vpack.c.b16 %v4303, %v4301
        %v4400 = vpack.c.b16 %v4304, %v4302
        %v4401 = vpack.c.b16 %v4307, %v4305
        %v4402 = vpack.c.b16 %v4308, %v4306
        %v4403 = vpack.c.b16 %v4311, %v4309
        %v4404 = vpack.c.b16 %v4312, %v4310
        %v4405 = vpack.c.b16 %v4315, %v4313
        %v4406 = vpack.c.b16 %v4316, %v4314
        %v4407 = vpack.c.b16 %v4319, %v4317
        %v4408 = vpack.c.b16 %v4320, %v4318
        %v4409 = vpack.c.b16 %v4323, %v4321
        %v4410 = vpack.c.b16 %v4324, %v4322
        %v4411 = vpack.c.b16 %v4327, %v4325
        %v4412 = vpack.c.b16 %v4328, %v4326
        %v4413 = vpack.c.b16 %v4331, %v4329
        %v4414 = vpack.c.b16 %v4332, %v4330
        %v4415 = vpack.c.b16 %v4335, %v4333
        %v4416 = vpack.c.b16 %v4336, %v4334
        %v4417 = vpack.c.b16 %v4339, %v4337
        %v4418 = vpack.c.b16 %v4340, %v4338
        %v4419 = vpack.c.b16 %v4343, %v4341
        %v4420 = vpack.c.b16 %v4344, %v4342
        %v4421 = vpack.c.b16 %v4347, %v4345
        %v4422 = vpack.c.b16 %v4348, %v4346
        %v4423 = vpack.c.b16 %v4351, %v4349
        %v4424 = vpack.c.b16 %v4352, %v4350
        %v4425 = vpack.c.b16 %v4355, %v4353
        %v4426 = vpack.c.b16 %v4356, %v4354
        %v4427 = vpack.c.b16 %v4359, %v4357
        %v4428 = vpack.c.b16 %v4360, %v4358
        %v4429 = vpack.c.b16 %v4363, %v4361
        %v4430 = vpack.c.b16 %v4364, %v4362
        %v4431 = vpack.c.b16 %v4367, %v4365
        %v4432 = vpack.c.b16 %v4368, %v4366
        %v4498 = vperm.slane %v4176, 0
        %v4499 = vperm.slane %v4176, 1
        %4502 = vmatpush.bf16.msra.mxu0 %v4383
        %4503 = vmatpush.bf16.msra.mxu0 %v4381
        %4504 = vmatpush.bf16.msra.mxu0 %v4379
        %4505 = vmatpush.bf16.msra.mxu0 %v4377
        %4506 = vmatpush.bf16.msra.mxu0 %v4375
        %4507 = vmatpush.bf16.msra.mxu0 %v4373
        %4508 = vmatpush.bf16.msra.mxu0 %v4371
        %4509 = vmatpush.bf16.msra.mxu0 %v4369
        %4510 = vmatmul.bf16.gmra.mxu0 %v4108
        %v4511 = vpop.f32.mrf.mxu0
        %v4512 = vadd.f32 %v4498, %v4511
        %v4513 = vpop.f32.mrf.mxu0
        %4514 = vdwg.mxu0
        %4515 = vmatpush.bf16.msra.mxu0 %v4399
        %4516 = vmatpush.bf16.msra.mxu0 %v4397
        %4517 = vmatpush.bf16.msra.mxu0 %v4395
        %4518 = vmatpush.bf16.msra.mxu0 %v4393
        %4519 = vmatpush.bf16.msra.mxu0 %v4391
        %4520 = vmatpush.bf16.msra.mxu0 %v4389
        %4521 = vmatpush.bf16.msra.mxu0 %v4387
        %4522 = vmatpush.bf16.msra.mxu0 %v4385
        %4523 = vmatmul.bf16.gmra.mxu0 %v4109
        %v4524 = vpop.f32.mrf.mxu0
        %v4525 = vadd.f32 %v4512, %v4524
        %v4526 = vpop.f32.mrf.mxu0
        %4527 = vdwg.mxu0
        %4528 = vmatpush.bf16.msra.mxu0 %v4415
        %4529 = vmatpush.bf16.msra.mxu0 %v4413
        %4530 = vmatpush.bf16.msra.mxu0 %v4411
        %4531 = vmatpush.bf16.msra.mxu0 %v4409
        %4532 = vmatpush.bf16.msra.mxu0 %v4407
        %4533 = vmatpush.bf16.msra.mxu0 %v4405
        %4534 = vmatpush.bf16.msra.mxu0 %v4403
        %4535 = vmatpush.bf16.msra.mxu0 %v4401
        %4536 = vmatmul.bf16.gmra.mxu0 %v4110
        %v4537 = vpop.f32.mrf.mxu0
        %v4538 = vadd.f32 %v4525, %v4537
        %v4539 = vpop.f32.mrf.mxu0
        %4540 = vdwg.mxu0
        %4541 = vmatpush.bf16.msra.mxu0 %v4431
        %4542 = vmatpush.bf16.msra.mxu0 %v4429
        %4543 = vmatpush.bf16.msra.mxu0 %v4427
        %4544 = vmatpush.bf16.msra.mxu0 %v4425
        %4545 = vmatpush.bf16.msra.mxu0 %v4423
        %4546 = vmatpush.bf16.msra.mxu0 %v4421
        %4547 = vmatpush.bf16.msra.mxu0 %v4419
        %4548 = vmatpush.bf16.msra.mxu0 %v4417
        %4549 = vmatmul.bf16.gmra.mxu0 %v4111
        %v4550 = vpop.f32.mrf.mxu0
        %v4551 = vadd.f32 %v4538, %v4550
        %v4552 = vpop.f32.mrf.mxu0
        %4553 = vdwg.mxu0
        %4554 = vmatpush.bf16.msra.mxu0 %v4384
        %4555 = vmatpush.bf16.msra.mxu0 %v4382
        %4556 = vmatpush.bf16.msra.mxu0 %v4380
        %4557 = vmatpush.bf16.msra.mxu0 %v4378
        %4558 = vmatpush.bf16.msra.mxu0 %v4376
        %4559 = vmatpush.bf16.msra.mxu0 %v4374
        %4560 = vmatpush.bf16.msra.mxu0 %v4372
        %4561 = vmatpush.bf16.msra.mxu0 %v4370
        %4562 = vmatmul.bf16.gmra.mxu0 %v4108
        %v4563 = vpop.f32.mrf.mxu0
        %v4564 = vadd.f32 %v4499, %v4563
        %v4565 = vpop.f32.mrf.mxu0
        %4566 = vdwg.mxu0
        %4567 = vmatpush.bf16.msra.mxu0 %v4400
        %4568 = vmatpush.bf16.msra.mxu0 %v4398
        %4569 = vmatpush.bf16.msra.mxu0 %v4396
        %4570 = vmatpush.bf16.msra.mxu0 %v4394
        %4571 = vmatpush.bf16.msra.mxu0 %v4392
        %4572 = vmatpush.bf16.msra.mxu0 %v4390
        %4573 = vmatpush.bf16.msra.mxu0 %v4388
        %4574 = vmatpush.bf16.msra.mxu0 %v4386
        %4575 = vmatmul.bf16.gmra.mxu0 %v4109
        %v4576 = vpop.f32.mrf.mxu0
        %v4577 = vadd.f32 %v4564, %v4576
        %v4578 = vpop.f32.mrf.mxu0
        %4579 = vdwg.mxu0
        %4580 = vmatpush.bf16.msra.mxu0 %v4416
        %4581 = vmatpush.bf16.msra.mxu0 %v4414
        %4582 = vmatpush.bf16.msra.mxu0 %v4412
        %4583 = vmatpush.bf16.msra.mxu0 %v4410
        %4584 = vmatpush.bf16.msra.mxu0 %v4408
        %4585 = vmatpush.bf16.msra.mxu0 %v4406
        %4586 = vmatpush.bf16.msra.mxu0 %v4404
        %4587 = vmatpush.bf16.msra.mxu0 %v4402
        %4588 = vmatmul.bf16.gmra.mxu0 %v4110
        %v4589 = vpop.f32.mrf.mxu0
        %v4590 = vadd.f32 %v4577, %v4589
        %v4591 = vpop.f32.mrf.mxu0
        %4592 = vdwg.mxu0
        %4593 = vmatpush.bf16.msra.mxu0 %v4432
        %4594 = vmatpush.bf16.msra.mxu0 %v4430
        %4595 = vmatpush.bf16.msra.mxu0 %v4428
        %4596 = vmatpush.bf16.msra.mxu0 %v4426
        %4597 = vmatpush.bf16.msra.mxu0 %v4424
        %4598 = vmatpush.bf16.msra.mxu0 %v4422
        %4599 = vmatpush.bf16.msra.mxu0 %v4420
        %4600 = vmatpush.bf16.msra.mxu0 %v4418
        %4601 = vmatmul.bf16.gmra.mxu0 %v4111
        %v4602 = vpop.f32.mrf.mxu0
        %v4603 = vadd.f32 %v4590, %v4602
        %v4604 = vpop.f32.mrf.mxu0
        %4605 = vdwg.mxu0
        %v4606 = vmax.f32 %v4551, 0.0
        %v4607 = vmax.f32 %v4603, 0.0
        %v4608 = vpack.c.bf16 %v4606, %v4606
        %v4609 = vpack.c.bf16 %v4607, %v4607
        %v4610 = vld [vmem:[%s6] sm:$0xf]
        %v4611 = vld [vmem:[%s6 + $0x4] sm:$0xf]
        %v4612 = vld [vmem:[%s6 + $0x8] sm:$0xf]
        %v4613 = vld [vmem:[%s6 + $0xc] sm:$0xf]
        %v4614 = vld [vmem:[%s6 + $0x10] sm:$0xf]
        %v4615 = vld [vmem:[%s6 + $0x14] sm:$0xf]
        %v4616 = vld [vmem:[%s6 + $0x18] sm:$0xf]
        %v4617 = vld [vmem:[%s6 + $0x1c] sm:$0xf]
        %v4618 = vld [vmem:[%s6 + $0x20] sm:$0xf]
        %v4619 = vld [vmem:[%s6 + $0x24] sm:$0xf]
        %v4620 = vld [vmem:[%s6 + $0x28] sm:$0xf]
        %v4621 = vld [vmem:[%s6 + $0x2c] sm:$0xf]
        %v4622 = vld [vmem:[%s6 + $0x30] sm:$0xf]
        %v4623 = vld [vmem:[%s6 + $0x34] sm:$0xf]
        %v4624 = vld [vmem:[%s6 + $0x38] sm:$0xf]
        %v4625 = vld [vmem:[%s6 + $0x3c] sm:$0xf]
        %v4626 = vld [vmem:[%s6 + $0x40] sm:$0xf]
        %v4627 = vld [vmem:[%s6 + $0x44] sm:$0xf]
        %v4628 = vld [vmem:[%s6 + $0x48] sm:$0xf]
        %v4629 = vld [vmem:[%s6 + $0x4c] sm:$0xf]
        %v4630 = vld [vmem:[%s6 + $0x50] sm:$0xf]
        %v4631 = vld [vmem:[%s6 + $0x54] sm:$0xf]
        %v4632 = vld [vmem:[%s6 + $0x58] sm:$0xf]
        %v4633 = vld [vmem:[%s6 + $0x5c] sm:$0xf]
        %v4634 = vld [vmem:[%s6 + $0x60] sm:$0xf]
        %v4635 = vld [vmem:[%s6 + $0x64] sm:$0xf]
        %v4636 = vld [vmem:[%s6 + $0x68] sm:$0xf]
        %v4637 = vld [vmem:[%s6 + $0x6c] sm:$0xf]
        %v4638 = vld [vmem:[%s6 + $0x70] sm:$0xf]
        %v4639 = vld [vmem:[%s6 + $0x74] sm:$0xf]
        %v4640 = vld [vmem:[%s6 + $0x78] sm:$0xf]
        %v4641 = vld [vmem:[%s6 + $0x7c] sm:$0xf]
        %v4642 = vld [vmem:[#allocation9 + $0x10] sm:$0x1]
        %v4675 = vunpack.c.l.b16 %v4610
        %v4676 = vunpack.c.l.b16 %v4611
        %v4677 = vunpack.c.l.b16 %v4612
        %v4678 = vunpack.c.l.b16 %v4613
        %v4679 = vunpack.c.l.b16 %v4614
        %v4680 = vunpack.c.l.b16 %v4615
        %v4681 = vunpack.c.l.b16 %v4616
        %v4682 = vunpack.c.l.b16 %v4617
        %v4683 = vunpack.c.l.b16 %v4618
        %v4684 = vunpack.c.l.b16 %v4619
        %v4685 = vunpack.c.l.b16 %v4620
        %v4686 = vunpack.c.l.b16 %v4621
        %v4687 = vunpack.c.l.b16 %v4622
        %v4688 = vunpack.c.l.b16 %v4623
        %v4689 = vunpack.c.l.b16 %v4624
        %v4690 = vunpack.c.l.b16 %v4625
        %v4691 = vunpack.c.l.b16 %v4626
        %v4692 = vunpack.c.l.b16 %v4627
        %v4693 = vunpack.c.l.b16 %v4628
        %v4694 = vunpack.c.l.b16 %v4629
        %v4695 = vunpack.c.l.b16 %v4630
        %v4696 = vunpack.c.l.b16 %v4631
        %v4697 = vunpack.c.l.b16 %v4632
        %v4698 = vunpack.c.l.b16 %v4633
        %v4699 = vunpack.c.l.b16 %v4634
        %v4700 = vunpack.c.l.b16 %v4635
        %v4701 = vunpack.c.l.b16 %v4636
        %v4702 = vunpack.c.l.b16 %v4637
        %v4703 = vunpack.c.l.b16 %v4638
        %v4704 = vunpack.c.l.b16 %v4639
        %v4705 = vunpack.c.l.b16 %v4640
        %v4706 = vunpack.c.l.b16 %v4641
        %v4707 = vpack.c.b16 %v4676, %v4675
        %v4708 = vpack.c.b16 %v4678, %v4677
        %v4709 = vpack.c.b16 %v4680, %v4679
        %v4710 = vpack.c.b16 %v4682, %v4681
        %v4711 = vpack.c.b16 %v4684, %v4683
        %v4712 = vpack.c.b16 %v4686, %v4685
        %v4713 = vpack.c.b16 %v4688, %v4687
        %v4714 = vpack.c.b16 %v4690, %v4689
        %v4715 = vpack.c.b16 %v4692, %v4691
        %v4716 = vpack.c.b16 %v4694, %v4693
        %v4717 = vpack.c.b16 %v4696, %v4695
        %v4718 = vpack.c.b16 %v4698, %v4697
        %v4719 = vpack.c.b16 %v4700, %v4699
        %v4720 = vpack.c.b16 %v4702, %v4701
        %v4721 = vpack.c.b16 %v4704, %v4703
        %v4722 = vpack.c.b16 %v4706, %v4705
        %4739 = vmatpush.bf16.msra.mxu0 %v4714
        %4740 = vmatpush.bf16.msra.mxu0 %v4713
        %4741 = vmatpush.bf16.msra.mxu0 %v4712
        %4742 = vmatpush.bf16.msra.mxu0 %v4711
        %4743 = vmatpush.bf16.msra.mxu0 %v4710
        %4744 = vmatpush.bf16.msra.mxu0 %v4709
        %4745 = vmatpush.bf16.msra.mxu0 %v4708
        %4746 = vmatpush.bf16.msra.mxu0 %v4707
        %4747 = vmatmul.bf16.gmra.mxu0 %v4608
        %v4748 = vpop.f32.mrf.mxu0
        %v4749 = vadd.f32 %v4642, %v4748
        %v4750 = vpop.f32.mrf.mxu0
        %4751 = vdwg.mxu0
        %4752 = vmatpush.bf16.msra.mxu0 %v4722
        %4753 = vmatpush.bf16.msra.mxu0 %v4721
        %4754 = vmatpush.bf16.msra.mxu0 %v4720
        %4755 = vmatpush.bf16.msra.mxu0 %v4719
        %4756 = vmatpush.bf16.msra.mxu0 %v4718
        %4757 = vmatpush.bf16.msra.mxu0 %v4717
        %4758 = vmatpush.bf16.msra.mxu0 %v4716
        %4759 = vmatpush.bf16.msra.mxu0 %v4715
        %4760 = vmatmul.bf16.gmra.mxu0 %v4609
        %v4761 = vpop.f32.mrf.mxu0
        %v4762 = vadd.f32 %v4749, %v4761
        %v4763 = vpop.f32.mrf.mxu0
        %4764 = vdwg.mxu0
        %4765 = vst [vmem:[%s551] sm:$0x1] %v4762
        %v4766 = vperm.slane %v4762, 0
        %v4767 = vmul.f32 %v578, %v4766
        %v4768 = vmul.f32 %v583, %v4766
        %v4769 = vmul.f32 %v588, %v4766
        %v4770 = vmul.f32 %v593, %v4766
        %v4771 = vmul.f32 %v598, %v4766
        %v4772 = vmul.f32 %v603, %v4766
        %v4773 = vmul.f32 %v608, %v4766
        %v4774 = vmul.f32 %v613, %v4766
        %v4775 = vmul.f32 %v618, %v4766
        %v4776 = vmul.f32 %v623, %v4766
        %v4777 = vmul.f32 %v628, %v4766
        %v4778 = vmul.f32 %v633, %v4766
        %v4779 = vmul.f32 %v638, %v4766
        %v4780 = vmul.f32 %v643, %v4766
        %v4781 = vmul.f32 %v648, %v4766
        %v4782 = vmul.f32 %v653, %v4766
        %v4783 = vmul.f32 %v674, %v4766
        %v4784 = vmul.f32 %v678, %v4766
        %v4785 = vmul.f32 %v682, %v4766
        %v4786 = vmul.f32 %v686, %v4766
        %v4787 = vmul.f32 %v690, %v4766
        %v4788 = vmul.f32 %v694, %v4766
        %v4789 = vmul.f32 %v698, %v4766
        %v4790 = vmul.f32 %v702, %v4766
        %v4791 = vmul.f32 %v706, %v4766
        %v4792 = vmul.f32 %v710, %v4766
        %v4793 = vmul.f32 %v714, %v4766
        %v4794 = vmul.f32 %v718, %v4766
        %v4795 = vmul.f32 %v722, %v4766
        %v4796 = vmul.f32 %v726, %v4766
        %v4797 = vmul.f32 %v730, %v4766
        %v4798 = vmul.f32 %v734, %v4766
        %4815 = vrot.lane.b32.xlu0 %v4783, 125
        %v4816 = vpop.permute.xlu0 %4815
        %4817 = vrot.lane.b32.xlu0 %v4784, 125
        %v4818 = vpop.permute.xlu0 %4817
        %4819 = vrot.lane.b32.xlu0 %v4785, 125
        %v4820 = vpop.permute.xlu0 %4819
        %4821 = vrot.lane.b32.xlu0 %v4786, 125
        %v4822 = vpop.permute.xlu0 %4821
        %4823 = vrot.lane.b32.xlu0 %v4787, 125
        %v4824 = vpop.permute.xlu0 %4823
        %4825 = vrot.lane.b32.xlu0 %v4788, 125
        %v4826 = vpop.permute.xlu0 %4825
        %4827 = vrot.lane.b32.xlu0 %v4789, 125
        %v4828 = vpop.permute.xlu0 %4827
        %4829 = vrot.lane.b32.xlu0 %v4790, 125
        %v4830 = vpop.permute.xlu0 %4829
        %4831 = vrot.lane.b32.xlu0 %v4791, 125
        %v4832 = vpop.permute.xlu0 %4831
        %4833 = vrot.lane.b32.xlu0 %v4792, 125
        %v4834 = vpop.permute.xlu0 %4833
        %4835 = vrot.lane.b32.xlu0 %v4793, 125
        %v4836 = vpop.permute.xlu0 %4835
        %4837 = vrot.lane.b32.xlu0 %v4794, 125
        %v4838 = vpop.permute.xlu0 %4837
        %4839 = vrot.lane.b32.xlu0 %v4795, 125
        %v4840 = vpop.permute.xlu0 %4839
        %4841 = vrot.lane.b32.xlu0 %v4796, 125
        %v4842 = vpop.permute.xlu0 %4841
        %4843 = vrot.lane.b32.xlu0 %v4797, 125
        %v4844 = vpop.permute.xlu0 %4843
        %4845 = vrot.lane.b32.xlu0 %v4798, 125
        %v4846 = vpop.permute.xlu0 %4845
        %v4863 = vadd.f32 %v4767, %v4816
        %v4864 = vadd.f32 %v4768, %v4818
        %v4865 = vadd.f32 %v4769, %v4820
        %v4866 = vadd.f32 %v4770, %v4822
        %v4867 = vadd.f32 %v4771, %v4824
        %v4868 = vadd.f32 %v4772, %v4826
        %v4869 = vadd.f32 %v4773, %v4828
        %v4870 = vadd.f32 %v4774, %v4830
        %v4871 = vadd.f32 %v4775, %v4832
        %v4872 = vadd.f32 %v4776, %v4834
        %v4873 = vadd.f32 %v4777, %v4836
        %v4874 = vadd.f32 %v4778, %v4838
        %v4875 = vadd.f32 %v4779, %v4840
        %v4876 = vadd.f32 %v4780, %v4842
        %v4877 = vadd.f32 %v4781, %v4844
        %v4878 = vadd.f32 %v4782, %v4846
        %v4879 = vmul.f32 %v771, %v4766
        %v4880 = vmul.f32 %v775, %v4766
        %v4881 = vmul.f32 %v779, %v4766
        %v4882 = vmul.f32 %v783, %v4766
        %v4883 = vmul.f32 %v787, %v4766
        %v4884 = vmul.f32 %v791, %v4766
        %v4885 = vmul.f32 %v795, %v4766
        %v4886 = vmul.f32 %v799, %v4766
        %v4887 = vmul.f32 %v803, %v4766
        %v4888 = vmul.f32 %v807, %v4766
        %v4889 = vmul.f32 %v811, %v4766
        %v4890 = vmul.f32 %v815, %v4766
        %v4891 = vmul.f32 %v819, %v4766
        %v4892 = vmul.f32 %v823, %v4766
        %v4893 = vmul.f32 %v827, %v4766
        %v4894 = vmul.f32 %v831, %v4766
        %4911 = vrot.lane.b32.xlu0 %v4879, 122
        %v4912 = vpop.permute.xlu0 %4911
        %4913 = vrot.lane.b32.xlu0 %v4880, 122
        %v4914 = vpop.permute.xlu0 %4913
        %4915 = vrot.lane.b32.xlu0 %v4881, 122
        %v4916 = vpop.permute.xlu0 %4915
        %4917 = vrot.lane.b32.xlu0 %v4882, 122
        %v4918 = vpop.permute.xlu0 %4917
        %4919 = vrot.lane.b32.xlu0 %v4883, 122
        %v4920 = vpop.permute.xlu0 %4919
        %4921 = vrot.lane.b32.xlu0 %v4884, 122
        %v4922 = vpop.permute.xlu0 %4921
        %4923 = vrot.lane.b32.xlu0 %v4885, 122
        %v4924 = vpop.permute.xlu0 %4923
        %4925 = vrot.lane.b32.xlu0 %v4886, 122
        %v4926 = vpop.permute.xlu0 %4925
        %4927 = vrot.lane.b32.xlu0 %v4887, 122
        %v4928 = vpop.permute.xlu0 %4927
        %4929 = vrot.lane.b32.xlu0 %v4888, 122
        %v4930 = vpop.permute.xlu0 %4929
        %4931 = vrot.lane.b32.xlu0 %v4889, 122
        %v4932 = vpop.permute.xlu0 %4931
        %4933 = vrot.lane.b32.xlu0 %v4890, 122
        %v4934 = vpop.permute.xlu0 %4933
        %4935 = vrot.lane.b32.xlu0 %v4891, 122
        %v4936 = vpop.permute.xlu0 %4935
        %4937 = vrot.lane.b32.xlu0 %v4892, 122
        %v4938 = vpop.permute.xlu0 %4937
        %4939 = vrot.lane.b32.xlu0 %v4893, 122
        %v4940 = vpop.permute.xlu0 %4939
        %4941 = vrot.lane.b32.xlu0 %v4894, 122
        %v4942 = vpop.permute.xlu0 %4941
        %v4959 = vadd.f32 %v4863, %v4912
        %v4960 = vadd.f32 %v4864, %v4914
        %v4961 = vadd.f32 %v4865, %v4916
        %v4962 = vadd.f32 %v4866, %v4918
        %v4963 = vadd.f32 %v4867, %v4920
        %v4964 = vadd.f32 %v4868, %v4922
        %v4965 = vadd.f32 %v4869, %v4924
        %v4966 = vadd.f32 %v4870, %v4926
        %v4967 = vadd.f32 %v4871, %v4928
        %v4968 = vadd.f32 %v4872, %v4930
        %v4969 = vadd.f32 %v4873, %v4932
        %v4970 = vadd.f32 %v4874, %v4934
        %v4971 = vadd.f32 %v4875, %v4936
        %v4972 = vadd.f32 %v4876, %v4938
        %v4973 = vadd.f32 %v4877, %v4940
        %v4974 = vadd.f32 %v4878, %v4942
        %4976 = vset.pattern.permute.xlu0 0
        %4977 = vperm.xlu0 %4976, %v4959
        %v4978 = vpop.permute.xlu0 %4977
        %4981 = vset.pattern.permute.xlu0 0
        %4982 = vperm.xlu0 %4981, %v4960
        %v4983 = vpop.permute.xlu0 %4982
        %4986 = vset.pattern.permute.xlu0 0
        %4987 = vperm.xlu0 %4986, %v4961
        %v4988 = vpop.permute.xlu0 %4987
        %4991 = vset.pattern.permute.xlu0 0
        %4992 = vperm.xlu0 %4991, %v4962
        %v4993 = vpop.permute.xlu0 %4992
        %4996 = vset.pattern.permute.xlu0 0
        %4997 = vperm.xlu0 %4996, %v4963
        %v4998 = vpop.permute.xlu0 %4997
        %5001 = vset.pattern.permute.xlu0 0
        %5002 = vperm.xlu0 %5001, %v4964
        %v5003 = vpop.permute.xlu0 %5002
        %5006 = vset.pattern.permute.xlu0 0
        %5007 = vperm.xlu0 %5006, %v4965
        %v5008 = vpop.permute.xlu0 %5007
        %5011 = vset.pattern.permute.xlu0 0
        %5012 = vperm.xlu0 %5011, %v4966
        %v5013 = vpop.permute.xlu0 %5012
        %5016 = vset.pattern.permute.xlu0 0
        %5017 = vperm.xlu0 %5016, %v4967
        %v5018 = vpop.permute.xlu0 %5017
        %5021 = vset.pattern.permute.xlu0 0
        %5022 = vperm.xlu0 %5021, %v4968
        %v5023 = vpop.permute.xlu0 %5022
        %5026 = vset.pattern.permute.xlu0 0
        %5027 = vperm.xlu0 %5026, %v4969
        %v5028 = vpop.permute.xlu0 %5027
        %5031 = vset.pattern.permute.xlu0 0
        %5032 = vperm.xlu0 %5031, %v4970
        %v5033 = vpop.permute.xlu0 %5032
        %5036 = vset.pattern.permute.xlu0 0
        %5037 = vperm.xlu0 %5036, %v4971
        %v5038 = vpop.permute.xlu0 %5037
        %5041 = vset.pattern.permute.xlu0 0
        %5042 = vperm.xlu0 %5041, %v4972
        %v5043 = vpop.permute.xlu0 %5042
        %5046 = vset.pattern.permute.xlu0 0
        %5047 = vperm.xlu0 %5046, %v4973
        %v5048 = vpop.permute.xlu0 %5047
        %5051 = vset.pattern.permute.xlu0 0
        %5052 = vperm.xlu0 %5051, %v4974
        %v5053 = vpop.permute.xlu0 %5052
        %v5055 = vperm.slane %v558, 0
        %v5056 = vmul.f32 %v4978, %v5055
        %v5057 = vmul.f32 %v4983, %v5055
        %v5058 = vmul.f32 %v4988, %v5055
        %v5059 = vmul.f32 %v4993, %v5055
        %v5060 = vmul.f32 %v4998, %v5055
        %v5061 = vmul.f32 %v5003, %v5055
        %v5062 = vmul.f32 %v5008, %v5055
        %v5063 = vmul.f32 %v5013, %v5055
        %v5064 = vmul.f32 %v5018, %v5055
        %v5065 = vmul.f32 %v5023, %v5055
        %v5066 = vmul.f32 %v5028, %v5055
        %v5067 = vmul.f32 %v5033, %v5055
        %v5068 = vmul.f32 %v5038, %v5055
        %v5069 = vmul.f32 %v5043, %v5055
        %v5070 = vmul.f32 %v5048, %v5055
        %v5071 = vmul.f32 %v5053, %v5055
        %5072 = vset.pattern.permute.xlu0 1
        %5073 = vperm.xlu0 %5072, %v4959
        %v5074 = vpop.permute.xlu0 %5073
        %5076 = vset.pattern.permute.xlu0 1
        %5077 = vperm.xlu0 %5076, %v4960
        %v5078 = vpop.permute.xlu0 %5077
        %5080 = vset.pattern.permute.xlu0 1
        %5081 = vperm.xlu0 %5080, %v4961
        %v5082 = vpop.permute.xlu0 %5081
        %5084 = vset.pattern.permute.xlu0 1
        %5085 = vperm.xlu0 %5084, %v4962
        %v5086 = vpop.permute.xlu0 %5085
        %5088 = vset.pattern.permute.xlu0 1
        %5089 = vperm.xlu0 %5088, %v4963
        %v5090 = vpop.permute.xlu0 %5089
        %5092 = vset.pattern.permute.xlu0 1
        %5093 = vperm.xlu0 %5092, %v4964
        %v5094 = vpop.permute.xlu0 %5093
        %5096 = vset.pattern.permute.xlu0 1
        %5097 = vperm.xlu0 %5096, %v4965
        %v5098 = vpop.permute.xlu0 %5097
        %5100 = vset.pattern.permute.xlu0 1
        %5101 = vperm.xlu0 %5100, %v4966
        %v5102 = vpop.permute.xlu0 %5101
        %5104 = vset.pattern.permute.xlu0 1
        %5105 = vperm.xlu0 %5104, %v4967
        %v5106 = vpop.permute.xlu0 %5105
        %5108 = vset.pattern.permute.xlu0 1
        %5109 = vperm.xlu0 %5108, %v4968
        %v5110 = vpop.permute.xlu0 %5109
        %5112 = vset.pattern.permute.xlu0 1
        %5113 = vperm.xlu0 %5112, %v4969
        %v5114 = vpop.permute.xlu0 %5113
        %5116 = vset.pattern.permute.xlu0 1
        %5117 = vperm.xlu0 %5116, %v4970
        %v5118 = vpop.permute.xlu0 %5117
        %5120 = vset.pattern.permute.xlu0 1
        %5121 = vperm.xlu0 %5120, %v4971
        %v5122 = vpop.permute.xlu0 %5121
        %5124 = vset.pattern.permute.xlu0 1
        %5125 = vperm.xlu0 %5124, %v4972
        %v5126 = vpop.permute.xlu0 %5125
        %5128 = vset.pattern.permute.xlu0 1
        %5129 = vperm.xlu0 %5128, %v4973
        %v5130 = vpop.permute.xlu0 %5129
        %5132 = vset.pattern.permute.xlu0 1
        %5133 = vperm.xlu0 %5132, %v4974
        %v5134 = vpop.permute.xlu0 %5133
        %v5136 = vperm.slane %v558, 1
        %v5137 = vmul.f32 %v5074, %v5136
        %v5138 = vmul.f32 %v5078, %v5136
        %v5139 = vmul.f32 %v5082, %v5136
        %v5140 = vmul.f32 %v5086, %v5136
        %v5141 = vmul.f32 %v5090, %v5136
        %v5142 = vmul.f32 %v5094, %v5136
        %v5143 = vmul.f32 %v5098, %v5136
        %v5144 = vmul.f32 %v5102, %v5136
        %v5145 = vmul.f32 %v5106, %v5136
        %v5146 = vmul.f32 %v5110, %v5136
        %v5147 = vmul.f32 %v5114, %v5136
        %v5148 = vmul.f32 %v5118, %v5136
        %v5149 = vmul.f32 %v5122, %v5136
        %v5150 = vmul.f32 %v5126, %v5136
        %v5151 = vmul.f32 %v5130, %v5136
        %v5152 = vmul.f32 %v5134, %v5136
        %v5153 = vadd.f32 %v5056, %v5137
        %v5154 = vadd.f32 %v5057, %v5138
        %v5155 = vadd.f32 %v5058, %v5139
        %v5156 = vadd.f32 %v5059, %v5140
        %v5157 = vadd.f32 %v5060, %v5141
        %v5158 = vadd.f32 %v5061, %v5142
        %v5159 = vadd.f32 %v5062, %v5143
        %v5160 = vadd.f32 %v5063, %v5144
        %v5161 = vadd.f32 %v5064, %v5145
        %v5162 = vadd.f32 %v5065, %v5146
        %v5163 = vadd.f32 %v5066, %v5147
        %v5164 = vadd.f32 %v5067, %v5148
        %v5165 = vadd.f32 %v5068, %v5149
        %v5166 = vadd.f32 %v5069, %v5150
        %v5167 = vadd.f32 %v5070, %v5151
        %v5168 = vadd.f32 %v5071, %v5152
        %5169 = vset.pattern.permute.xlu0 2
        %5170 = vperm.xlu0 %5169, %v4959
        %v5171 = vpop.permute.xlu0 %5170
        %5173 = vset.pattern.permute.xlu0 2
        %5174 = vperm.xlu0 %5173, %v4960
        %v5175 = vpop.permute.xlu0 %5174
        %5177 = vset.pattern.permute.xlu0 2
        %5178 = vperm.xlu0 %5177, %v4961
        %v5179 = vpop.permute.xlu0 %5178
        %5181 = vset.pattern.permute.xlu0 2
        %5182 = vperm.xlu0 %5181, %v4962
        %v5183 = vpop.permute.xlu0 %5182
        %5185 = vset.pattern.permute.xlu0 2
        %5186 = vperm.xlu0 %5185, %v4963
        %v5187 = vpop.permute.xlu0 %5186
        %5189 = vset.pattern.permute.xlu0 2
        %5190 = vperm.xlu0 %5189, %v4964
        %v5191 = vpop.permute.xlu0 %5190
        %5193 = vset.pattern.permute.xlu0 2
        %5194 = vperm.xlu0 %5193, %v4965
        %v5195 = vpop.permute.xlu0 %5194
        %5197 = vset.pattern.permute.xlu0 2
        %5198 = vperm.xlu0 %5197, %v4966
        %v5199 = vpop.permute.xlu0 %5198
        %5201 = vset.pattern.permute.xlu0 2
        %5202 = vperm.xlu0 %5201, %v4967
        %v5203 = vpop.permute.xlu0 %5202
        %5205 = vset.pattern.permute.xlu0 2
        %5206 = vperm.xlu0 %5205, %v4968
        %v5207 = vpop.permute.xlu0 %5206
        %5209 = vset.pattern.permute.xlu0 2
        %5210 = vperm.xlu0 %5209, %v4969
        %v5211 = vpop.permute.xlu0 %5210
        %5213 = vset.pattern.permute.xlu0 2
        %5214 = vperm.xlu0 %5213, %v4970
        %v5215 = vpop.permute.xlu0 %5214
        %5217 = vset.pattern.permute.xlu0 2
        %5218 = vperm.xlu0 %5217, %v4971
        %v5219 = vpop.permute.xlu0 %5218
        %5221 = vset.pattern.permute.xlu0 2
        %5222 = vperm.xlu0 %5221, %v4972
        %v5223 = vpop.permute.xlu0 %5222
        %5225 = vset.pattern.permute.xlu0 2
        %5226 = vperm.xlu0 %5225, %v4973
        %v5227 = vpop.permute.xlu0 %5226
        %5229 = vset.pattern.permute.xlu0 2
        %5230 = vperm.xlu0 %5229, %v4974
        %v5231 = vpop.permute.xlu0 %5230
        %v5233 = vperm.slane %v558, 2
        %v5234 = vmul.f32 %v5171, %v5233
        %v5235 = vmul.f32 %v5175, %v5233
        %v5236 = vmul.f32 %v5179, %v5233
        %v5237 = vmul.f32 %v5183, %v5233
        %v5238 = vmul.f32 %v5187, %v5233
        %v5239 = vmul.f32 %v5191, %v5233
        %v5240 = vmul.f32 %v5195, %v5233
        %v5241 = vmul.f32 %v5199, %v5233
        %v5242 = vmul.f32 %v5203, %v5233
        %v5243 = vmul.f32 %v5207, %v5233
        %v5244 = vmul.f32 %v5211, %v5233
        %v5245 = vmul.f32 %v5215, %v5233
        %v5246 = vmul.f32 %v5219, %v5233
        %v5247 = vmul.f32 %v5223, %v5233
        %v5248 = vmul.f32 %v5227, %v5233
        %v5249 = vmul.f32 %v5231, %v5233
        %v5250 = vadd.f32 %v5153, %v5234
        %v5251 = vadd.f32 %v5154, %v5235
        %v5252 = vadd.f32 %v5155, %v5236
        %v5253 = vadd.f32 %v5156, %v5237
        %v5254 = vadd.f32 %v5157, %v5238
        %v5255 = vadd.f32 %v5158, %v5239
        %v5256 = vadd.f32 %v5159, %v5240
        %v5257 = vadd.f32 %v5160, %v5241
        %v5258 = vadd.f32 %v5161, %v5242
        %v5259 = vadd.f32 %v5162, %v5243
        %v5260 = vadd.f32 %v5163, %v5244
        %v5261 = vadd.f32 %v5164, %v5245
        %v5262 = vadd.f32 %v5165, %v5246
        %v5263 = vadd.f32 %v5166, %v5247
        %v5264 = vadd.f32 %v5167, %v5248
        %v5265 = vadd.f32 %v5168, %v5249
        %v5266 = vld [vmem:[#allocation9 + $0x11] sm:$0x1]
        %v5268 = vperm.slane %v5266, 0
        %v5270 = vadd.f32 %v5250, %v5268
        %v5271 = vadd.f32 %v5251, %v5268
        %v5272 = vadd.f32 %v5252, %v5268
        %v5273 = vadd.f32 %v5253, %v5268
        %v5274 = vadd.f32 %v5254, %v5268
        %v5275 = vadd.f32 %v5255, %v5268
        %v5276 = vadd.f32 %v5256, %v5268
        %v5277 = vadd.f32 %v5257, %v5268
        %v5278 = vadd.f32 %v5258, %v5268
        %v5279 = vadd.f32 %v5259, %v5268
        %v5280 = vadd.f32 %v5260, %v5268
        %v5281 = vadd.f32 %v5261, %v5268
        %v5282 = vadd.f32 %v5262, %v5268
        %v5283 = vadd.f32 %v5263, %v5268
        %v5284 = vadd.f32 %v5264, %v5268
        %v5285 = vadd.f32 %v5265, %v5268
        %v5286 = vmax.f32 %v5270, 0.0
        %v5287 = vmax.f32 %v5271, 0.0
        %v5288 = vmax.f32 %v5272, 0.0
        %v5289 = vmax.f32 %v5273, 0.0
        %v5290 = vmax.f32 %v5274, 0.0
        %v5291 = vmax.f32 %v5275, 0.0
        %v5292 = vmax.f32 %v5276, 0.0
        %v5293 = vmax.f32 %v5277, 0.0
        %v5294 = vmax.f32 %v5278, 0.0
        %v5295 = vmax.f32 %v5279, 0.0
        %v5296 = vmax.f32 %v5280, 0.0
        %v5297 = vmax.f32 %v5281, 0.0
        %v5298 = vmax.f32 %v5282, 0.0
        %v5299 = vmax.f32 %v5283, 0.0
        %v5300 = vmax.f32 %v5284, 0.0
        %v5301 = vmax.f32 %v5285, 0.0
        %v5302 = vpack.c.bf16 %v5287, %v5286
        %v5303 = vpack.c.bf16 %v5289, %v5288
        %v5304 = vpack.c.bf16 %v5291, %v5290
        %v5305 = vpack.c.bf16 %v5293, %v5292
        %v5306 = vpack.c.bf16 %v5295, %v5294
        %v5307 = vpack.c.bf16 %v5297, %v5296
        %v5308 = vpack.c.bf16 %v5299, %v5298
        %v5309 = vpack.c.bf16 %v5301, %v5300
        %v5310 = vld [vmem:[%s8] sm:$0xf]
        %v5311 = vld [vmem:[%s8 + $0x4] sm:$0xf]
        %v5312 = vld [vmem:[%s8 + $0x8] sm:$0xf]
        %v5313 = vld [vmem:[%s8 + $0xc] sm:$0xf]
        %v5314 = vld [vmem:[%s8 + $0x10] sm:$0xf]
        %v5315 = vld [vmem:[%s8 + $0x14] sm:$0xf]
        %v5316 = vld [vmem:[%s8 + $0x18] sm:$0xf]
        %v5317 = vld [vmem:[%s8 + $0x1c] sm:$0xf]
        %v5318 = vld [vmem:[#allocation9 + $0x12] sm:$0x1]
        %v5320 = vperm.slane %v5318, 0
        %v5330 = vunpack.c.l.b16 %v5310
        %v5331 = vunpack.c.l.b16 %v5311
        %v5332 = vunpack.c.l.b16 %v5312
        %v5333 = vunpack.c.l.b16 %v5313
        %v5334 = vunpack.c.l.b16 %v5314
        %v5335 = vunpack.c.l.b16 %v5315
        %v5336 = vunpack.c.l.b16 %v5316
        %v5337 = vunpack.c.l.b16 %v5317
        %v5338 = vpack.c.b16 %v5331, %v5330
        %v5339 = vpack.c.b16 %v5333, %v5332
        %v5340 = vpack.c.b16 %v5335, %v5334
        %v5341 = vpack.c.b16 %v5337, %v5336
        %v5347 = vsel %vm946, %v5302, 0
        %v5350 = vsel %vm946, %v5303, 0
        %v5353 = vsel %vm946, %v5304, 0
        %v5356 = vsel %vm946, %v5305, 0
        %v5359 = vsel %vm946, %v5306, 0
        %v5362 = vsel %vm946, %v5307, 0
        %v5365 = vsel %vm946, %v5308, 0
        %v5368 = vsel %vm946, %v5309, 0
        %5370 = vmatpush.bf16.msra.mxu0 0
        %5371 = vmatpush.bf16.msra.mxu0 0
        %5372 = vmatpush.bf16.msra.mxu0 0
        %5373 = vmatpush.bf16.msra.mxu0 0
        %5374 = vmatpush.bf16.msra.mxu0 %v5341
        %5375 = vmatpush.bf16.msra.mxu0 %v5340
        %5376 = vmatpush.bf16.msra.mxu0 %v5339
        %5377 = vmatpush.bf16.msra.mxu0 %v5338
        %5378 = vmatmul.bf16.gmra.mxu0 %v5347
        %v5379 = vpop.f32.mrf.mxu0
        %v5380 = vadd.f32 %v5320, %v5379
        %v5381 = vpop.f32.mrf.mxu0
        %v5382 = vadd.f32 %v5320, %v5381
        %5383 = vmatmul.bf16.gmra.mxu0 %v5350
        %v5384 = vpop.f32.mrf.mxu0
        %v5385 = vadd.f32 %v5320, %v5384
        %v5386 = vpop.f32.mrf.mxu0
        %v5387 = vadd.f32 %v5320, %v5386
        %5388 = vmatmul.bf16.gmra.mxu0 %v5353
        %v5389 = vpop.f32.mrf.mxu0
        %v5390 = vadd.f32 %v5320, %v5389
        %v5391 = vpop.f32.mrf.mxu0
        %v5392 = vadd.f32 %v5320, %v5391
        %5393 = vmatmul.bf16.gmra.mxu0 %v5356
        %v5394 = vpop.f32.mrf.mxu0
        %v5395 = vadd.f32 %v5320, %v5394
        %v5396 = vpop.f32.mrf.mxu0
        %v5397 = vadd.f32 %v5320, %v5396
        %5398 = vmatmul.bf16.gmra.mxu0 %v5359
        %v5399 = vpop.f32.mrf.mxu0
        %v5400 = vadd.f32 %v5320, %v5399
        %v5401 = vpop.f32.mrf.mxu0
        %v5402 = vadd.f32 %v5320, %v5401
        %5403 = vmatmul.bf16.gmra.mxu0 %v5362
        %v5404 = vpop.f32.mrf.mxu0
        %v5405 = vadd.f32 %v5320, %v5404
        %v5406 = vpop.f32.mrf.mxu0
        %v5407 = vadd.f32 %v5320, %v5406
        %5408 = vmatmul.bf16.gmra.mxu0 %v5365
        %v5409 = vpop.f32.mrf.mxu0
        %v5410 = vadd.f32 %v5320, %v5409
        %v5411 = vpop.f32.mrf.mxu0
        %v5412 = vadd.f32 %v5320, %v5411
        %5413 = vmatmul.bf16.gmra.mxu0 %v5368
        %v5414 = vpop.f32.mrf.mxu0
        %v5415 = vadd.f32 %v5320, %v5414
        %v5416 = vpop.f32.mrf.mxu0
        %v5417 = vadd.f32 %v5320, %v5416
        %5418 = vdwg.mxu0
        %v5419 = vmax.f32 %v5380, 0.0
        %v5420 = vmax.f32 %v5382, 0.0
        %v5421 = vmax.f32 %v5385, 0.0
        %v5422 = vmax.f32 %v5387, 0.0
        %v5423 = vmax.f32 %v5390, 0.0
        %v5424 = vmax.f32 %v5392, 0.0
        %v5425 = vmax.f32 %v5395, 0.0
        %v5426 = vmax.f32 %v5397, 0.0
        %v5427 = vmax.f32 %v5400, 0.0
        %v5428 = vmax.f32 %v5402, 0.0
        %v5429 = vmax.f32 %v5405, 0.0
        %v5430 = vmax.f32 %v5407, 0.0
        %v5431 = vmax.f32 %v5410, 0.0
        %v5432 = vmax.f32 %v5412, 0.0
        %v5433 = vmax.f32 %v5415, 0.0
        %v5434 = vmax.f32 %v5417, 0.0
        %v5435 = vpack.c.bf16 %v5420, %v5419
        %v5436 = vpack.c.bf16 %v5422, %v5421
        %v5437 = vpack.c.bf16 %v5424, %v5423
        %v5438 = vpack.c.bf16 %v5426, %v5425
        %v5439 = vpack.c.bf16 %v5428, %v5427
        %v5440 = vpack.c.bf16 %v5430, %v5429
        %v5441 = vpack.c.bf16 %v5432, %v5431
        %v5442 = vpack.c.bf16 %v5434, %v5433
        %v5443 = vld [vmem:[%s9] sm:$0xf]
        %v5444 = vld [vmem:[%s9 + $0x4] sm:$0xf]
        %v5445 = vld [vmem:[%s9 + $0x8] sm:$0xf]
        %v5446 = vld [vmem:[%s9 + $0xc] sm:$0xf]
        %v5447 = vld [vmem:[%s9 + $0x10] sm:$0xf]
        %v5448 = vld [vmem:[%s9 + $0x14] sm:$0xf]
        %v5449 = vld [vmem:[%s9 + $0x18] sm:$0xf]
        %v5450 = vld [vmem:[%s9 + $0x1c] sm:$0xf]
        %v5451 = vld [vmem:[#allocation9 + $0x13] sm:$0x1]
        %v5453 = vperm.slane %v5451, 0
        %v5463 = vunpack.c.l.b16 %v5443
        %v5464 = vunpack.c.l.b16 %v5444
        %v5465 = vunpack.c.l.b16 %v5445
        %v5466 = vunpack.c.l.b16 %v5446
        %v5467 = vunpack.c.l.b16 %v5447
        %v5468 = vunpack.c.l.b16 %v5448
        %v5469 = vunpack.c.l.b16 %v5449
        %v5470 = vunpack.c.l.b16 %v5450
        %v5471 = vpack.c.b16 %v5464, %v5463
        %v5472 = vpack.c.b16 %v5466, %v5465
        %v5473 = vpack.c.b16 %v5468, %v5467
        %v5474 = vpack.c.b16 %v5470, %v5469
        %v5480 = vsel %vm946, %v5435, 0
        %v5483 = vsel %vm946, %v5436, 0
        %v5486 = vsel %vm946, %v5437, 0
        %v5489 = vsel %vm946, %v5438, 0
        %v5492 = vsel %vm946, %v5439, 0
        %v5495 = vsel %vm946, %v5440, 0
        %v5498 = vsel %vm946, %v5441, 0
        %v5501 = vsel %vm946, %v5442, 0
        %5503 = vmatpush.bf16.msra.mxu0 0
        %5504 = vmatpush.bf16.msra.mxu0 0
        %5505 = vmatpush.bf16.msra.mxu0 0
        %5506 = vmatpush.bf16.msra.mxu0 0
        %5507 = vmatpush.bf16.msra.mxu0 %v5474
        %5508 = vmatpush.bf16.msra.mxu0 %v5473
        %5509 = vmatpush.bf16.msra.mxu0 %v5472
        %5510 = vmatpush.bf16.msra.mxu0 %v5471
        %5511 = vmatmul.bf16.gmra.mxu0 %v5480
        %v5512 = vpop.f32.mrf.mxu0
        %v5513 = vadd.f32 %v5453, %v5512
        %v5514 = vpop.f32.mrf.mxu0
        %v5515 = vadd.f32 %v5453, %v5514
        %5516 = vmatmul.bf16.gmra.mxu0 %v5483
        %v5517 = vpop.f32.mrf.mxu0
        %v5518 = vadd.f32 %v5453, %v5517
        %v5519 = vpop.f32.mrf.mxu0
        %v5520 = vadd.f32 %v5453, %v5519
        %5521 = vmatmul.bf16.gmra.mxu0 %v5486
        %v5522 = vpop.f32.mrf.mxu0
        %v5523 = vadd.f32 %v5453, %v5522
        %v5524 = vpop.f32.mrf.mxu0
        %v5525 = vadd.f32 %v5453, %v5524
        %5526 = vmatmul.bf16.gmra.mxu0 %v5489
        %v5527 = vpop.f32.mrf.mxu0
        %v5528 = vadd.f32 %v5453, %v5527
        %v5529 = vpop.f32.mrf.mxu0
        %v5530 = vadd.f32 %v5453, %v5529
        %5531 = vmatmul.bf16.gmra.mxu0 %v5492
        %v5532 = vpop.f32.mrf.mxu0
        %v5533 = vadd.f32 %v5453, %v5532
        %v5534 = vpop.f32.mrf.mxu0
        %v5535 = vadd.f32 %v5453, %v5534
        %5536 = vmatmul.bf16.gmra.mxu0 %v5495
        %v5537 = vpop.f32.mrf.mxu0
        %v5538 = vadd.f32 %v5453, %v5537
        %v5539 = vpop.f32.mrf.mxu0
        %v5540 = vadd.f32 %v5453, %v5539
        %5541 = vmatmul.bf16.gmra.mxu0 %v5498
        %v5542 = vpop.f32.mrf.mxu0
        %v5543 = vadd.f32 %v5453, %v5542
        %v5544 = vpop.f32.mrf.mxu0
        %v5545 = vadd.f32 %v5453, %v5544
        %5546 = vmatmul.bf16.gmra.mxu0 %v5501
        %v5547 = vpop.f32.mrf.mxu0
        %v5548 = vadd.f32 %v5453, %v5547
        %v5549 = vpop.f32.mrf.mxu0
        %v5550 = vadd.f32 %v5453, %v5549
        %5551 = vdwg.mxu0
        %v5552 = vmax.f32 %v5513, 0.0
        %v5553 = vmax.f32 %v5515, 0.0
        %v5554 = vmax.f32 %v5518, 0.0
        %v5555 = vmax.f32 %v5520, 0.0
        %v5556 = vmax.f32 %v5523, 0.0
        %v5557 = vmax.f32 %v5525, 0.0
        %v5558 = vmax.f32 %v5528, 0.0
        %v5559 = vmax.f32 %v5530, 0.0
        %v5560 = vmax.f32 %v5533, 0.0
        %v5561 = vmax.f32 %v5535, 0.0
        %v5562 = vmax.f32 %v5538, 0.0
        %v5563 = vmax.f32 %v5540, 0.0
        %v5564 = vmax.f32 %v5543, 0.0
        %v5565 = vmax.f32 %v5545, 0.0
        %v5566 = vmax.f32 %v5548, 0.0
        %v5567 = vmax.f32 %v5550, 0.0
        %v5568 = vpack.c.bf16 %v5553, %v5552
        %v5569 = vpack.c.bf16 %v5555, %v5554
        %v5570 = vpack.c.bf16 %v5557, %v5556
        %v5571 = vpack.c.bf16 %v5559, %v5558
        %v5572 = vpack.c.bf16 %v5561, %v5560
        %v5573 = vpack.c.bf16 %v5563, %v5562
        %v5574 = vpack.c.bf16 %v5565, %v5564
        %v5575 = vpack.c.bf16 %v5567, %v5566
        %v5576 = vld [vmem:[%s10] sm:$0xf]
        %v5577 = vld [vmem:[%s10 + $0x4] sm:$0xf]
        %v5578 = vld [vmem:[%s10 + $0x8] sm:$0xf]
        %v5579 = vld [vmem:[%s10 + $0xc] sm:$0xf]
        %v5580 = vld [vmem:[%s10 + $0x10] sm:$0xf]
        %v5581 = vld [vmem:[%s10 + $0x14] sm:$0xf]
        %v5582 = vld [vmem:[%s10 + $0x18] sm:$0xf]
        %v5583 = vld [vmem:[%s10 + $0x1c] sm:$0xf]
        %v5584 = vld [vmem:[#allocation9 + $0x14] sm:$0x1]
        %v5586 = vperm.slane %v5584, 0
        %v5596 = vunpack.c.l.b16 %v5576
        %v5597 = vunpack.c.l.b16 %v5577
        %v5598 = vunpack.c.l.b16 %v5578
        %v5599 = vunpack.c.l.b16 %v5579
        %v5600 = vunpack.c.l.b16 %v5580
        %v5601 = vunpack.c.l.b16 %v5581
        %v5602 = vunpack.c.l.b16 %v5582
        %v5603 = vunpack.c.l.b16 %v5583
        %v5604 = vpack.c.b16 %v5597, %v5596
        %v5605 = vpack.c.b16 %v5599, %v5598
        %v5606 = vpack.c.b16 %v5601, %v5600
        %v5607 = vpack.c.b16 %v5603, %v5602
        %v5613 = vsel %vm946, %v5568, 0
        %v5616 = vsel %vm946, %v5569, 0
        %v5619 = vsel %vm946, %v5570, 0
        %v5622 = vsel %vm946, %v5571, 0
        %v5625 = vsel %vm946, %v5572, 0
        %v5628 = vsel %vm946, %v5573, 0
        %v5631 = vsel %vm946, %v5574, 0
        %v5634 = vsel %vm946, %v5575, 0
        %5636 = vmatpush.bf16.msra.mxu0 0
        %5637 = vmatpush.bf16.msra.mxu0 0
        %5638 = vmatpush.bf16.msra.mxu0 0
        %5639 = vmatpush.bf16.msra.mxu0 0
        %5640 = vmatpush.bf16.msra.mxu0 %v5607
        %5641 = vmatpush.bf16.msra.mxu0 %v5606
        %5642 = vmatpush.bf16.msra.mxu0 %v5605
        %5643 = vmatpush.bf16.msra.mxu0 %v5604
        %5644 = vmatmul.bf16.gmra.mxu0 %v5613
        %v5645 = vpop.f32.mrf.mxu0
        %v5646 = vadd.f32 %v5586, %v5645
        %v5647 = vpop.f32.mrf.mxu0
        %v5648 = vadd.f32 %v5586, %v5647
        %5649 = vmatmul.bf16.gmra.mxu0 %v5616
        %v5650 = vpop.f32.mrf.mxu0
        %v5651 = vadd.f32 %v5586, %v5650
        %v5652 = vpop.f32.mrf.mxu0
        %v5653 = vadd.f32 %v5586, %v5652
        %5654 = vmatmul.bf16.gmra.mxu0 %v5619
        %v5655 = vpop.f32.mrf.mxu0
        %v5656 = vadd.f32 %v5586, %v5655
        %v5657 = vpop.f32.mrf.mxu0
        %v5658 = vadd.f32 %v5586, %v5657
        %5659 = vmatmul.bf16.gmra.mxu0 %v5622
        %v5660 = vpop.f32.mrf.mxu0
        %v5661 = vadd.f32 %v5586, %v5660
        %v5662 = vpop.f32.mrf.mxu0
        %v5663 = vadd.f32 %v5586, %v5662
        %5664 = vmatmul.bf16.gmra.mxu0 %v5625
        %v5665 = vpop.f32.mrf.mxu0
        %v5666 = vadd.f32 %v5586, %v5665
        %v5667 = vpop.f32.mrf.mxu0
        %v5668 = vadd.f32 %v5586, %v5667
        %5669 = vmatmul.bf16.gmra.mxu0 %v5628
        %v5670 = vpop.f32.mrf.mxu0
        %v5671 = vadd.f32 %v5586, %v5670
        %v5672 = vpop.f32.mrf.mxu0
        %v5673 = vadd.f32 %v5586, %v5672
        %5674 = vmatmul.bf16.gmra.mxu0 %v5631
        %v5675 = vpop.f32.mrf.mxu0
        %v5676 = vadd.f32 %v5586, %v5675
        %v5677 = vpop.f32.mrf.mxu0
        %v5678 = vadd.f32 %v5586, %v5677
        %5679 = vmatmul.bf16.gmra.mxu0 %v5634
        %v5680 = vpop.f32.mrf.mxu0
        %v5681 = vadd.f32 %v5586, %v5680
        %v5682 = vpop.f32.mrf.mxu0
        %v5683 = vadd.f32 %v5586, %v5682
        %5684 = vdwg.mxu0
        %v5685 = vmax.f32 %v5646, 0.0
        %v5686 = vmax.f32 %v5648, 0.0
        %v5687 = vmax.f32 %v5651, 0.0
        %v5688 = vmax.f32 %v5653, 0.0
        %v5689 = vmax.f32 %v5656, 0.0
        %v5690 = vmax.f32 %v5658, 0.0
        %v5691 = vmax.f32 %v5661, 0.0
        %v5692 = vmax.f32 %v5663, 0.0
        %v5693 = vmax.f32 %v5666, 0.0
        %v5694 = vmax.f32 %v5668, 0.0
        %v5695 = vmax.f32 %v5671, 0.0
        %v5696 = vmax.f32 %v5673, 0.0
        %v5697 = vmax.f32 %v5676, 0.0
        %v5698 = vmax.f32 %v5678, 0.0
        %v5699 = vmax.f32 %v5681, 0.0
        %v5700 = vmax.f32 %v5683, 0.0
        %v5701 = vpack.c.bf16 %v5686, %v5685
        %v5702 = vpack.c.bf16 %v5688, %v5687
        %v5703 = vpack.c.bf16 %v5690, %v5689
        %v5704 = vpack.c.bf16 %v5692, %v5691
        %v5705 = vpack.c.bf16 %v5694, %v5693
        %v5706 = vpack.c.bf16 %v5696, %v5695
        %v5707 = vpack.c.bf16 %v5698, %v5697
        %v5708 = vpack.c.bf16 %v5700, %v5699
        %v5709 = vld [vmem:[#allocation7] sm:$0xff]
        %v5710 = vld [vmem:[#allocation7 + $0x8] sm:$0xff]
        %v5711 = vld [vmem:[#allocation7 + $0x10] sm:$0xff]
        %v5712 = vld [vmem:[#allocation7 + $0x18] sm:$0xff]
        %v5713 = vld [vmem:[#allocation7 + $0x20] sm:$0xff]
        %v5714 = vld [vmem:[#allocation7 + $0x28] sm:$0xff]
        %v5715 = vld [vmem:[#allocation7 + $0x30] sm:$0xff]
        %v5716 = vld [vmem:[#allocation7 + $0x38] sm:$0xff]
        %v5717 = vld [vmem:[#allocation7 + $0x40] sm:$0xff]
        %v5718 = vld [vmem:[#allocation7 + $0x48] sm:$0xff]
        %v5719 = vld [vmem:[#allocation7 + $0x50] sm:$0xff]
        %v5720 = vld [vmem:[#allocation7 + $0x58] sm:$0xff]
        %v5721 = vld [vmem:[#allocation7 + $0x60] sm:$0xff]
        %v5722 = vld [vmem:[#allocation7 + $0x68] sm:$0xff]
        %v5723 = vld [vmem:[#allocation7 + $0x70] sm:$0xff]
        %v5724 = vld [vmem:[#allocation7 + $0x78] sm:$0xff]
        %v5725 = vld [vmem:[#allocation7 + $0x80] sm:$0xff]
        %v5726 = vld [vmem:[#allocation7 + $0x88] sm:$0xff]
        %v5727 = vld [vmem:[#allocation7 + $0x90] sm:$0xff]
        %v5728 = vld [vmem:[#allocation7 + $0x98] sm:$0xff]
        %v5729 = vld [vmem:[#allocation7 + $0xa0] sm:$0xff]
        %v5730 = vld [vmem:[#allocation7 + $0xa8] sm:$0xff]
        %v5731 = vld [vmem:[#allocation7 + $0xb0] sm:$0xff]
        %v5732 = vld [vmem:[#allocation7 + $0xb8] sm:$0xff]
        %v5733 = vld [vmem:[#allocation7 + $0xc0] sm:$0xff]
        %v5734 = vld [vmem:[#allocation7 + $0xc8] sm:$0xff]
        %v5735 = vld [vmem:[#allocation7 + $0xd0] sm:$0xff]
        %v5736 = vld [vmem:[#allocation7 + $0xd8] sm:$0xff]
        %v5737 = vld [vmem:[#allocation7 + $0xe0] sm:$0xff]
        %v5738 = vld [vmem:[#allocation7 + $0xe8] sm:$0xff]
        %v5739 = vld [vmem:[#allocation7 + $0xf0] sm:$0xff]
        %v5740 = vld [vmem:[#allocation7 + $0xf8] sm:$0xff]
        %v5741 = vld [vmem:[#allocation7 + $0x100] sm:$0xff]
        %v5742 = vld [vmem:[#allocation7 + $0x108] sm:$0xff]
        %v5743 = vld [vmem:[#allocation7 + $0x110] sm:$0xff]
        %v5744 = vld [vmem:[#allocation7 + $0x118] sm:$0xff]
        %v5745 = vld [vmem:[#allocation7 + $0x120] sm:$0xff]
        %v5746 = vld [vmem:[#allocation7 + $0x128] sm:$0xff]
        %v5747 = vld [vmem:[#allocation7 + $0x130] sm:$0xff]
        %v5748 = vld [vmem:[#allocation7 + $0x138] sm:$0xff]
        %v5749 = vld [vmem:[#allocation7 + $0x140] sm:$0xff]
        %v5750 = vld [vmem:[#allocation7 + $0x148] sm:$0xff]
        %v5751 = vld [vmem:[#allocation7 + $0x150] sm:$0xff]
        %v5752 = vld [vmem:[#allocation7 + $0x158] sm:$0xff]
        %v5753 = vld [vmem:[#allocation7 + $0x160] sm:$0xff]
        %v5754 = vld [vmem:[#allocation7 + $0x168] sm:$0xff]
        %v5755 = vld [vmem:[#allocation7 + $0x170] sm:$0xff]
        %v5756 = vld [vmem:[#allocation7 + $0x178] sm:$0xff]
        %v5757 = vld [vmem:[#allocation7 + $0x180] sm:$0xff]
        %v5758 = vld [vmem:[#allocation7 + $0x188] sm:$0xff]
        %v5759 = vld [vmem:[#allocation7 + $0x190] sm:$0xff]
        %v5760 = vld [vmem:[#allocation7 + $0x198] sm:$0xff]
        %v5761 = vld [vmem:[#allocation7 + $0x1a0] sm:$0xff]
        %v5762 = vld [vmem:[#allocation7 + $0x1a8] sm:$0xff]
        %v5763 = vld [vmem:[#allocation7 + $0x1b0] sm:$0xff]
        %v5764 = vld [vmem:[#allocation7 + $0x1b8] sm:$0xff]
        %v5765 = vld [vmem:[#allocation7 + $0x1c0] sm:$0xff]
        %v5766 = vld [vmem:[#allocation7 + $0x1c8] sm:$0xff]
        %v5767 = vld [vmem:[#allocation7 + $0x1d0] sm:$0xff]
        %v5768 = vld [vmem:[#allocation7 + $0x1d8] sm:$0xff]
        %v5769 = vld [vmem:[#allocation7 + $0x1e0] sm:$0xff]
        %v5770 = vld [vmem:[#allocation7 + $0x1e8] sm:$0xff]
        %v5771 = vld [vmem:[#allocation7 + $0x1f0] sm:$0xff]
        %v5772 = vld [vmem:[#allocation7 + $0x1f8] sm:$0xff]
        %v5773 = vld [vmem:[#allocation9 + $0x15] sm:$0xff]
        %v5775 = vperm.slane %v5773, 0
        %v5776 = vperm.slane %v5773, 1
        %v5777 = vperm.slane %v5773, 2
        %v5778 = vperm.slane %v5773, 3
        %v5779 = vperm.slane %v5773, 4
        %v5780 = vperm.slane %v5773, 5
        %v5781 = vperm.slane %v5773, 6
        %v5782 = vperm.slane %v5773, 7
        %v5855 = vunpack.c.l.b16 %v5709
        %v5856 = vunpack.c.h.b16 %v5709
        %v5857 = vunpack.c.l.b16 %v5710
        %v5858 = vunpack.c.h.b16 %v5710
        %v5859 = vunpack.c.l.b16 %v5711
        %v5860 = vunpack.c.h.b16 %v5711
        %v5861 = vunpack.c.l.b16 %v5712
        %v5862 = vunpack.c.h.b16 %v5712
        %v5863 = vunpack.c.l.b16 %v5713
        %v5864 = vunpack.c.h.b16 %v5713
        %v5865 = vunpack.c.l.b16 %v5714
        %v5866 = vunpack.c.h.b16 %v5714
        %v5867 = vunpack.c.l.b16 %v5715
        %v5868 = vunpack.c.h.b16 %v5715
        %v5869 = vunpack.c.l.b16 %v5716
        %v5870 = vunpack.c.h.b16 %v5716
        %v5871 = vunpack.c.l.b16 %v5717
        %v5872 = vunpack.c.h.b16 %v5717
        %v5873 = vunpack.c.l.b16 %v5718
        %v5874 = vunpack.c.h.b16 %v5718
        %v5875 = vunpack.c.l.b16 %v5719
        %v5876 = vunpack.c.h.b16 %v5719
        %v5877 = vunpack.c.l.b16 %v5720
        %v5878 = vunpack.c.h.b16 %v5720
        %v5879 = vunpack.c.l.b16 %v5721
        %v5880 = vunpack.c.h.b16 %v5721
        %v5881 = vunpack.c.l.b16 %v5722
        %v5882 = vunpack.c.h.b16 %v5722
        %v5883 = vunpack.c.l.b16 %v5723
        %v5884 = vunpack.c.h.b16 %v5723
        %v5885 = vunpack.c.l.b16 %v5724
        %v5886 = vunpack.c.h.b16 %v5724
        %v5887 = vunpack.c.l.b16 %v5725
        %v5888 = vunpack.c.h.b16 %v5725
        %v5889 = vunpack.c.l.b16 %v5726
        %v5890 = vunpack.c.h.b16 %v5726
        %v5891 = vunpack.c.l.b16 %v5727
        %v5892 = vunpack.c.h.b16 %v5727
        %v5893 = vunpack.c.l.b16 %v5728
        %v5894 = vunpack.c.h.b16 %v5728
        %v5895 = vunpack.c.l.b16 %v5729
        %v5896 = vunpack.c.h.b16 %v5729
        %v5897 = vunpack.c.l.b16 %v5730
        %v5898 = vunpack.c.h.b16 %v5730
        %v5899 = vunpack.c.l.b16 %v5731
        %v5900 = vunpack.c.h.b16 %v5731
        %v5901 = vunpack.c.l.b16 %v5732
        %v5902 = vunpack.c.h.b16 %v5732
        %v5903 = vunpack.c.l.b16 %v5733
        %v5904 = vunpack.c.h.b16 %v5733
        %v5905 = vunpack.c.l.b16 %v5734
        %v5906 = vunpack.c.h.b16 %v5734
        %v5907 = vunpack.c.l.b16 %v5735
        %v5908 = vunpack.c.h.b16 %v5735
        %v5909 = vunpack.c.l.b16 %v5736
        %v5910 = vunpack.c.h.b16 %v5736
        %v5911 = vunpack.c.l.b16 %v5737
        %v5912 = vunpack.c.h.b16 %v5737
        %v5913 = vunpack.c.l.b16 %v5738
        %v5914 = vunpack.c.h.b16 %v5738
        %v5915 = vunpack.c.l.b16 %v5739
        %v5916 = vunpack.c.h.b16 %v5739
        %v5917 = vunpack.c.l.b16 %v5740
        %v5918 = vunpack.c.h.b16 %v5740
        %v5919 = vunpack.c.l.b16 %v5741
        %v5920 = vunpack.c.h.b16 %v5741
        %v5921 = vunpack.c.l.b16 %v5742
        %v5922 = vunpack.c.h.b16 %v5742
        %v5923 = vunpack.c.l.b16 %v5743
        %v5924 = vunpack.c.h.b16 %v5743
        %v5925 = vunpack.c.l.b16 %v5744
        %v5926 = vunpack.c.h.b16 %v5744
        %v5927 = vunpack.c.l.b16 %v5745
        %v5928 = vunpack.c.h.b16 %v5745
        %v5929 = vunpack.c.l.b16 %v5746
        %v5930 = vunpack.c.h.b16 %v5746
        %v5931 = vunpack.c.l.b16 %v5747
        %v5932 = vunpack.c.h.b16 %v5747
        %v5933 = vunpack.c.l.b16 %v5748
        %v5934 = vunpack.c.h.b16 %v5748
        %v5935 = vunpack.c.l.b16 %v5749
        %v5936 = vunpack.c.h.b16 %v5749
        %v5937 = vunpack.c.l.b16 %v5750
        %v5938 = vunpack.c.h.b16 %v5750
        %v5939 = vunpack.c.l.b16 %v5751
        %v5940 = vunpack.c.h.b16 %v5751
        %v5941 = vunpack.c.l.b16 %v5752
        %v5942 = vunpack.c.h.b16 %v5752
        %v5943 = vunpack.c.l.b16 %v5753
        %v5944 = vunpack.c.h.b16 %v5753
        %v5945 = vunpack.c.l.b16 %v5754
        %v5946 = vunpack.c.h.b16 %v5754
        %v5947 = vunpack.c.l.b16 %v5755
        %v5948 = vunpack.c.h.b16 %v5755
        %v5949 = vunpack.c.l.b16 %v5756
        %v5950 = vunpack.c.h.b16 %v5756
        %v5951 = vunpack.c.l.b16 %v5757
        %v5952 = vunpack.c.h.b16 %v5757
        %v5953 = vunpack.c.l.b16 %v5758
        %v5954 = vunpack.c.h.b16 %v5758
        %v5955 = vunpack.c.l.b16 %v5759
        %v5956 = vunpack.c.h.b16 %v5759
        %v5957 = vunpack.c.l.b16 %v5760
        %v5958 = vunpack.c.h.b16 %v5760
        %v5959 = vunpack.c.l.b16 %v5761
        %v5960 = vunpack.c.h.b16 %v5761
        %v5961 = vunpack.c.l.b16 %v5762
        %v5962 = vunpack.c.h.b16 %v5762
        %v5963 = vunpack.c.l.b16 %v5763
        %v5964 = vunpack.c.h.b16 %v5763
        %v5965 = vunpack.c.l.b16 %v5764
        %v5966 = vunpack.c.h.b16 %v5764
        %v5967 = vunpack.c.l.b16 %v5765
        %v5968 = vunpack.c.h.b16 %v5765
        %v5969 = vunpack.c.l.b16 %v5766
        %v5970 = vunpack.c.h.b16 %v5766
        %v5971 = vunpack.c.l.b16 %v5767
        %v5972 = vunpack.c.h.b16 %v5767
        %v5973 = vunpack.c.l.b16 %v5768
        %v5974 = vunpack.c.h.b16 %v5768
        %v5975 = vunpack.c.l.b16 %v5769
        %v5976 = vunpack.c.h.b16 %v5769
        %v5977 = vunpack.c.l.b16 %v5770
        %v5978 = vunpack.c.h.b16 %v5770
        %v5979 = vunpack.c.l.b16 %v5771
        %v5980 = vunpack.c.h.b16 %v5771
        %v5981 = vunpack.c.l.b16 %v5772
        %v5982 = vunpack.c.h.b16 %v5772
        %v5983 = vpack.c.b16 %v5863, %v5855
        %v5984 = vpack.c.b16 %v5864, %v5856
        %v5985 = vpack.c.b16 %v5865, %v5857
        %v5986 = vpack.c.b16 %v5866, %v5858
        %v5987 = vpack.c.b16 %v5867, %v5859
        %v5988 = vpack.c.b16 %v5868, %v5860
        %v5989 = vpack.c.b16 %v5869, %v5861
        %v5990 = vpack.c.b16 %v5870, %v5862
        %v5991 = vpack.c.b16 %v5879, %v5871
        %v5992 = vpack.c.b16 %v5880, %v5872
        %v5993 = vpack.c.b16 %v5881, %v5873
        %v5994 = vpack.c.b16 %v5882, %v5874
        %v5995 = vpack.c.b16 %v5883, %v5875
        %v5996 = vpack.c.b16 %v5884, %v5876
        %v5997 = vpack.c.b16 %v5885, %v5877
        %v5998 = vpack.c.b16 %v5886, %v5878
        %v5999 = vpack.c.b16 %v5895, %v5887
        %v6000 = vpack.c.b16 %v5896, %v5888
        %v6001 = vpack.c.b16 %v5897, %v5889
        %v6002 = vpack.c.b16 %v5898, %v5890
        %v6003 = vpack.c.b16 %v5899, %v5891
        %v6004 = vpack.c.b16 %v5900, %v5892
        %v6005 = vpack.c.b16 %v5901, %v5893
        %v6006 = vpack.c.b16 %v5902, %v5894
        %v6007 = vpack.c.b16 %v5911, %v5903
        %v6008 = vpack.c.b16 %v5912, %v5904
        %v6009 = vpack.c.b16 %v5913, %v5905
        %v6010 = vpack.c.b16 %v5914, %v5906
        %v6011 = vpack.c.b16 %v5915, %v5907
        %v6012 = vpack.c.b16 %v5916, %v5908
        %v6013 = vpack.c.b16 %v5917, %v5909
        %v6014 = vpack.c.b16 %v5918, %v5910
        %v6015 = vpack.c.b16 %v5927, %v5919
        %v6016 = vpack.c.b16 %v5928, %v5920
        %v6017 = vpack.c.b16 %v5929, %v5921
        %v6018 = vpack.c.b16 %v5930, %v5922
        %v6019 = vpack.c.b16 %v5931, %v5923
        %v6020 = vpack.c.b16 %v5932, %v5924
        %v6021 = vpack.c.b16 %v5933, %v5925
        %v6022 = vpack.c.b16 %v5934, %v5926
        %v6023 = vpack.c.b16 %v5943, %v5935
        %v6024 = vpack.c.b16 %v5944, %v5936
        %v6025 = vpack.c.b16 %v5945, %v5937
        %v6026 = vpack.c.b16 %v5946, %v5938
        %v6027 = vpack.c.b16 %v5947, %v5939
        %v6028 = vpack.c.b16 %v5948, %v5940
        %v6029 = vpack.c.b16 %v5949, %v5941
        %v6030 = vpack.c.b16 %v5950, %v5942
        %v6031 = vpack.c.b16 %v5959, %v5951
        %v6032 = vpack.c.b16 %v5960, %v5952
        %v6033 = vpack.c.b16 %v5961, %v5953
        %v6034 = vpack.c.b16 %v5962, %v5954
        %v6035 = vpack.c.b16 %v5963, %v5955
        %v6036 = vpack.c.b16 %v5964, %v5956
        %v6037 = vpack.c.b16 %v5965, %v5957
        %v6038 = vpack.c.b16 %v5966, %v5958
        %v6039 = vpack.c.b16 %v5975, %v5967
        %v6040 = vpack.c.b16 %v5976, %v5968
        %v6041 = vpack.c.b16 %v5977, %v5969
        %v6042 = vpack.c.b16 %v5978, %v5970
        %v6043 = vpack.c.b16 %v5979, %v5971
        %v6044 = vpack.c.b16 %v5980, %v5972
        %v6045 = vpack.c.b16 %v5981, %v5973
        %v6046 = vpack.c.b16 %v5982, %v5974
        %6111 = vmatpush.bf16.msra.mxu0 %v6039
        %6112 = vmatpush.bf16.msra.mxu0 %v6031
        %6113 = vmatpush.bf16.msra.mxu0 %v6023
        %6114 = vmatpush.bf16.msra.mxu0 %v6015
        %6115 = vmatpush.bf16.msra.mxu0 %v6007
        %6116 = vmatpush.bf16.msra.mxu0 %v5999
        %6117 = vmatpush.bf16.msra.mxu0 %v5991
        %6118 = vmatpush.bf16.msra.mxu0 %v5983
        %6119 = vmatmul.bf16.gmra.mxu0 %v5701
        %v6120 = vpop.f32.mrf.mxu0
        %v6121 = vadd.f32 %v5775, %v6120
        %v6122 = vpop.f32.mrf.mxu0
        %v6123 = vadd.f32 %v5775, %v6122
        %6124 = vmatmul.bf16.gmra.mxu0 %v5702
        %v6125 = vpop.f32.mrf.mxu0
        %v6126 = vadd.f32 %v5775, %v6125
        %v6127 = vpop.f32.mrf.mxu0
        %v6128 = vadd.f32 %v5775, %v6127
        %6129 = vmatmul.bf16.gmra.mxu0 %v5703
        %v6130 = vpop.f32.mrf.mxu0
        %v6131 = vadd.f32 %v5775, %v6130
        %v6132 = vpop.f32.mrf.mxu0
        %v6133 = vadd.f32 %v5775, %v6132
        %6134 = vmatmul.bf16.gmra.mxu0 %v5704
        %v6135 = vpop.f32.mrf.mxu0
        %v6136 = vadd.f32 %v5775, %v6135
        %v6137 = vpop.f32.mrf.mxu0
        %v6138 = vadd.f32 %v5775, %v6137
        %6139 = vmatmul.bf16.gmra.mxu0 %v5705
        %v6140 = vpop.f32.mrf.mxu0
        %v6141 = vadd.f32 %v5775, %v6140
        %v6142 = vpop.f32.mrf.mxu0
        %v6143 = vadd.f32 %v5775, %v6142
        %6144 = vmatmul.bf16.gmra.mxu0 %v5706
        %v6145 = vpop.f32.mrf.mxu0
        %v6146 = vadd.f32 %v5775, %v6145
        %v6147 = vpop.f32.mrf.mxu0
        %v6148 = vadd.f32 %v5775, %v6147
        %6149 = vmatmul.bf16.gmra.mxu0 %v5707
        %v6150 = vpop.f32.mrf.mxu0
        %v6151 = vadd.f32 %v5775, %v6150
        %v6152 = vpop.f32.mrf.mxu0
        %v6153 = vadd.f32 %v5775, %v6152
        %6154 = vmatmul.bf16.gmra.mxu0 %v5708
        %v6155 = vpop.f32.mrf.mxu0
        %v6156 = vadd.f32 %v5775, %v6155
        %v6157 = vpop.f32.mrf.mxu0
        %v6158 = vadd.f32 %v5775, %v6157
        %6159 = vdwg.mxu0
        %6160 = vmatpush.bf16.msra.mxu0 %v6040
        %6161 = vmatpush.bf16.msra.mxu0 %v6032
        %6162 = vmatpush.bf16.msra.mxu0 %v6024
        %6163 = vmatpush.bf16.msra.mxu0 %v6016
        %6164 = vmatpush.bf16.msra.mxu0 %v6008
        %6165 = vmatpush.bf16.msra.mxu0 %v6000
        %6166 = vmatpush.bf16.msra.mxu0 %v5992
        %6167 = vmatpush.bf16.msra.mxu0 %v5984
        %6168 = vmatmul.bf16.gmra.mxu0 %v5701
        %v6169 = vpop.f32.mrf.mxu0
        %v6170 = vadd.f32 %v5776, %v6169
        %v6171 = vpop.f32.mrf.mxu0
        %v6172 = vadd.f32 %v5776, %v6171
        %6173 = vmatmul.bf16.gmra.mxu0 %v5702
        %v6174 = vpop.f32.mrf.mxu0
        %v6175 = vadd.f32 %v5776, %v6174
        %v6176 = vpop.f32.mrf.mxu0
        %v6177 = vadd.f32 %v5776, %v6176
        %6178 = vmatmul.bf16.gmra.mxu0 %v5703
        %v6179 = vpop.f32.mrf.mxu0
        %v6180 = vadd.f32 %v5776, %v6179
        %v6181 = vpop.f32.mrf.mxu0
        %v6182 = vadd.f32 %v5776, %v6181
        %6183 = vmatmul.bf16.gmra.mxu0 %v5704
        %v6184 = vpop.f32.mrf.mxu0
        %v6185 = vadd.f32 %v5776, %v6184
        %v6186 = vpop.f32.mrf.mxu0
        %v6187 = vadd.f32 %v5776, %v6186
        %6188 = vmatmul.bf16.gmra.mxu0 %v5705
        %v6189 = vpop.f32.mrf.mxu0
        %v6190 = vadd.f32 %v5776, %v6189
        %v6191 = vpop.f32.mrf.mxu0
        %v6192 = vadd.f32 %v5776, %v6191
        %6193 = vmatmul.bf16.gmra.mxu0 %v5706
        %v6194 = vpop.f32.mrf.mxu0
        %v6195 = vadd.f32 %v5776, %v6194
        %v6196 = vpop.f32.mrf.mxu0
        %v6197 = vadd.f32 %v5776, %v6196
        %6198 = vmatmul.bf16.gmra.mxu0 %v5707
        %v6199 = vpop.f32.mrf.mxu0
        %v6200 = vadd.f32 %v5776, %v6199
        %v6201 = vpop.f32.mrf.mxu0
        %v6202 = vadd.f32 %v5776, %v6201
        %6203 = vmatmul.bf16.gmra.mxu0 %v5708
        %v6204 = vpop.f32.mrf.mxu0
        %v6205 = vadd.f32 %v5776, %v6204
        %v6206 = vpop.f32.mrf.mxu0
        %v6207 = vadd.f32 %v5776, %v6206
        %6208 = vdwg.mxu0
        %6209 = vmatpush.bf16.msra.mxu0 %v6041
        %6210 = vmatpush.bf16.msra.mxu0 %v6033
        %6211 = vmatpush.bf16.msra.mxu0 %v6025
        %6212 = vmatpush.bf16.msra.mxu0 %v6017
        %6213 = vmatpush.bf16.msra.mxu0 %v6009
        %6214 = vmatpush.bf16.msra.mxu0 %v6001
        %6215 = vmatpush.bf16.msra.mxu0 %v5993
        %6216 = vmatpush.bf16.msra.mxu0 %v5985
        %6217 = vmatmul.bf16.gmra.mxu0 %v5701
        %v6218 = vpop.f32.mrf.mxu0
        %v6219 = vadd.f32 %v5777, %v6218
        %v6220 = vpop.f32.mrf.mxu0
        %v6221 = vadd.f32 %v5777, %v6220
        %6222 = vmatmul.bf16.gmra.mxu0 %v5702
        %v6223 = vpop.f32.mrf.mxu0
        %v6224 = vadd.f32 %v5777, %v6223
        %v6225 = vpop.f32.mrf.mxu0
        %v6226 = vadd.f32 %v5777, %v6225
        %6227 = vmatmul.bf16.gmra.mxu0 %v5703
        %v6228 = vpop.f32.mrf.mxu0
        %v6229 = vadd.f32 %v5777, %v6228
        %v6230 = vpop.f32.mrf.mxu0
        %v6231 = vadd.f32 %v5777, %v6230
        %6232 = vmatmul.bf16.gmra.mxu0 %v5704
        %v6233 = vpop.f32.mrf.mxu0
        %v6234 = vadd.f32 %v5777, %v6233
        %v6235 = vpop.f32.mrf.mxu0
        %v6236 = vadd.f32 %v5777, %v6235
        %6237 = vmatmul.bf16.gmra.mxu0 %v5705
        %v6238 = vpop.f32.mrf.mxu0
        %v6239 = vadd.f32 %v5777, %v6238
        %v6240 = vpop.f32.mrf.mxu0
        %v6241 = vadd.f32 %v5777, %v6240
        %6242 = vmatmul.bf16.gmra.mxu0 %v5706
        %v6243 = vpop.f32.mrf.mxu0
        %v6244 = vadd.f32 %v5777, %v6243
        %v6245 = vpop.f32.mrf.mxu0
        %v6246 = vadd.f32 %v5777, %v6245
        %6247 = vmatmul.bf16.gmra.mxu0 %v5707
        %v6248 = vpop.f32.mrf.mxu0
        %v6249 = vadd.f32 %v5777, %v6248
        %v6250 = vpop.f32.mrf.mxu0
        %v6251 = vadd.f32 %v5777, %v6250
        %6252 = vmatmul.bf16.gmra.mxu0 %v5708
        %v6253 = vpop.f32.mrf.mxu0
        %v6254 = vadd.f32 %v5777, %v6253
        %v6255 = vpop.f32.mrf.mxu0
        %v6256 = vadd.f32 %v5777, %v6255
        %6257 = vdwg.mxu0
        %6258 = vmatpush.bf16.msra.mxu0 %v6042
        %6259 = vmatpush.bf16.msra.mxu0 %v6034
        %6260 = vmatpush.bf16.msra.mxu0 %v6026
        %6261 = vmatpush.bf16.msra.mxu0 %v6018
        %6262 = vmatpush.bf16.msra.mxu0 %v6010
        %6263 = vmatpush.bf16.msra.mxu0 %v6002
        %6264 = vmatpush.bf16.msra.mxu0 %v5994
        %6265 = vmatpush.bf16.msra.mxu0 %v5986
        %6266 = vmatmul.bf16.gmra.mxu0 %v5701
        %v6267 = vpop.f32.mrf.mxu0
        %v6268 = vadd.f32 %v5778, %v6267
        %v6269 = vpop.f32.mrf.mxu0
        %v6270 = vadd.f32 %v5778, %v6269
        %6271 = vmatmul.bf16.gmra.mxu0 %v5702
        %v6272 = vpop.f32.mrf.mxu0
        %v6273 = vadd.f32 %v5778, %v6272
        %v6274 = vpop.f32.mrf.mxu0
        %v6275 = vadd.f32 %v5778, %v6274
        %6276 = vmatmul.bf16.gmra.mxu0 %v5703
        %v6277 = vpop.f32.mrf.mxu0
        %v6278 = vadd.f32 %v5778, %v6277
        %v6279 = vpop.f32.mrf.mxu0
        %v6280 = vadd.f32 %v5778, %v6279
        %6281 = vmatmul.bf16.gmra.mxu0 %v5704
        %v6282 = vpop.f32.mrf.mxu0
        %v6283 = vadd.f32 %v5778, %v6282
        %v6284 = vpop.f32.mrf.mxu0
        %v6285 = vadd.f32 %v5778, %v6284
        %6286 = vmatmul.bf16.gmra.mxu0 %v5705
        %v6287 = vpop.f32.mrf.mxu0
        %v6288 = vadd.f32 %v5778, %v6287
        %v6289 = vpop.f32.mrf.mxu0
        %v6290 = vadd.f32 %v5778, %v6289
        %6291 = vmatmul.bf16.gmra.mxu0 %v5706
        %v6292 = vpop.f32.mrf.mxu0
        %v6293 = vadd.f32 %v5778, %v6292
        %v6294 = vpop.f32.mrf.mxu0
        %v6295 = vadd.f32 %v5778, %v6294
        %6296 = vmatmul.bf16.gmra.mxu0 %v5707
        %v6297 = vpop.f32.mrf.mxu0
        %v6298 = vadd.f32 %v5778, %v6297
        %v6299 = vpop.f32.mrf.mxu0
        %v6300 = vadd.f32 %v5778, %v6299
        %6301 = vmatmul.bf16.gmra.mxu0 %v5708
        %v6302 = vpop.f32.mrf.mxu0
        %v6303 = vadd.f32 %v5778, %v6302
        %v6304 = vpop.f32.mrf.mxu0
        %v6305 = vadd.f32 %v5778, %v6304
        %6306 = vdwg.mxu0
        %6307 = vmatpush.bf16.msra.mxu0 %v6043
        %6308 = vmatpush.bf16.msra.mxu0 %v6035
        %6309 = vmatpush.bf16.msra.mxu0 %v6027
        %6310 = vmatpush.bf16.msra.mxu0 %v6019
        %6311 = vmatpush.bf16.msra.mxu0 %v6011
        %6312 = vmatpush.bf16.msra.mxu0 %v6003
        %6313 = vmatpush.bf16.msra.mxu0 %v5995
        %6314 = vmatpush.bf16.msra.mxu0 %v5987
        %6315 = vmatmul.bf16.gmra.mxu0 %v5701
        %v6316 = vpop.f32.mrf.mxu0
        %v6317 = vadd.f32 %v5779, %v6316
        %v6318 = vpop.f32.mrf.mxu0
        %v6319 = vadd.f32 %v5779, %v6318
        %6320 = vmatmul.bf16.gmra.mxu0 %v5702
        %v6321 = vpop.f32.mrf.mxu0
        %v6322 = vadd.f32 %v5779, %v6321
        %v6323 = vpop.f32.mrf.mxu0
        %v6324 = vadd.f32 %v5779, %v6323
        %6325 = vmatmul.bf16.gmra.mxu0 %v5703
        %v6326 = vpop.f32.mrf.mxu0
        %v6327 = vadd.f32 %v5779, %v6326
        %v6328 = vpop.f32.mrf.mxu0
        %v6329 = vadd.f32 %v5779, %v6328
        %6330 = vmatmul.bf16.gmra.mxu0 %v5704
        %v6331 = vpop.f32.mrf.mxu0
        %v6332 = vadd.f32 %v5779, %v6331
        %v6333 = vpop.f32.mrf.mxu0
        %v6334 = vadd.f32 %v5779, %v6333
        %6335 = vmatmul.bf16.gmra.mxu0 %v5705
        %v6336 = vpop.f32.mrf.mxu0
        %v6337 = vadd.f32 %v5779, %v6336
        %v6338 = vpop.f32.mrf.mxu0
        %v6339 = vadd.f32 %v5779, %v6338
        %6340 = vmatmul.bf16.gmra.mxu0 %v5706
        %v6341 = vpop.f32.mrf.mxu0
        %v6342 = vadd.f32 %v5779, %v6341
        %v6343 = vpop.f32.mrf.mxu0
        %v6344 = vadd.f32 %v5779, %v6343
        %6345 = vmatmul.bf16.gmra.mxu0 %v5707
        %v6346 = vpop.f32.mrf.mxu0
        %v6347 = vadd.f32 %v5779, %v6346
        %v6348 = vpop.f32.mrf.mxu0
        %v6349 = vadd.f32 %v5779, %v6348
        %6350 = vmatmul.bf16.gmra.mxu0 %v5708
        %v6351 = vpop.f32.mrf.mxu0
        %v6352 = vadd.f32 %v5779, %v6351
        %v6353 = vpop.f32.mrf.mxu0
        %v6354 = vadd.f32 %v5779, %v6353
        %6355 = vdwg.mxu0
        %6356 = vmatpush.bf16.msra.mxu0 %v6044
        %6357 = vmatpush.bf16.msra.mxu0 %v6036
        %6358 = vmatpush.bf16.msra.mxu0 %v6028
        %6359 = vmatpush.bf16.msra.mxu0 %v6020
        %6360 = vmatpush.bf16.msra.mxu0 %v6012
        %6361 = vmatpush.bf16.msra.mxu0 %v6004
        %6362 = vmatpush.bf16.msra.mxu0 %v5996
        %6363 = vmatpush.bf16.msra.mxu0 %v5988
        %6364 = vmatmul.bf16.gmra.mxu0 %v5701
        %v6365 = vpop.f32.mrf.mxu0
        %v6366 = vadd.f32 %v5780, %v6365
        %v6367 = vpop.f32.mrf.mxu0
        %v6368 = vadd.f32 %v5780, %v6367
        %6369 = vmatmul.bf16.gmra.mxu0 %v5702
        %v6370 = vpop.f32.mrf.mxu0
        %v6371 = vadd.f32 %v5780, %v6370
        %v6372 = vpop.f32.mrf.mxu0
        %v6373 = vadd.f32 %v5780, %v6372
        %6374 = vmatmul.bf16.gmra.mxu0 %v5703
        %v6375 = vpop.f32.mrf.mxu0
        %v6376 = vadd.f32 %v5780, %v6375
        %v6377 = vpop.f32.mrf.mxu0
        %v6378 = vadd.f32 %v5780, %v6377
        %6379 = vmatmul.bf16.gmra.mxu0 %v5704
        %v6380 = vpop.f32.mrf.mxu0
        %v6381 = vadd.f32 %v5780, %v6380
        %v6382 = vpop.f32.mrf.mxu0
        %v6383 = vadd.f32 %v5780, %v6382
        %6384 = vmatmul.bf16.gmra.mxu0 %v5705
        %v6385 = vpop.f32.mrf.mxu0
        %v6386 = vadd.f32 %v5780, %v6385
        %v6387 = vpop.f32.mrf.mxu0
        %v6388 = vadd.f32 %v5780, %v6387
        %6389 = vmatmul.bf16.gmra.mxu0 %v5706
        %v6390 = vpop.f32.mrf.mxu0
        %v6391 = vadd.f32 %v5780, %v6390
        %v6392 = vpop.f32.mrf.mxu0
        %v6393 = vadd.f32 %v5780, %v6392
        %6394 = vmatmul.bf16.gmra.mxu0 %v5707
        %v6395 = vpop.f32.mrf.mxu0
        %v6396 = vadd.f32 %v5780, %v6395
        %v6397 = vpop.f32.mrf.mxu0
        %v6398 = vadd.f32 %v5780, %v6397
        %6399 = vmatmul.bf16.gmra.mxu0 %v5708
        %v6400 = vpop.f32.mrf.mxu0
        %v6401 = vadd.f32 %v5780, %v6400
        %v6402 = vpop.f32.mrf.mxu0
        %v6403 = vadd.f32 %v5780, %v6402
        %6404 = vdwg.mxu0
        %6405 = vmatpush.bf16.msra.mxu0 %v6045
        %6406 = vmatpush.bf16.msra.mxu0 %v6037
        %6407 = vmatpush.bf16.msra.mxu0 %v6029
        %6408 = vmatpush.bf16.msra.mxu0 %v6021
        %6409 = vmatpush.bf16.msra.mxu0 %v6013
        %6410 = vmatpush.bf16.msra.mxu0 %v6005
        %6411 = vmatpush.bf16.msra.mxu0 %v5997
        %6412 = vmatpush.bf16.msra.mxu0 %v5989
        %6413 = vmatmul.bf16.gmra.mxu0 %v5701
        %v6414 = vpop.f32.mrf.mxu0
        %v6415 = vadd.f32 %v5781, %v6414
        %v6416 = vpop.f32.mrf.mxu0
        %v6417 = vadd.f32 %v5781, %v6416
        %6418 = vmatmul.bf16.gmra.mxu0 %v5702
        %v6419 = vpop.f32.mrf.mxu0
        %v6420 = vadd.f32 %v5781, %v6419
        %v6421 = vpop.f32.mrf.mxu0
        %v6422 = vadd.f32 %v5781, %v6421
        %6423 = vmatmul.bf16.gmra.mxu0 %v5703
        %v6424 = vpop.f32.mrf.mxu0
        %v6425 = vadd.f32 %v5781, %v6424
        %v6426 = vpop.f32.mrf.mxu0
        %v6427 = vadd.f32 %v5781, %v6426
        %6428 = vmatmul.bf16.gmra.mxu0 %v5704
        %v6429 = vpop.f32.mrf.mxu0
        %v6430 = vadd.f32 %v5781, %v6429
        %v6431 = vpop.f32.mrf.mxu0
        %v6432 = vadd.f32 %v5781, %v6431
        %6433 = vmatmul.bf16.gmra.mxu0 %v5705
        %v6434 = vpop.f32.mrf.mxu0
        %v6435 = vadd.f32 %v5781, %v6434
        %v6436 = vpop.f32.mrf.mxu0
        %v6437 = vadd.f32 %v5781, %v6436
        %6438 = vmatmul.bf16.gmra.mxu0 %v5706
        %v6439 = vpop.f32.mrf.mxu0
        %v6440 = vadd.f32 %v5781, %v6439
        %v6441 = vpop.f32.mrf.mxu0
        %v6442 = vadd.f32 %v5781, %v6441
        %6443 = vmatmul.bf16.gmra.mxu0 %v5707
        %v6444 = vpop.f32.mrf.mxu0
        %v6445 = vadd.f32 %v5781, %v6444
        %v6446 = vpop.f32.mrf.mxu0
        %v6447 = vadd.f32 %v5781, %v6446
        %6448 = vmatmul.bf16.gmra.mxu0 %v5708
        %v6449 = vpop.f32.mrf.mxu0
        %v6450 = vadd.f32 %v5781, %v6449
        %v6451 = vpop.f32.mrf.mxu0
        %v6452 = vadd.f32 %v5781, %v6451
        %6453 = vdwg.mxu0
        %6454 = vmatpush.bf16.msra.mxu0 %v6046
        %6455 = vmatpush.bf16.msra.mxu0 %v6038
        %6456 = vmatpush.bf16.msra.mxu0 %v6030
        %6457 = vmatpush.bf16.msra.mxu0 %v6022
        %6458 = vmatpush.bf16.msra.mxu0 %v6014
        %6459 = vmatpush.bf16.msra.mxu0 %v6006
        %6460 = vmatpush.bf16.msra.mxu0 %v5998
        %6461 = vmatpush.bf16.msra.mxu0 %v5990
        %6462 = vmatmul.bf16.gmra.mxu0 %v5701
        %v6463 = vpop.f32.mrf.mxu0
        %v6464 = vadd.f32 %v5782, %v6463
        %v6465 = vpop.f32.mrf.mxu0
        %v6466 = vadd.f32 %v5782, %v6465
        %6467 = vmatmul.bf16.gmra.mxu0 %v5702
        %v6468 = vpop.f32.mrf.mxu0
        %v6469 = vadd.f32 %v5782, %v6468
        %v6470 = vpop.f32.mrf.mxu0
        %v6471 = vadd.f32 %v5782, %v6470
        %6472 = vmatmul.bf16.gmra.mxu0 %v5703
        %v6473 = vpop.f32.mrf.mxu0
        %v6474 = vadd.f32 %v5782, %v6473
        %v6475 = vpop.f32.mrf.mxu0
        %v6476 = vadd.f32 %v5782, %v6475
        %6477 = vmatmul.bf16.gmra.mxu0 %v5704
        %v6478 = vpop.f32.mrf.mxu0
        %v6479 = vadd.f32 %v5782, %v6478
        %v6480 = vpop.f32.mrf.mxu0
        %v6481 = vadd.f32 %v5782, %v6480
        %6482 = vmatmul.bf16.gmra.mxu0 %v5705
        %v6483 = vpop.f32.mrf.mxu0
        %v6484 = vadd.f32 %v5782, %v6483
        %v6485 = vpop.f32.mrf.mxu0
        %v6486 = vadd.f32 %v5782, %v6485
        %6487 = vmatmul.bf16.gmra.mxu0 %v5706
        %v6488 = vpop.f32.mrf.mxu0
        %v6489 = vadd.f32 %v5782, %v6488
        %v6490 = vpop.f32.mrf.mxu0
        %v6491 = vadd.f32 %v5782, %v6490
        %6492 = vmatmul.bf16.gmra.mxu0 %v5707
        %v6493 = vpop.f32.mrf.mxu0
        %v6494 = vadd.f32 %v5782, %v6493
        %v6495 = vpop.f32.mrf.mxu0
        %v6496 = vadd.f32 %v5782, %v6495
        %6497 = vmatmul.bf16.gmra.mxu0 %v5708
        %v6498 = vpop.f32.mrf.mxu0
        %v6499 = vadd.f32 %v5782, %v6498
        %v6500 = vpop.f32.mrf.mxu0
        %v6501 = vadd.f32 %v5782, %v6500
        %6502 = vdwg.mxu0
        %v6503 = vmax.f32 %v6121, %v6123
        %v6504 = vmax.f32 %v6503, %v6126
        %v6505 = vmax.f32 %v6504, %v6128
        %v6506 = vmax.f32 %v6505, %v6131
        %v6507 = vmax.f32 %v6506, %v6133
        %v6508 = vmax.f32 %v6507, %v6136
        %v6509 = vmax.f32 %v6508, %v6138
        %v6510 = vmax.f32 %v6509, %v6141
        %v6511 = vmax.f32 %v6510, %v6143
        %v6512 = vmax.f32 %v6511, %v6146
        %v6513 = vmax.f32 %v6512, %v6148
        %v6514 = vmax.f32 %v6513, %v6151
        %v6515 = vmax.f32 %v6514, %v6153
        %v6516 = vmax.f32 %v6515, %v6156
        %v6517 = vmax.f32 %v6516, %v6158
        %v6518 = vrot.slane %v6517, 4
        %v6519 = vmax.f32 %v6517, %v6518
        %v6520 = vrot.slane %v6519, 2
        %v6521 = vmax.f32 %v6519, %v6520
        %v6522 = vrot.slane %v6521, 1
        %v6523 = vmax.f32 %v6521, %v6522
        %v6524 = vmax.f32 %v6170, %v6172
        %v6525 = vmax.f32 %v6524, %v6175
        %v6526 = vmax.f32 %v6525, %v6177
        %v6527 = vmax.f32 %v6526, %v6180
        %v6528 = vmax.f32 %v6527, %v6182
        %v6529 = vmax.f32 %v6528, %v6185
        %v6530 = vmax.f32 %v6529, %v6187
        %v6531 = vmax.f32 %v6530, %v6190
        %v6532 = vmax.f32 %v6531, %v6192
        %v6533 = vmax.f32 %v6532, %v6195
        %v6534 = vmax.f32 %v6533, %v6197
        %v6535 = vmax.f32 %v6534, %v6200
        %v6536 = vmax.f32 %v6535, %v6202
        %v6537 = vmax.f32 %v6536, %v6205
        %v6538 = vmax.f32 %v6537, %v6207
        %v6539 = vrot.slane %v6538, 4
        %v6540 = vmax.f32 %v6538, %v6539
        %v6541 = vrot.slane %v6540, 2
        %v6542 = vmax.f32 %v6540, %v6541
        %v6543 = vrot.slane %v6542, 1
        %v6544 = vmax.f32 %v6542, %v6543
        %v6545 = vmax.f32 %v6219, %v6221
        %v6546 = vmax.f32 %v6545, %v6224
        %v6547 = vmax.f32 %v6546, %v6226
        %v6548 = vmax.f32 %v6547, %v6229
        %v6549 = vmax.f32 %v6548, %v6231
        %v6550 = vmax.f32 %v6549, %v6234
        %v6551 = vmax.f32 %v6550, %v6236
        %v6552 = vmax.f32 %v6551, %v6239
        %v6553 = vmax.f32 %v6552, %v6241
        %v6554 = vmax.f32 %v6553, %v6244
        %v6555 = vmax.f32 %v6554, %v6246
        %v6556 = vmax.f32 %v6555, %v6249
        %v6557 = vmax.f32 %v6556, %v6251
        %v6558 = vmax.f32 %v6557, %v6254
        %v6559 = vmax.f32 %v6558, %v6256
        %v6560 = vrot.slane %v6559, 4
        %v6561 = vmax.f32 %v6559, %v6560
        %v6562 = vrot.slane %v6561, 2
        %v6563 = vmax.f32 %v6561, %v6562
        %v6564 = vrot.slane %v6563, 1
        %v6565 = vmax.f32 %v6563, %v6564
        %v6566 = vmax.f32 %v6268, %v6270
        %v6567 = vmax.f32 %v6566, %v6273
        %v6568 = vmax.f32 %v6567, %v6275
        %v6569 = vmax.f32 %v6568, %v6278
        %v6570 = vmax.f32 %v6569, %v6280
        %v6571 = vmax.f32 %v6570, %v6283
        %v6572 = vmax.f32 %v6571, %v6285
        %v6573 = vmax.f32 %v6572, %v6288
        %v6574 = vmax.f32 %v6573, %v6290
        %v6575 = vmax.f32 %v6574, %v6293
        %v6576 = vmax.f32 %v6575, %v6295
        %v6577 = vmax.f32 %v6576, %v6298
        %v6578 = vmax.f32 %v6577, %v6300
        %v6579 = vmax.f32 %v6578, %v6303
        %v6580 = vmax.f32 %v6579, %v6305
        %v6581 = vrot.slane %v6580, 4
        %v6582 = vmax.f32 %v6580, %v6581
        %v6583 = vrot.slane %v6582, 2
        %v6584 = vmax.f32 %v6582, %v6583
        %v6585 = vrot.slane %v6584, 1
        %v6586 = vmax.f32 %v6584, %v6585
        %v6587 = vmax.f32 %v6317, %v6319
        %v6588 = vmax.f32 %v6587, %v6322
        %v6589 = vmax.f32 %v6588, %v6324
        %v6590 = vmax.f32 %v6589, %v6327
        %v6591 = vmax.f32 %v6590, %v6329
        %v6592 = vmax.f32 %v6591, %v6332
        %v6593 = vmax.f32 %v6592, %v6334
        %v6594 = vmax.f32 %v6593, %v6337
        %v6595 = vmax.f32 %v6594, %v6339
        %v6596 = vmax.f32 %v6595, %v6342
        %v6597 = vmax.f32 %v6596, %v6344
        %v6598 = vmax.f32 %v6597, %v6347
        %v6599 = vmax.f32 %v6598, %v6349
        %v6600 = vmax.f32 %v6599, %v6352
        %v6601 = vmax.f32 %v6600, %v6354
        %v6602 = vrot.slane %v6601, 4
        %v6603 = vmax.f32 %v6601, %v6602
        %v6604 = vrot.slane %v6603, 2
        %v6605 = vmax.f32 %v6603, %v6604
        %v6606 = vrot.slane %v6605, 1
        %v6607 = vmax.f32 %v6605, %v6606
        %v6608 = vmax.f32 %v6366, %v6368
        %v6609 = vmax.f32 %v6608, %v6371
        %v6610 = vmax.f32 %v6609, %v6373
        %v6611 = vmax.f32 %v6610, %v6376
        %v6612 = vmax.f32 %v6611, %v6378
        %v6613 = vmax.f32 %v6612, %v6381
        %v6614 = vmax.f32 %v6613, %v6383
        %v6615 = vmax.f32 %v6614, %v6386
        %v6616 = vmax.f32 %v6615, %v6388
        %v6617 = vmax.f32 %v6616, %v6391
        %v6618 = vmax.f32 %v6617, %v6393
        %v6619 = vmax.f32 %v6618, %v6396
        %v6620 = vmax.f32 %v6619, %v6398
        %v6621 = vmax.f32 %v6620, %v6401
        %v6622 = vmax.f32 %v6621, %v6403
        %v6623 = vrot.slane %v6622, 4
        %v6624 = vmax.f32 %v6622, %v6623
        %v6625 = vrot.slane %v6624, 2
        %v6626 = vmax.f32 %v6624, %v6625
        %v6627 = vrot.slane %v6626, 1
        %v6628 = vmax.f32 %v6626, %v6627
        %v6629 = vmax.f32 %v6415, %v6417
        %v6630 = vmax.f32 %v6629, %v6420
        %v6631 = vmax.f32 %v6630, %v6422
        %v6632 = vmax.f32 %v6631, %v6425
        %v6633 = vmax.f32 %v6632, %v6427
        %v6634 = vmax.f32 %v6633, %v6430
        %v6635 = vmax.f32 %v6634, %v6432
        %v6636 = vmax.f32 %v6635, %v6435
        %v6637 = vmax.f32 %v6636, %v6437
        %v6638 = vmax.f32 %v6637, %v6440
        %v6639 = vmax.f32 %v6638, %v6442
        %v6640 = vmax.f32 %v6639, %v6445
        %v6641 = vmax.f32 %v6640, %v6447
        %v6642 = vmax.f32 %v6641, %v6450
        %v6643 = vmax.f32 %v6642, %v6452
        %v6644 = vrot.slane %v6643, 4
        %v6645 = vmax.f32 %v6643, %v6644
        %v6646 = vrot.slane %v6645, 2
        %v6647 = vmax.f32 %v6645, %v6646
        %v6648 = vrot.slane %v6647, 1
        %v6649 = vmax.f32 %v6647, %v6648
        %v6650 = vmax.f32 %v6464, %v6466
        %v6651 = vmax.f32 %v6650, %v6469
        %v6652 = vmax.f32 %v6651, %v6471
        %v6653 = vmax.f32 %v6652, %v6474
        %v6654 = vmax.f32 %v6653, %v6476
        %v6655 = vmax.f32 %v6654, %v6479
        %v6656 = vmax.f32 %v6655, %v6481
        %v6657 = vmax.f32 %v6656, %v6484
        %v6658 = vmax.f32 %v6657, %v6486
        %v6659 = vmax.f32 %v6658, %v6489
        %v6660 = vmax.f32 %v6659, %v6491
        %v6661 = vmax.f32 %v6660, %v6494
        %v6662 = vmax.f32 %v6661, %v6496
        %v6663 = vmax.f32 %v6662, %v6499
        %v6664 = vmax.f32 %v6663, %v6501
        %v6665 = vrot.slane %v6664, 4
        %v6666 = vmax.f32 %v6664, %v6665
        %v6667 = vrot.slane %v6666, 2
        %v6668 = vmax.f32 %v6666, %v6667
        %v6669 = vrot.slane %v6668, 1
        %v6670 = vmax.f32 %v6668, %v6669
        %v6679 = vrot.slane %v6544, 7
        %v6680 = vrot.slane %v6565, 6
        %v6681 = vrot.slane %v6586, 5
        %v6682 = vrot.slane %v6607, 4
        %v6683 = vrot.slane %v6628, 3
        %v6684 = vrot.slane %v6649, 2
        %v6685 = vrot.slane %v6670, 1
        %vm6686 = vcmask 1040384
        %v6687 = vsel %vm6686, %v6523, %v6679
        %vm6688 = vcmask 1042434
        %v6689 = vsel %vm6688, %v6680, %v6681
        %vm6690 = vcmask 1041408
        %v6691 = vsel %vm6690, %v6687, %v6689
        %vm6692 = vcmask 1044484
        %v6693 = vsel %vm6692, %v6682, %v6683
        %vm6694 = vcmask 1046534
        %v6695 = vsel %vm6694, %v6684, %v6685
        %vm6696 = vcmask 1045508
        %v6697 = vsel %vm6696, %v6693, %v6695
        %vm6698 = vcmask 1043456
        %v6699 = vsel %vm6698, %v6691, %v6697
        %6701 = vst [vmem:[%s555] sm:$0xff] %v6699
        %p6702 = scmp.lt.s32.totalorder %s29, 1
        %s6703 = scalar_select %p6702, %s29, 1
        %s6704 = scalar_lea.vmem %s13, %s6703
        %p6705 = scmp.lt.s32.totalorder %s29, 1
        %s6706 = scalar_select %p6705, %s29, 1
        %s6707 = smul.addr %s6706, 8
        %s6708 = scalar_lea.vmem %s14, %s6707
        // Predicated region
        $region93: #{pointnet_encoder_forward.1} parent=71 // pred_check
          %p6709 = pneg %p325
        $region94: #{pointnet_encoder_forward.1} parent=71 // pred_check_branch
          %6711 = sbr.rel (%p6709) target = $region96
        $region95: #{pointnet_encoder_forward.1} parent=71 // pred_region
          _
        $region96: #{pointnet_encoder_forward.1} parent=71 // pred_fallthru
          _
        // Predicated region
        $region97: #{pointnet_encoder_forward.1} parent=71 // pred_check
          %p6712 = pneg %p351
        $region98: #{pointnet_encoder_forward.1} parent=71 // pred_check_branch
          %6714 = sbr.rel (%p6712) target = $region100
        $region99: #{pointnet_encoder_forward.1} parent=71 // pred_region
          _
        $region100: #{pointnet_encoder_forward.1} parent=71 // pred_fallthru
          _
      $region72: #{pointnet_encoder_forward.1} parent=5 // pred_fallthru
        _
      %p6715 = scmp.le.s32.totalorder 2, %s24
      // Predicated region
      $region101: #{pointnet_encoder_forward.1} parent=5 // pred_check
        %p6716 = pneg %p6715
      $region102: #{pointnet_encoder_forward.1} parent=5 // pred_check_branch
        %6718 = sbr.rel (%p6716) target = $region104
      $region103: #{pointnet_encoder_forward.1} parent=5 // pred_region
        %s6719 = ssub.s32 %s24, 2
        // Predicated region
        $region105: #{pointnet_encoder_forward.1} parent=103 // pred_check
          %p6720 = pneg %p331
        $region106: #{pointnet_encoder_forward.1} parent=103 // pred_check_branch
          %6722 = sbr.rel (%p6720) target = $region108
        $region107: #{pointnet_encoder_forward.1} parent=103 // pred_region
          %p6723 = scmp.lt.s32.totalorder %s30, 1
          %s6724 = scalar_select %p6723, %s30, 1
          %s6725 = scalar_lea.vmem %s13, %s6724
        $region108: #{pointnet_encoder_forward.1} parent=103 // pred_fallthru
          _
        // Predicated region
        $region109: #{pointnet_encoder_forward.1} parent=103 // pred_check
          %p6726 = pneg %p357
        $region110: #{pointnet_encoder_forward.1} parent=103 // pred_check_branch
          %6728 = sbr.rel (%p6726) target = $region112
        $region111: #{pointnet_encoder_forward.1} parent=103 // pred_region
          %p6729 = scmp.lt.s32.totalorder %s30, 1
          %s6730 = scalar_select %p6729, %s30, 1
          %s6731 = smul.addr %s6730, 8
          %s6732 = scalar_lea.vmem %s14, %s6731
        $region112: #{pointnet_encoder_forward.1} parent=103 // pred_fallthru
          _
      $region104: #{pointnet_encoder_forward.1} parent=5 // pred_fallthru
        _
    $region6: #{pointnet_encoder_forward.1} parent=1 // loop_footer
      %s28 = sadd.s32 1, %s24
    $region7: #{pointnet_encoder_forward.1} parent=1 // loop_footer_branch
      %23 = sbr.rel target = $region3
    $region8: #{pointnet_encoder_forward.1} parent=1 // loop_exit
      _
    %6733 = vsyncpa [#allocation3], 1
    %s6734 = scalar_lea.sflag [#allocation3], 1
    %6735 = vsyncpa %s6734, 1
    %6736 = vsyncpa [#allocation5], 1
    %6737 = vsyncpa [#allocation8], 1

</llo_original>
